<compile_context>
chip_gen: v7x
topology: tpu7x:2x2x1
jax: 0.10.0
libtpu: 0.0.40
codegen_flags: <defaults>
</compile_context>

<pallas_src>
import math
import jax
import jax.numpy as jnp
from jax import lax
from jax.experimental import pallas as pl
from jax.experimental.pallas import tpu as pltpu

HIDDEN = 256            # hidden_size for the 'vgg163D' backbone branch
NUM_HEADS = 8
HEAD_DIM = HIDDEN // NUM_HEADS
NBLOCK = 6
POOL_FACTOR = 4         # spatial reduction of the stand-in backbone


# ----------------------------------------------------------------------------
# Pallas kernel: per-token linear (1x1x1 conv) + ReLU (global backbone projection)
# ----------------------------------------------------------------------------
def linear_tokens(x, w_t, b, relu=True, out_dtype=jnp.bfloat16):
    """x: (M, Cin) tokens, w_t: (Cin, Cout), b: (1, Cout) -> (M, Cout) out_dtype."""
    M, Cin = x.shape
    Cout = w_t.shape[1]

    tm = M
    for cand in (512, 256, 128, 64, 32, 16, 8):
        if M % cand == 0:
            tm = cand
            break

    def kernel(x_ref, w_ref, b_ref, o_ref):
        y = jnp.dot(x_ref[...], w_ref[...], preferred_element_type=jnp.float32) + b_ref[...]
        if relu:
            y = jnp.maximum(y, 0.0)
        o_ref[...] = y.astype(o_ref.dtype)

    return pl.pallas_call(
        kernel,
        out_shape=jax.ShapeDtypeStruct((M, Cout), out_dtype),
        grid=(M // tm,),
        in_specs=[
            pl.BlockSpec((tm, Cin), lambda i: (i, 0)),
            pl.BlockSpec((Cin, Cout), lambda i: (0, 0)),
            pl.BlockSpec((1, Cout), lambda i: (0, 0)),
        ],
        out_specs=pl.BlockSpec((tm, Cout), lambda i: (i, 0)),
        compiler_params=pltpu.CompilerParams(dimension_semantics=("parallel",)),
    )(x, w_t, b)


# ----------------------------------------------------------------------------
# Fused Pallas kernel: local backbone projection + NBLOCK transformer blocks + locout1 head
# ----------------------------------------------------------------------------
def fused_local_pathway(raw_loc, glo_tokens, p):
    """raw_loc: (B', Nl, Cin) bf16 pooled patch tokens; glo_tokens: (B', Ng, C) bf16 tokens.

    Per batch item (grid axis 0, "parallel"):
        loc = ReLU(raw @ Wloc + bloc)                       # backbone stand-in (block 0 only)
        repeat NBLOCK times (grid axis 1, "arbitrary", VMEM-resident accumulator):
            tmp1 = GlobalAttention(loc, glo) + loc
            loc  = tmp1 + Feedforward(tmp1)
        out = mean_tokens(loc) @ Wloco + bloco              # AdaptiveAvgPool3d(1) + locout1
    All per-block weights are VMEM-resident (full-depth blocks, indexed by pl.program_id(1)).
    Returns (B', 2) float32.
    """
    B, Nl, Cin = raw_loc.shape
    _, Ng, C = glo_tokens.shape
    H, Dh = NUM_HEADS, HEAD_DIM

    def kernel(raw_ref, wloc_ref, bloc_ref, glo_ref,
               wq_ref, bq_ref, wk_ref, bk_ref, wv_ref, bv_ref,
               wo_ref, bo_ref, w1_ref, t1_ref, w2_ref, t2_ref,
               hw_ref, hb_ref, out_ref, acc_ref):
        n = pl.program_id(1)

        # --- block 0: local backbone projection (stand-in VGG163D), init accumulator ----
        @pl.when(n == 0)
        def _():
            acc_ref[...] = jnp.maximum(
                jnp.dot(raw_ref[0], wloc_ref[...],
                        preferred_element_type=jnp.float32) + bloc_ref[...], 0.0)

        loc = acc_ref[...]                                   # (Nl, C) f32 residual stream
        loc_bf = loc.astype(jnp.bfloat16)
        glo_bf = glo_ref[0]                                  # (Ng, C) already bf16

        # --- full-width projections: single (*, 256)@(256, 256) MXU matmuls --------------
        # 1/sqrt(head_dim) is folded into Wq / Bq on the host.
        q = jnp.dot(loc_bf, wq_ref[n], preferred_element_type=jnp.float32) + bq_ref[n]  # (Nl, C)
        k = jnp.dot(glo_bf, wk_ref[n], preferred_element_type=jnp.float32) + bk_ref[n]  # (Ng, C)
        v = jnp.dot(glo_bf, wv_ref[n], preferred_element_type=jnp.float32) + bv_ref[n]  # (Ng, C)
        q_bf = q.astype(jnp.bfloat16)
        k_bf = k.astype(jnp.bfloat16)
        v_bf = v.astype(jnp.bfloat16)

        # --- per-head attention on static lane slices (small score / probs@V matmuls) ----
        ctx_cols = []
        for h in range(H):
            sl = slice(h * Dh, (h + 1) * Dh)
            s = lax.dot_general(q_bf[:, sl], k_bf[:, sl],
                                (((1,), (1,)), ((), ())),
                                preferred_element_type=jnp.float32)      # (Nl, Ng)
            s = s - jnp.max(s, axis=-1, keepdims=True)
            e = jnp.exp(s)
            probs = e * pl.reciprocal(jnp.sum(e, axis=-1, keepdims=True), approx=True)
            ctx_cols.append(jnp.dot(probs.astype(jnp.bfloat16), v_bf[:, sl],
                                    preferred_element_type=jnp.float32))  # (Nl, Dh)
        ctx = jnp.concatenate(ctx_cols, axis=-1)                          # (Nl, C) head-major

        # --- single full-width output projection ------------------------------------------
        attn = jnp.dot(ctx.astype(jnp.bfloat16), wo_ref[n],
                       preferred_element_type=jnp.float32) + bo_ref[n]    # (Nl, C)
        # NOTE: attention / projection Dropout are identity in inference mode.

        # --- residual 1 --------------------------------------------------------------------
        tmp1 = attn + loc

        # --- Feedforward: 1x1x1 conv (BN scale folded into W) -> +shift -> ReLU, twice -----
        y = jnp.maximum(jnp.dot(tmp1.astype(jnp.bfloat16), w1_ref[n],
                                preferred_element_type=jnp.float32) + t1_ref[n], 0.0)
        z = jnp.maximum(jnp.dot(y.astype(jnp.bfloat16), w2_ref[n],
                                preferred_element_type=jnp.float32) + t2_ref[n], 0.0)

        # --- residual 2 (stays resident in VMEM across blocks) ------------------------------
        new_loc = tmp1 + z
        acc_ref[...] = new_loc

        # --- final block: AdaptiveAvgPool3d(1) + locout1 -------------------------------------
        @pl.when(n == NBLOCK - 1)
        def _():
            pooled = jnp.mean(new_loc, axis=0, keepdims=True)             # (1, C)
            out_ref[0] = jnp.dot(pooled, hw_ref[...],
                                 preferred_element_type=jnp.float32) + hb_ref[...]

    # Full-depth weight blocks, constant index_map -> weights stay resident in VMEM.
    resident_w = pl.BlockSpec((NBLOCK, C, C), lambda b, n: (0, 0, 0))
    resident_b = pl.BlockSpec((NBLOCK, 1, C), lambda b, n: (0, 0, 0))

    out = pl.pallas_call(
        kernel,
        out_shape=jax.ShapeDtypeStruct((B, 1, 2), jnp.float32),
        grid=(B, NBLOCK),
        in_specs=[
            pl.BlockSpec((1, Nl, Cin), lambda b, n: (b, 0, 0)),     # raw local tokens (bf16)
            pl.BlockSpec((Cin, C), lambda b, n: (0, 0)),            # local backbone weight
            pl.BlockSpec((1, C), lambda b, n: (0, 0)),              # local backbone bias
            pl.BlockSpec((1, Ng, C), lambda b, n: (b, 0, 0)),       # global tokens (K/V, bf16)
            resident_w, resident_b,                                 # Wq (scale folded), Bq
            resident_w, resident_b,                                 # Wk, Bk
            resident_w, resident_b,                                 # Wv, Bv
            resident_w, resident_b,                                 # Wo, Bo
            resident_w, resident_b,                                 # W1 (BN1 folded), T1
            resident_w, resident_b,                                 # W2 (BN2 folded), T2
            pl.BlockSpec((C, 2), lambda b, n: (0, 0)),              # locout1 weight
            pl.BlockSpec((1, 2), lambda b, n: (0, 0)),              # locout1 bias
        ],
        out_specs=pl.BlockSpec((1, 1, 2), lambda b, n: (b, 0, 0)),
        scratch_shapes=[pltpu.VMEM((Nl, C), jnp.float32)],
        compiler_params=pltpu.CompilerParams(
            dimension_semantics=("parallel", "arbitrary"),
            vmem_limit_bytes=48 * 1024 * 1024),
    )(raw_loc, p['loc_w_t'], p['loc_b'], glo_tokens,
      p['Wq'], p['Bq'], p['Wk'], p['Bk'], p['Wv'], p['Bv'],
      p['Wo'], p['Bo'], p['W1'], p['T1'], p['W2'], p['T2'],
      p['locout_w_t'], p['locout_b'])
    return out[:, 0, :]


# ----------------------------------------------------------------------------
# JAX glue
# ----------------------------------------------------------------------------
def pool_tokens(x):
    """4x avg-pool + NCDHW -> (B, N, Cin) token conversion (mirrors view + permute)."""
    B, C, Hs, Ws, Ds = x.shape
    f = POOL_FACTOR
    xp = x.reshape(B, C, Hs // f, f, Ws // f, f, Ds // f, f).mean(axis=(3, 5, 7))
    N = (Hs // f) * (Ws // f) * (Ds // f)
    return xp.reshape(B, C, N).transpose(0, 2, 1)


def backbone_tokens(x, w_t, b):
    """Stand-in VGG163D feature extractor -> (B, N, HIDDEN) bf16 tokens."""
    tok = pool_tokens(x)
    B, N, Cin = tok.shape
    out = linear_tokens(tok.reshape(B * N, Cin), w_t, b, relu=True, out_dtype=jnp.bfloat16)
    return out.reshape(B, N, HIDDEN)


def nearest_down_up(x, factor):
    """Approximation of the per-sample scipy zoom(DS) followed by zoom(US) on channel 0."""
    ch0 = x[:, 0]
    down = ch0[:, ::factor, ::factor, ::factor]
    up = jnp.repeat(jnp.repeat(jnp.repeat(down, factor, axis=1), factor, axis=2),
                    factor, axis=3)
    return x.at[:, 0].set(up)


def init_params(key, in_ch):
    """Random parameters in the PyTorch layout (inference mode)."""
    keys = iter(jax.random.split(key, 128))

    def nrm(shape, scale=0.02):
        return scale * jax.random.normal(next(keys), shape, jnp.float32)

    blocks = []
    for _ in range(NBLOCK):
        blocks.append(dict(
            wq=nrm((HIDDEN, HIDDEN)), bq=nrm((HIDDEN,)),
            wk=nrm((HIDDEN, HIDDEN)), bk=nrm((HIDDEN,)),
            wv=nrm((HIDDEN, HIDDEN)), bv=nrm((HIDDEN,)),
            wo=nrm((HIDDEN, HIDDEN)), bo=nrm((HIDDEN,)),
            w1=nrm((HIDDEN, HIDDEN)),                         # conv1 1x1x1, bias=False
            w2=nrm((HIDDEN, HIDDEN)),                         # conv2 1x1x1, bias=False
            # BatchNorm3d inference stats: gamma=1, beta=0, mean=0, var=1
            bn1_gamma=jnp.ones((HIDDEN,)), bn1_beta=jnp.zeros((HIDDEN,)),
            bn1_mean=jnp.zeros((HIDDEN,)), bn1_var=jnp.ones((HIDDEN,)),
            bn2_gamma=jnp.ones((HIDDEN,)), bn2_beta=jnp.zeros((HIDDEN,)),
            bn2_mean=jnp.zeros((HIDDEN,)), bn2_var=jnp.ones((HIDDEN,)),
        ))
    return dict(
        blocks=blocks,
        glob_w=nrm((HIDDEN, in_ch)), glob_b=nrm((HIDDEN,)),   # global_feat stand-in
        loc_w=nrm((HIDDEN, in_ch)), loc_b=nrm((HIDDEN,)),     # local_feat stand-in
        gloout_w=nrm((2, HIDDEN)), gloout_b=nrm((2,)),        # gloout1
        locout_w=nrm((2, HIDDEN)), locout_b=nrm((2,)),        # locout1
        vote_w=nrm((1, 3, 1)), vote_b=nrm((1,)),              # voting Conv1d(3, 1, 1)
    )


def prepare_params(p):
    """Host-side prep: stack full-width per-block weights, fold 1/sqrt(d) and BN, cast bf16."""
    eps = 1e-5
    C = HIDDEN
    scale = 1.0 / math.sqrt(HEAD_DIM)

    Wq, Bq, Wk, Bk, Wv, Bv, Wo, Bo, W1, T1, W2, T2 = ([] for _ in range(12))
    for blk in p['blocks']:
        # y = x @ w.T + b; PyTorch output features are already head-major (h*Dh + d)
        Wq.append((blk['wq'].T * scale).astype(jnp.bfloat16))
        Bq.append((blk['bq'] * scale).reshape(1, C))
        Wk.append(blk['wk'].T.astype(jnp.bfloat16))
        Bk.append(blk['bk'].reshape(1, C))
        Wv.append(blk['wv'].T.astype(jnp.bfloat16))
        Bv.append(blk['bv'].reshape(1, C))
        Wo.append(blk['wo'].T.astype(jnp.bfloat16))
        Bo.append(blk['bo'].reshape(1, C))
        # Fold BN (inference) into the bias-free 1x1x1 conv weights; keep only the shifts.
        s1 = blk['bn1_gamma'] / jnp.sqrt(blk['bn1_var'] + eps)
        t1 = blk['bn1_beta'] - blk['bn1_mean'] * s1
        s2 = blk['bn2_gamma'] / jnp.sqrt(blk['bn2_var'] + eps)
        t2 = blk['bn2_beta'] - blk['bn2_mean'] * s2
        W1.append((blk['w1'].T * s1[None, :]).astype(jnp.bfloat16))
        T1.append(t1.reshape(1, C))
        W2.append((blk['w2'].T * s2[None, :]).astype(jnp.bfloat16))
        T2.append(t2.reshape(1, C))

    stk = lambda xs: jnp.stack(xs, axis=0)
    prepared = dict(
        Wq=stk(Wq), Bq=stk(Bq).astype(jnp.float32),
        Wk=stk(Wk), Bk=stk(Bk).astype(jnp.float32),
        Wv=stk(Wv), Bv=stk(Bv).astype(jnp.float32),
        Wo=stk(Wo), Bo=stk(Bo).astype(jnp.float32),
        W1=stk(W1), T1=stk(T1).astype(jnp.float32),
        W2=stk(W2), T2=stk(T2).astype(jnp.float32),
        glob_w_t=p['glob_w'].T, glob_b=p['glob_b'].reshape(1, -1),
        loc_w_t=p['loc_w'].T.astype(jnp.bfloat16), loc_b=p['loc_b'].reshape(1, -1),
        gloout_w_t=p['gloout_w'].T, gloout_b=p['gloout_b'].reshape(1, -1),
        locout_w_t=p['locout_w'].T, locout_b=p['locout_b'].reshape(1, -1),
        vote_w=p['vote_w'], vote_b=p['vote_b'],
    )
    return prepared


def global_local_brain_age_forward(x, params):
    """x: (B, C, H, W, D) float32.  Returns (Prediction, position) like the PyTorch module."""
    B = x.shape[0]
    largest_power_of_two = 2

    # ---- global pathway ------------------------------------------------------------------
    glo_tokens = backbone_tokens(x, params['glob_w_t'], params['glob_b'])   # (B, Ng, 256) bf16
    # AdaptiveAvgPool3d(1) + gloout1: trivially small (1x256 @ 256x2), done in plain JAX glue.
    pooled = jnp.mean(glo_tokens.astype(jnp.float32), axis=1)               # (B, 256)
    glo = pooled @ params['gloout_w_t'] + params['gloout_b']                # (B, 2)

    # ---- multi-scale local pathways, merged into ONE fused pallas_call (B' = 2B) ----------
    raw_locs = []
    for i in range(1, largest_power_of_two + 1):
        factor = 2 ** i
        locx = nearest_down_up(x, factor)
        raw_locs.append(pool_tokens(locx))                                  # (B, Nl, Cin)
    raw_loc_all = jnp.concatenate(raw_locs, axis=0).astype(jnp.bfloat16)    # (2B, Nl, Cin)
    glo_all = jnp.concatenate([glo_tokens] * largest_power_of_two, axis=0)  # (2B, Ng, 256)
    loc_out = fused_local_pathway(raw_loc_all, glo_all, params)             # (2B, 2)

    outlist = [glo] + [loc_out[s * B:(s + 1) * B] for s in range(largest_power_of_two)]

    # ---- voting Conv1d(3 -> 1, kernel 1) over stacked outputs (glue) -----------------------
    stacked = jnp.stack(outlist, axis=1)                 # (B, 3, 2)
    vw = params['vote_w'][:, :, 0]                       # (1, 3)
    pred = jnp.einsum('bkj,ok->boj', stacked, vw) + params['vote_b'][None, :, None]
    pred = jnp.squeeze(pred)                             # mirrors torch .squeeze()

    position = jnp.zeros((largest_power_of_two, 3), jnp.int32)
    return pred, position


if __name__ == "__main__":
    key = jax.random.PRNGKey(0)
    kx, kp = jax.random.split(key)

    B, Cin, Hs, Ws, Ds = 2, 2, 16, 16, 16
    x = jax.random.normal(kx, (B, Cin, Hs, Ws, Ds), jnp.float32)
    params = prepare_params(init_params(kp, Cin))

    fwd = jax.jit(lambda xin: global_local_brain_age_forward(xin, params))
    pred, position = fwd(x)
    jax.block_until_ready(pred)
    assert pred.shape == (B, 2) and position.shape == (2, 3)
    assert bool(jnp.all(jnp.isfinite(pred)))
    print("KERNEL_OK")
</pallas_src>

<mosaic_0001>
module attributes {stable_mosaic.version = 11 : i64} {
  func.func @kernel(%arg0: i32, %arg1: memref<128x2xf32, #tpu.memory_space<vmem>>, %arg2: memref<2x256xf32, #tpu.memory_space<vmem>>, %arg3: memref<1x256xf32, #tpu.memory_space<vmem>>, %arg4: memref<128x256xbf16, #tpu.memory_space<vmem>>) attributes {dimension_semantics = [#tpu.dimension_semantics<parallel>], iteration_bounds = array<i64: 1>, scalar_prefetch = 0 : i64, scratch_operands = 0 : i64, tpu.core_type = #tpu.core_type<tc>, window_params = [{transform_indices = @transform_0, window_bounds = array<i64: 128, 2>}, {pipeline_mode = #tpu.pipeline_mode<synchronous>, transform_indices = @transform_1, window_bounds = array<i64: 2, 256>}, {pipeline_mode = #tpu.pipeline_mode<synchronous>, transform_indices = @transform_2, window_bounds = array<i64: 1, 256>}, {transform_indices = @transform_3, window_bounds = array<i64: 128, 256>}]} {
    %c0 = arith.constant 0 : index
    %c0_0 = arith.constant 0 : index
    %0 = vector.load %arg1[%c0, %c0_0] : memref<128x2xf32, #tpu.memory_space<vmem>>, vector<128x2xf32>
    %c0_1 = arith.constant 0 : index
    %c0_2 = arith.constant 0 : index
    %1 = vector.load %arg2[%c0_1, %c0_2] : memref<2x256xf32, #tpu.memory_space<vmem>>, vector<2x256xf32>
    %cst = arith.constant dense<0.000000e+00> : vector<128x256xf32>
    %2 = tpu.matmul %0, %1, %cst {dimension_numbers = #tpu.dot_dimension_numbers<[1], [0], [0], [1], [0, 0, 1, 1], [], []>} : vector<128x2xf32>, vector<2x256xf32>, vector<128x256xf32> -> vector<128x256xf32>
    %c0_3 = arith.constant 0 : index
    %c0_4 = arith.constant 0 : index
    %3 = vector.load %arg3[%c0_3, %c0_4] : memref<1x256xf32, #tpu.memory_space<vmem>>, vector<1x256xf32>
    %4 = vector.broadcast %3 : vector<1x256xf32> to vector<128x256xf32>
    %5 = arith.addf %2, %4 : vector<128x256xf32>
    %cst_5 = arith.constant 0.000000e+00 : f32
    %6 = vector.broadcast %cst_5 : f32 to vector<128x256xf32>
    %7 = arith.maximumf %5, %6 : vector<128x256xf32>
    %8 = arith.truncf %7 : vector<128x256xf32> to vector<128x256xbf16>
    %c0_6 = arith.constant 0 : index
    %c0_7 = arith.constant 0 : index
    %9 = vector.load %arg4[%c0_6, %c0_7] : memref<128x256xbf16, #tpu.memory_space<vmem>>, vector<128x256xbf16>
    tpu.vector_store %arg4[%c0_6, %c0_7], %8 {strides = array<i32>} : memref<128x256xbf16, #tpu.memory_space<vmem>>, vector<128x256xbf16>,
    return
  }
  func.func @transform_0(%arg0: i32) -> (i32, i32) {
    %c0_i32 = arith.constant 0 : i32
    %c0_i32_0 = arith.constant 0 : i32
    return %arg0, %c0_i32 : i32, i32
  }
  func.func @transform_1(%arg0: i32) -> (i32, i32) {
    %c0_i32 = arith.constant 0 : i32
    %c0_i32_0 = arith.constant 0 : i32
    %c0_i32_1 = arith.constant 0 : i32
    return %c0_i32, %c0_i32_0 : i32, i32
  }
  func.func @transform_2(%arg0: i32) -> (i32, i32) {
    %c0_i32 = arith.constant 0 : i32
    %c0_i32_0 = arith.constant 0 : i32
    %c0_i32_1 = arith.constant 0 : i32
    return %c0_i32, %c0_i32_0 : i32, i32
  }
  func.func @transform_3(%arg0: i32) -> (i32, i32) {
    %c0_i32 = arith.constant 0 : i32
    %c0_i32_0 = arith.constant 0 : i32
    return %arg0, %c0_i32 : i32, i32
  }
}

module attributes {stable_mosaic.version = 11 : i64} {
  func.func @kernel(%arg0: i32, %arg1: i32, %arg2: memref<1x64x2xbf16, #tpu.memory_space<vmem>>, %arg3: memref<2x256xbf16, #tpu.memory_space<vmem>>, %arg4: memref<1x256xf32, #tpu.memory_space<vmem>>, %arg5: memref<1x64x256xbf16, #tpu.memory_space<vmem>>, %arg6: memref<6x256x256xbf16, #tpu.memory_space<vmem>>, %arg7: memref<6x1x256xf32, #tpu.memory_space<vmem>>, %arg8: memref<6x256x256xbf16, #tpu.memory_space<vmem>>, %arg9: memref<6x1x256xf32, #tpu.memory_space<vmem>>, %arg10: memref<6x256x256xbf16, #tpu.memory_space<vmem>>, %arg11: memref<6x1x256xf32, #tpu.memory_space<vmem>>, %arg12: memref<6x256x256xbf16, #tpu.memory_space<vmem>>, %arg13: memref<6x1x256xf32, #tpu.memory_space<vmem>>, %arg14: memref<6x256x256xbf16, #tpu.memory_space<vmem>>, %arg15: memref<6x1x256xf32, #tpu.memory_space<vmem>>, %arg16: memref<6x256x256xbf16, #tpu.memory_space<vmem>>, %arg17: memref<6x1x256xf32, #tpu.memory_space<vmem>>, %arg18: memref<256x2xf32, #tpu.memory_space<vmem>>, %arg19: memref<1x2xf32, #tpu.memory_space<vmem>>, %arg20: memref<1x1x2xf32, #tpu.memory_space<vmem>>, %arg21: memref<64x256xf32, #tpu.memory_space<vmem>>) attributes {dimension_semantics = [#tpu.dimension_semantics<parallel>, #tpu.dimension_semantics<arbitrary>], iteration_bounds = array<i64: 4, 6>, scalar_prefetch = 0 : i64, scratch_operands = 1 : i64, tpu.core_type = #tpu.core_type<tc>, window_params = [{transform_indices = @transform_0, window_bounds = array<i64: 1, 64, 2>}, {pipeline_mode = #tpu.pipeline_mode<synchronous>, transform_indices = @transform_1, window_bounds = array<i64: 2, 256>}, {pipeline_mode = #tpu.pipeline_mode<synchronous>, transform_indices = @transform_2, window_bounds = array<i64: 1, 256>}, {transform_indices = @transform_3, window_bounds = array<i64: 1, 64, 256>}, {pipeline_mode = #tpu.pipeline_mode<synchronous>, transform_indices = @transform_4, window_bounds = array<i64: 6, 256, 256>}, {pipeline_mode = #tpu.pipeline_mode<synchronous>, transform_indices = @transform_5, window_bounds = array<i64: 6, 1, 256>}, {pipeline_mode = #tpu.pipeline_mode<synchronous>, transform_indices = @transform_6, window_bounds = array<i64: 6, 256, 256>}, {pipeline_mode = #tpu.pipeline_mode<synchronous>, transform_indices = @transform_7, window_bounds = array<i64: 6, 1, 256>}, {pipeline_mode = #tpu.pipeline_mode<synchronous>, transform_indices = @transform_8, window_bounds = array<i64: 6, 256, 256>}, {pipeline_mode = #tpu.pipeline_mode<synchronous>, transform_indices = @transform_9, window_bounds = array<i64: 6, 1, 256>}, {pipeline_mode = #tpu.pipeline_mode<synchronous>, transform_indices = @transform_10, window_bounds = array<i64: 6, 256, 256>}, {pipeline_mode = #tpu.pipeline_mode<synchronous>, transform_indices = @transform_11, window_bounds = array<i64: 6, 1, 256>}, {pipeline_mode = #tpu.pipeline_mode<synchronous>, transform_indices = @transform_12, window_bounds = array<i64: 6, 256, 256>}, {pipeline_mode = #tpu.pipeline_mode<synchronous>, transform_indices = @transform_13, window_bounds = array<i64: 6, 1, 256>}, {pipeline_mode = #tpu.pipeline_mode<synchronous>, transform_indices = @transform_14, window_bounds = array<i64: 6, 256, 256>}, {pipeline_mode = #tpu.pipeline_mode<synchronous>, transform_indices = @transform_15, window_bounds = array<i64: 6, 1, 256>}, {pipeline_mode = #tpu.pipeline_mode<synchronous>, transform_indices = @transform_16, window_bounds = array<i64: 256, 2>}, {pipeline_mode = #tpu.pipeline_mode<synchronous>, transform_indices = @transform_17, window_bounds = array<i64: 1, 2>}, {transform_indices = @transform_18, window_bounds = array<i64: 1, 1, 2>}]} {
    %c0_i32 = arith.constant 0 : i32
    %0 = arith.cmpi eq, %arg1, %c0_i32 : i32
    %1 = arith.extui %0 : i1 to i32
    %c0_i32_0 = arith.constant 0 : i32
    %2 = arith.cmpi ne, %1, %c0_i32_0 : i32
    scf.if %2 {
      %c0_71 = arith.constant 0 : index
      %c0_72 = arith.constant 0 : index
      %c0_73 = arith.constant 0 : index
      %206 = vector.load %arg2[%c0_71, %c0_72, %c0_73] : memref<1x64x2xbf16, #tpu.memory_space<vmem>>, vector<1x64x2xbf16>
      %207 = vector.shape_cast %206 : vector<1x64x2xbf16> to vector<64x2xbf16>
      %c0_74 = arith.constant 0 : index
      %c0_75 = arith.constant 0 : index
      %208 = vector.load %arg3[%c0_74, %c0_75] : memref<2x256xbf16, #tpu.memory_space<vmem>>, vector<2x256xbf16>
      %cst_76 = arith.constant dense<0.000000e+00> : vector<64x256xf32>
      %209 = tpu.matmul %207, %208, %cst_76 {dimension_numbers = #tpu.dot_dimension_numbers<[1], [0], [0], [1], [0, 0, 1, 1], [], []>} : vector<64x2xbf16>, vector<2x256xbf16>, vector<64x256xf32> -> vector<64x256xf32>
      %c0_77 = arith.constant 0 : index
      %c0_78 = arith.constant 0 : index
      %210 = vector.load %arg4[%c0_77, %c0_78] : memref<1x256xf32, #tpu.memory_space<vmem>>, vector<1x256xf32>
      %211 = vector.broadcast %210 : vector<1x256xf32> to vector<64x256xf32>
      %212 = arith.addf %209, %211 : vector<64x256xf32>
      %cst_79 = arith.constant 0.000000e+00 : f32
      %213 = vector.broadcast %cst_79 : f32 to vector<64x256xf32>
      %214 = arith.maximumf %212, %213 : vector<64x256xf32>
      %c0_80 = arith.constant 0 : index
      %c0_81 = arith.constant 0 : index
      %215 = vector.load %arg21[%c0_80, %c0_81] : memref<64x256xf32, #tpu.memory_space<vmem>>, vector<64x256xf32>
      tpu.vector_store %arg21[%c0_80, %c0_81], %214 {strides = array<i32>} : memref<64x256xf32, #tpu.memory_space<vmem>>, vector<64x256xf32>,
    } else {
    }
    %c0 = arith.constant 0 : index
    %c0_1 = arith.constant 0 : index
    %3 = vector.load %arg21[%c0, %c0_1] : memref<64x256xf32, #tpu.memory_space<vmem>>, vector<64x256xf32>
    %4 = arith.truncf %3 : vector<64x256xf32> to vector<64x256xbf16>
    %c0_2 = arith.constant 0 : index
    %c0_3 = arith.constant 0 : index
    %c0_4 = arith.constant 0 : index
    %5 = vector.load %arg5[%c0_2, %c0_3, %c0_4] : memref<1x64x256xbf16, #tpu.memory_space<vmem>>, vector<1x64x256xbf16>
    %6 = vector.shape_cast %5 : vector<1x64x256xbf16> to vector<64x256xbf16>
    %7 = arith.index_cast %arg1 : i32 to index
    %c0_5 = arith.constant 0 : index
    %c0_6 = arith.constant 0 : index
    %8 = vector.load %arg6[%7, %c0_5, %c0_6] : memref<6x256x256xbf16, #tpu.memory_space<vmem>>, vector<1x256x256xbf16>
    %9 = vector.shape_cast %8 : vector<1x256x256xbf16> to vector<256x256xbf16>
    %cst = arith.constant dense<0.000000e+00> : vector<64x256xf32>
    %10 = tpu.matmul %4, %9, %cst {dimension_numbers = #tpu.dot_dimension_numbers<[1], [0], [0], [1], [0, 0, 1, 1], [], []>} : vector<64x256xbf16>, vector<256x256xbf16>, vector<64x256xf32> -> vector<64x256xf32>
    %11 = arith.index_cast %arg1 : i32 to index
    %c0_7 = arith.constant 0 : index
    %c0_8 = arith.constant 0 : index
    %12 = vector.load %arg7[%11, %c0_7, %c0_8] : memref<6x1x256xf32, #tpu.memory_space<vmem>>, vector<1x1x256xf32>
    %13 = vector.shape_cast %12 : vector<1x1x256xf32> to vector<1x256xf32>
    %14 = vector.broadcast %13 : vector<1x256xf32> to vector<64x256xf32>
    %15 = arith.addf %10, %14 : vector<64x256xf32>
    %16 = arith.index_cast %arg1 : i32 to index
    %c0_9 = arith.constant 0 : index
    %c0_10 = arith.constant 0 : index
    %17 = vector.load %arg8[%16, %c0_9, %c0_10] : memref<6x256x256xbf16, #tpu.memory_space<vmem>>, vector<1x256x256xbf16>
    %18 = vector.shape_cast %17 : vector<1x256x256xbf16> to vector<256x256xbf16>
    %cst_11 = arith.constant dense<0.000000e+00> : vector<64x256xf32>
    %19 = tpu.matmul %6, %18, %cst_11 {dimension_numbers = #tpu.dot_dimension_numbers<[1], [0], [0], [1], [0, 0, 1, 1], [], []>} : vector<64x256xbf16>, vector<256x256xbf16>, vector<64x256xf32> -> vector<64x256xf32>
    %20 = arith.index_cast %arg1 : i32 to index
    %c0_12 = arith.constant 0 : index
    %c0_13 = arith.constant 0 : index
    %21 = vector.load %arg9[%20, %c0_12, %c0_13] : memref<6x1x256xf32, #tpu.memory_space<vmem>>, vector<1x1x256xf32>
    %22 = vector.shape_cast %21 : vector<1x1x256xf32> to vector<1x256xf32>
    %23 = vector.broadcast %22 : vector<1x256xf32> to vector<64x256xf32>
    %24 = arith.addf %19, %23 : vector<64x256xf32>
    %25 = arith.index_cast %arg1 : i32 to index
    %c0_14 = arith.constant 0 : index
    %c0_15 = arith.constant 0 : index
    %26 = vector.load %arg10[%25, %c0_14, %c0_15] : memref<6x256x256xbf16, #tpu.memory_space<vmem>>, vector<1x256x256xbf16>
    %27 = vector.shape_cast %26 : vector<1x256x256xbf16> to vector<256x256xbf16>
    %cst_16 = arith.constant dense<0.000000e+00> : vector<64x256xf32>
    %28 = tpu.matmul %6, %27, %cst_16 {dimension_numbers = #tpu.dot_dimension_numbers<[1], [0], [0], [1], [0, 0, 1, 1], [], []>} : vector<64x256xbf16>, vector<256x256xbf16>, vector<64x256xf32> -> vector<64x256xf32>
    %29 = arith.index_cast %arg1 : i32 to index
    %c0_17 = arith.constant 0 : index
    %c0_18 = arith.constant 0 : index
    %30 = vector.load %arg11[%29, %c0_17, %c0_18] : memref<6x1x256xf32, #tpu.memory_space<vmem>>, vector<1x1x256xf32>
    %31 = vector.shape_cast %30 : vector<1x1x256xf32> to vector<1x256xf32>
    %32 = vector.broadcast %31 : vector<1x256xf32> to vector<64x256xf32>
    %33 = arith.addf %28, %32 : vector<64x256xf32>
    %34 = arith.truncf %15 : vector<64x256xf32> to vector<64x256xbf16>
    %35 = arith.truncf %24 : vector<64x256xf32> to vector<64x256xbf16>
    %36 = arith.truncf %33 : vector<64x256xf32> to vector<64x256xbf16>
    %37 = vector.extract_strided_slice %34 {offsets = [0, 0], sizes = [64, 32], strides = [1, 1]} : vector<64x256xbf16> to vector<64x32xbf16>
    %38 = vector.extract_strided_slice %35 {offsets = [0, 0], sizes = [64, 32], strides = [1, 1]} : vector<64x256xbf16> to vector<64x32xbf16>
    %cst_19 = arith.constant dense<0.000000e+00> : vector<64x64xf32>
    %39 = tpu.matmul %37, %38, %cst_19 {dimension_numbers = #tpu.dot_dimension_numbers<[1], [1], [0], [0], [0, 0, 1, 0], [], []>} : vector<64x32xbf16>, vector<64x32xbf16>, vector<64x64xf32> -> vector<64x64xf32>
    %cst_20 = arith.constant dense<0xFF800000> : vector<64xf32>
    %40 = vector.multi_reduction <maximumf>, %39, %cst_20 [1] : vector<64x64xf32> to vector<64xf32>
    %41 = vector.shape_cast %40 : vector<64xf32> to vector<64x1xf32>
    %42 = vector.broadcast %41 : vector<64x1xf32> to vector<64x64xf32>
    %43 = arith.subf %39, %42 : vector<64x64xf32>
    %44 = math.exp %43 : vector<64x64xf32>
    %cst_21 = arith.constant dense<0.000000e+00> : vector<64xf32>
    %45 = vector.multi_reduction <add>, %44, %cst_21 [1] : vector<64x64xf32> to vector<64xf32>
    %46 = vector.shape_cast %45 : vector<64xf32> to vector<64x1xf32>
    %47 = tpu.reciprocal %46 {approx = true} : vector<64x1xf32> -> vector<64x1xf32>
    %48 = vector.broadcast %47 : vector<64x1xf32> to vector<64x64xf32>
    %49 = arith.mulf %44, %48 : vector<64x64xf32>
    %50 = arith.truncf %49 : vector<64x64xf32> to vector<64x64xbf16>
    %51 = vector.extract_strided_slice %36 {offsets = [0, 0], sizes = [64, 32], strides = [1, 1]} : vector<64x256xbf16> to vector<64x32xbf16>
    %cst_22 = arith.constant dense<0.000000e+00> : vector<64x32xf32>
    %52 = tpu.matmul %50, %51, %cst_22 {dimension_numbers = #tpu.dot_dimension_numbers<[1], [0], [0], [1], [0, 0, 1, 1], [], []>} : vector<64x64xbf16>, vector<64x32xbf16>, vector<64x32xf32> -> vector<64x32xf32>
    %53 = vector.extract_strided_slice %34 {offsets = [0, 32], sizes = [64, 32], strides = [1, 1]} : vector<64x256xbf16> to vector<64x32xbf16>
    %54 = vector.extract_strided_slice %35 {offsets = [0, 32], sizes = [64, 32], strides = [1, 1]} : vector<64x256xbf16> to vector<64x32xbf16>
    %cst_23 = arith.constant dense<0.000000e+00> : vector<64x64xf32>
    %55 = tpu.matmul %53, %54, %cst_23 {dimension_numbers = #tpu.dot_dimension_numbers<[1], [1], [0], [0], [0, 0, 1, 0], [], []>} : vector<64x32xbf16>, vector<64x32xbf16>, vector<64x64xf32> -> vector<64x64xf32>
    %cst_24 = arith.constant dense<0xFF800000> : vector<64xf32>
    %56 = vector.multi_reduction <maximumf>, %55, %cst_24 [1] : vector<64x64xf32> to vector<64xf32>
    %57 = vector.shape_cast %56 : vector<64xf32> to vector<64x1xf32>
    %58 = vector.broadcast %57 : vector<64x1xf32> to vector<64x64xf32>
    %59 = arith.subf %55, %58 : vector<64x64xf32>
    %60 = math.exp %59 : vector<64x64xf32>
    %cst_25 = arith.constant dense<0.000000e+00> : vector<64xf32>
    %61 = vector.multi_reduction <add>, %60, %cst_25 [1] : vector<64x64xf32> to vector<64xf32>
    %62 = vector.shape_cast %61 : vector<64xf32> to vector<64x1xf32>
    %63 = tpu.reciprocal %62 {approx = true} : vector<64x1xf32> -> vector<64x1xf32>
    %64 = vector.broadcast %63 : vector<64x1xf32> to vector<64x64xf32>
    %65 = arith.mulf %60, %64 : vector<64x64xf32>
    %66 = arith.truncf %65 : vector<64x64xf32> to vector<64x64xbf16>
    %67 = vector.extract_strided_slice %36 {offsets = [0, 32], sizes = [64, 32], strides = [1, 1]} : vector<64x256xbf16> to vector<64x32xbf16>
    %cst_26 = arith.constant dense<0.000000e+00> : vector<64x32xf32>
    %68 = tpu.matmul %66, %67, %cst_26 {dimension_numbers = #tpu.dot_dimension_numbers<[1], [0], [0], [1], [0, 0, 1, 1], [], []>} : vector<64x64xbf16>, vector<64x32xbf16>, vector<64x32xf32> -> vector<64x32xf32>
    %69 = vector.extract_strided_slice %34 {offsets = [0, 64], sizes = [64, 32], strides = [1, 1]} : vector<64x256xbf16> to vector<64x32xbf16>
    %70 = vector.extract_strided_slice %35 {offsets = [0, 64], sizes = [64, 32], strides = [1, 1]} : vector<64x256xbf16> to vector<64x32xbf16>
    %cst_27 = arith.constant dense<0.000000e+00> : vector<64x64xf32>
    %71 = tpu.matmul %69, %70, %cst_27 {dimension_numbers = #tpu.dot_dimension_numbers<[1], [1], [0], [0], [0, 0, 1, 0], [], []>} : vector<64x32xbf16>, vector<64x32xbf16>, vector<64x64xf32> -> vector<64x64xf32>
    %cst_28 = arith.constant dense<0xFF800000> : vector<64xf32>
    %72 = vector.multi_reduction <maximumf>, %71, %cst_28 [1] : vector<64x64xf32> to vector<64xf32>
    %73 = vector.shape_cast %72 : vector<64xf32> to vector<64x1xf32>
    %74 = vector.broadcast %73 : vector<64x1xf32> to vector<64x64xf32>
    %75 = arith.subf %71, %74 : vector<64x64xf32>
    %76 = math.exp %75 : vector<64x64xf32>
    %cst_29 = arith.constant dense<0.000000e+00> : vector<64xf32>
    %77 = vector.multi_reduction <add>, %76, %cst_29 [1] : vector<64x64xf32> to vector<64xf32>
    %78 = vector.shape_cast %77 : vector<64xf32> to vector<64x1xf32>
    %79 = tpu.reciprocal %78 {approx = true} : vector<64x1xf32> -> vector<64x1xf32>
    %80 = vector.broadcast %79 : vector<64x1xf32> to vector<64x64xf32>
    %81 = arith.mulf %76, %80 : vector<64x64xf32>
    %82 = arith.truncf %81 : vector<64x64xf32> to vector<64x64xbf16>
    %83 = vector.extract_strided_slice %36 {offsets = [0, 64], sizes = [64, 32], strides = [1, 1]} : vector<64x256xbf16> to vector<64x32xbf16>
    %cst_30 = arith.constant dense<0.000000e+00> : vector<64x32xf32>
    %84 = tpu.matmul %82, %83, %cst_30 {dimension_numbers = #tpu.dot_dimension_numbers<[1], [0], [0], [1], [0, 0, 1, 1], [], []>} : vector<64x64xbf16>, vector<64x32xbf16>, vector<64x32xf32> -> vector<64x32xf32>
    %85 = vector.extract_strided_slice %34 {offsets = [0, 96], sizes = [64, 32], strides = [1, 1]} : vector<64x256xbf16> to vector<64x32xbf16>
    %86 = vector.extract_strided_slice %35 {offsets = [0, 96], sizes = [64, 32], strides = [1, 1]} : vector<64x256xbf16> to vector<64x32xbf16>
    %cst_31 = arith.constant dense<0.000000e+00> : vector<64x64xf32>
    %87 = tpu.matmul %85, %86, %cst_31 {dimension_numbers = #tpu.dot_dimension_numbers<[1], [1], [0], [0], [0, 0, 1, 0], [], []>} : vector<64x32xbf16>, vector<64x32xbf16>, vector<64x64xf32> -> vector<64x64xf32>
    %cst_32 = arith.constant dense<0xFF800000> : vector<64xf32>
    %88 = vector.multi_reduction <maximumf>, %87, %cst_32 [1] : vector<64x64xf32> to vector<64xf32>
    %89 = vector.shape_cast %88 : vector<64xf32> to vector<64x1xf32>
    %90 = vector.broadcast %89 : vector<64x1xf32> to vector<64x64xf32>
    %91 = arith.subf %87, %90 : vector<64x64xf32>
    %92 = math.exp %91 : vector<64x64xf32>
    %cst_33 = arith.constant dense<0.000000e+00> : vector<64xf32>
    %93 = vector.multi_reduction <add>, %92, %cst_33 [1] : vector<64x64xf32> to vector<64xf32>
    %94 = vector.shape_cast %93 : vector<64xf32> to vector<64x1xf32>
    %95 = tpu.reciprocal %94 {approx = true} : vector<64x1xf32> -> vector<64x1xf32>
    %96 = vector.broadcast %95 : vector<64x1xf32> to vector<64x64xf32>
    %97 = arith.mulf %92, %96 : vector<64x64xf32>
    %98 = arith.truncf %97 : vector<64x64xf32> to vector<64x64xbf16>
    %99 = vector.extract_strided_slice %36 {offsets = [0, 96], sizes = [64, 32], strides = [1, 1]} : vector<64x256xbf16> to vector<64x32xbf16>
    %cst_34 = arith.constant dense<0.000000e+00> : vector<64x32xf32>
    %100 = tpu.matmul %98, %99, %cst_34 {dimension_numbers = #tpu.dot_dimension_numbers<[1], [0], [0], [1], [0, 0, 1, 1], [], []>} : vector<64x64xbf16>, vector<64x32xbf16>, vector<64x32xf32> -> vector<64x32xf32>
    %101 = vector.extract_strided_slice %34 {offsets = [0, 128], sizes = [64, 32], strides = [1, 1]} : vector<64x256xbf16> to vector<64x32xbf16>
    %102 = vector.extract_strided_slice %35 {offsets = [0, 128], sizes = [64, 32], strides = [1, 1]} : vector<64x256xbf16> to vector<64x32xbf16>
    %cst_35 = arith.constant dense<0.000000e+00> : vector<64x64xf32>
    %103 = tpu.matmul %101, %102, %cst_35 {dimension_numbers = #tpu.dot_dimension_numbers<[1], [1], [0], [0], [0, 0, 1, 0], [], []>} : vector<64x32xbf16>, vector<64x32xbf16>, vector<64x64xf32> -> vector<64x64xf32>
    %cst_36 = arith.constant dense<0xFF800000> : vector<64xf32>
    %104 = vector.multi_reduction <maximumf>, %103, %cst_36 [1] : vector<64x64xf32> to vector<64xf32>
    %105 = vector.shape_cast %104 : vector<64xf32> to vector<64x1xf32>
    %106 = vector.broadcast %105 : vector<64x1xf32> to vector<64x64xf32>
    %107 = arith.subf %103, %106 : vector<64x64xf32>
    %108 = math.exp %107 : vector<64x64xf32>
    %cst_37 = arith.constant dense<0.000000e+00> : vector<64xf32>
    %109 = vector.multi_reduction <add>, %108, %cst_37 [1] : vector<64x64xf32> to vector<64xf32>
    %110 = vector.shape_cast %109 : vector<64xf32> to vector<64x1xf32>
    %111 = tpu.reciprocal %110 {approx = true} : vector<64x1xf32> -> vector<64x1xf32>
    %112 = vector.broadcast %111 : vector<64x1xf32> to vector<64x64xf32>
    %113 = arith.mulf %108, %112 : vector<64x64xf32>
    %114 = arith.truncf %113 : vector<64x64xf32> to vector<64x64xbf16>
    %115 = vector.extract_strided_slice %36 {offsets = [0, 128], sizes = [64, 32], strides = [1, 1]} : vector<64x256xbf16> to vector<64x32xbf16>
    %cst_38 = arith.constant dense<0.000000e+00> : vector<64x32xf32>
    %116 = tpu.matmul %114, %115, %cst_38 {dimension_numbers = #tpu.dot_dimension_numbers<[1], [0], [0], [1], [0, 0, 1, 1], [], []>} : vector<64x64xbf16>, vector<64x32xbf16>, vector<64x32xf32> -> vector<64x32xf32>
    %117 = vector.extract_strided_slice %34 {offsets = [0, 160], sizes = [64, 32], strides = [1, 1]} : vector<64x256xbf16> to vector<64x32xbf16>
    %118 = vector.extract_strided_slice %35 {offsets = [0, 160], sizes = [64, 32], strides = [1, 1]} : vector<64x256xbf16> to vector<64x32xbf16>
    %cst_39 = arith.constant dense<0.000000e+00> : vector<64x64xf32>
    %119 = tpu.matmul %117, %118, %cst_39 {dimension_numbers = #tpu.dot_dimension_numbers<[1], [1], [0], [0], [0, 0, 1, 0], [], []>} : vector<64x32xbf16>, vector<64x32xbf16>, vector<64x64xf32> -> vector<64x64xf32>
    %cst_40 = arith.constant dense<0xFF800000> : vector<64xf32>
    %120 = vector.multi_reduction <maximumf>, %119, %cst_40 [1] : vector<64x64xf32> to vector<64xf32>
    %121 = vector.shape_cast %120 : vector<64xf32> to vector<64x1xf32>
    %122 = vector.broadcast %121 : vector<64x1xf32> to vector<64x64xf32>
    %123 = arith.subf %119, %122 : vector<64x64xf32>
    %124 = math.exp %123 : vector<64x64xf32>
    %cst_41 = arith.constant dense<0.000000e+00> : vector<64xf32>
    %125 = vector.multi_reduction <add>, %124, %cst_41 [1] : vector<64x64xf32> to vector<64xf32>
    %126 = vector.shape_cast %125 : vector<64xf32> to vector<64x1xf32>
    %127 = tpu.reciprocal %126 {approx = true} : vector<64x1xf32> -> vector<64x1xf32>
    %128 = vector.broadcast %127 : vector<64x1xf32> to vector<64x64xf32>
    %129 = arith.mulf %124, %128 : vector<64x64xf32>
    %130 = arith.truncf %129 : vector<64x64xf32> to vector<64x64xbf16>
    %131 = vector.extract_strided_slice %36 {offsets = [0, 160], sizes = [64, 32], strides = [1, 1]} : vector<64x256xbf16> to vector<64x32xbf16>
    %cst_42 = arith.constant dense<0.000000e+00> : vector<64x32xf32>
    %132 = tpu.matmul %130, %131, %cst_42 {dimension_numbers = #tpu.dot_dimension_numbers<[1], [0], [0], [1], [0, 0, 1, 1], [], []>} : vector<64x64xbf16>, vector<64x32xbf16>, vector<64x32xf32> -> vector<64x32xf32>
    %133 = vector.extract_strided_slice %34 {offsets = [0, 192], sizes = [64, 32], strides = [1, 1]} : vector<64x256xbf16> to vector<64x32xbf16>
    %134 = vector.extract_strided_slice %35 {offsets = [0, 192], sizes = [64, 32], strides = [1, 1]} : vector<64x256xbf16> to vector<64x32xbf16>
    %cst_43 = arith.constant dense<0.000000e+00> : vector<64x64xf32>
    %135 = tpu.matmul %133, %134, %cst_43 {dimension_numbers = #tpu.dot_dimension_numbers<[1], [1], [0], [0], [0, 0, 1, 0], [], []>} : vector<64x32xbf16>, vector<64x32xbf16>, vector<64x64xf32> -> vector<64x64xf32>
    %cst_44 = arith.constant dense<0xFF800000> : vector<64xf32>
    %136 = vector.multi_reduction <maximumf>, %135, %cst_44 [1] : vector<64x64xf32> to vector<64xf32>
    %137 = vector.shape_cast %136 : vector<64xf32> to vector<64x1xf32>
    %138 = vector.broadcast %137 : vector<64x1xf32> to vector<64x64xf32>
    %139 = arith.subf %135, %138 : vector<64x64xf32>
    %140 = math.exp %139 : vector<64x64xf32>
    %cst_45 = arith.constant dense<0.000000e+00> : vector<64xf32>
    %141 = vector.multi_reduction <add>, %140, %cst_45 [1] : vector<64x64xf32> to vector<64xf32>
    %142 = vector.shape_cast %141 : vector<64xf32> to vector<64x1xf32>
    %143 = tpu.reciprocal %142 {approx = true} : vector<64x1xf32> -> vector<64x1xf32>
    %144 = vector.broadcast %143 : vector<64x1xf32> to vector<64x64xf32>
    %145 = arith.mulf %140, %144 : vector<64x64xf32>
    %146 = arith.truncf %145 : vector<64x64xf32> to vector<64x64xbf16>
    %147 = vector.extract_strided_slice %36 {offsets = [0, 192], sizes = [64, 32], strides = [1, 1]} : vector<64x256xbf16> to vector<64x32xbf16>
    %cst_46 = arith.constant dense<0.000000e+00> : vector<64x32xf32>
    %148 = tpu.matmul %146, %147, %cst_46 {dimension_numbers = #tpu.dot_dimension_numbers<[1], [0], [0], [1], [0, 0, 1, 1], [], []>} : vector<64x64xbf16>, vector<64x32xbf16>, vector<64x32xf32> -> vector<64x32xf32>
    %149 = vector.extract_strided_slice %34 {offsets = [0, 224], sizes = [64, 32], strides = [1, 1]} : vector<64x256xbf16> to vector<64x32xbf16>
    %150 = vector.extract_strided_slice %35 {offsets = [0, 224], sizes = [64, 32], strides = [1, 1]} : vector<64x256xbf16> to vector<64x32xbf16>
    %cst_47 = arith.constant dense<0.000000e+00> : vector<64x64xf32>
    %151 = tpu.matmul %149, %150, %cst_47 {dimension_numbers = #tpu.dot_dimension_numbers<[1], [1], [0], [0], [0, 0, 1, 0], [], []>} : vector<64x32xbf16>, vector<64x32xbf16>, vector<64x64xf32> -> vector<64x64xf32>
    %cst_48 = arith.constant dense<0xFF800000> : vector<64xf32>
    %152 = vector.multi_reduction <maximumf>, %151, %cst_48 [1] : vector<64x64xf32> to vector<64xf32>
    %153 = vector.shape_cast %152 : vector<64xf32> to vector<64x1xf32>
    %154 = vector.broadcast %153 : vector<64x1xf32> to vector<64x64xf32>
    %155 = arith.subf %151, %154 : vector<64x64xf32>
    %156 = math.exp %155 : vector<64x64xf32>
    %cst_49 = arith.constant dense<0.000000e+00> : vector<64xf32>
    %157 = vector.multi_reduction <add>, %156, %cst_49 [1] : vector<64x64xf32> to vector<64xf32>
    %158 = vector.shape_cast %157 : vector<64xf32> to vector<64x1xf32>
    %159 = tpu.reciprocal %158 {approx = true} : vector<64x1xf32> -> vector<64x1xf32>
    %160 = vector.broadcast %159 : vector<64x1xf32> to vector<64x64xf32>
    %161 = arith.mulf %156, %160 : vector<64x64xf32>
    %162 = arith.truncf %161 : vector<64x64xf32> to vector<64x64xbf16>
    %163 = vector.extract_strided_slice %36 {offsets = [0, 224], sizes = [64, 32], strides = [1, 1]} : vector<64x256xbf16> to vector<64x32xbf16>
    %cst_50 = arith.constant dense<0.000000e+00> : vector<64x32xf32>
    %164 = tpu.matmul %162, %163, %cst_50 {dimension_numbers = #tpu.dot_dimension_numbers<[1], [0], [0], [1], [0, 0, 1, 1], [], []>} : vector<64x64xbf16>, vector<64x32xbf16>, vector<64x32xf32> -> vector<64x32xf32>
    %165 = tpu.concatenate %52, %68, %84, %100, %116, %132, %148, %164 in 1 : vector<64x32xf32>, vector<64x32xf32>, vector<64x32xf32>, vector<64x32xf32>, vector<64x32xf32>, vector<64x32xf32>, vector<64x32xf32>, vector<64x32xf32> -> vector<64x256xf32>
    %166 = arith.truncf %165 : vector<64x256xf32> to vector<64x256xbf16>
    %167 = arith.index_cast %arg1 : i32 to index
    %c0_51 = arith.constant 0 : index
    %c0_52 = arith.constant 0 : index
    %168 = vector.load %arg12[%167, %c0_51, %c0_52] : memref<6x256x256xbf16, #tpu.memory_space<vmem>>, vector<1x256x256xbf16>
    %169 = vector.shape_cast %168 : vector<1x256x256xbf16> to vector<256x256xbf16>
    %cst_53 = arith.constant dense<0.000000e+00> : vector<64x256xf32>
    %170 = tpu.matmul %166, %169, %cst_53 {dimension_numbers = #tpu.dot_dimension_numbers<[1], [0], [0], [1], [0, 0, 1, 1], [], []>} : vector<64x256xbf16>, vector<256x256xbf16>, vector<64x256xf32> -> vector<64x256xf32>
    %171 = arith.index_cast %arg1 : i32 to index
    %c0_54 = arith.constant 0 : index
    %c0_55 = arith.constant 0 : index
    %172 = vector.load %arg13[%171, %c0_54, %c0_55] : memref<6x1x256xf32, #tpu.memory_space<vmem>>, vector<1x1x256xf32>
    %173 = vector.shape_cast %172 : vector<1x1x256xf32> to vector<1x256xf32>
    %174 = vector.broadcast %173 : vector<1x256xf32> to vector<64x256xf32>
    %175 = arith.addf %170, %174 : vector<64x256xf32>
    %176 = arith.addf %175, %3 : vector<64x256xf32>
    %177 = arith.truncf %176 : vector<64x256xf32> to vector<64x256xbf16>
    %178 = arith.index_cast %arg1 : i32 to index
    %c0_56 = arith.constant 0 : index
    %c0_57 = arith.constant 0 : index
    %179 = vector.load %arg14[%178, %c0_56, %c0_57] : memref<6x256x256xbf16, #tpu.memory_space<vmem>>, vector<1x256x256xbf16>
    %180 = vector.shape_cast %179 : vector<1x256x256xbf16> to vector<256x256xbf16>
    %cst_58 = arith.constant dense<0.000000e+00> : vector<64x256xf32>
    %181 = tpu.matmul %177, %180, %cst_58 {dimension_numbers = #tpu.dot_dimension_numbers<[1], [0], [0], [1], [0, 0, 1, 1], [], []>} : vector<64x256xbf16>, vector<256x256xbf16>, vector<64x256xf32> -> vector<64x256xf32>
    %182 = arith.index_cast %arg1 : i32 to index
    %c0_59 = arith.constant 0 : index
    %c0_60 = arith.constant 0 : index
    %183 = vector.load %arg15[%182, %c0_59, %c0_60] : memref<6x1x256xf32, #tpu.memory_space<vmem>>, vector<1x1x256xf32>
    %184 = vector.shape_cast %183 : vector<1x1x256xf32> to vector<1x256xf32>
    %185 = vector.broadcast %184 : vector<1x256xf32> to vector<64x256xf32>
    %186 = arith.addf %181, %185 : vector<64x256xf32>
    %cst_61 = arith.constant 0.000000e+00 : f32
    %187 = vector.broadcast %cst_61 : f32 to vector<64x256xf32>
    %188 = arith.maximumf %186, %187 : vector<64x256xf32>
    %189 = arith.truncf %188 : vector<64x256xf32> to vector<64x256xbf16>
    %190 = arith.index_cast %arg1 : i32 to index
    %c0_62 = arith.constant 0 : index
    %c0_63 = arith.constant 0 : index
    %191 = vector.load %arg16[%190, %c0_62, %c0_63] : memref<6x256x256xbf16, #tpu.memory_space<vmem>>, vector<1x256x256xbf16>
    %192 = vector.shape_cast %191 : vector<1x256x256xbf16> to vector<256x256xbf16>
    %cst_64 = arith.constant dense<0.000000e+00> : vector<64x256xf32>
    %193 = tpu.matmul %189, %192, %cst_64 {dimension_numbers = #tpu.dot_dimension_numbers<[1], [0], [0], [1], [0, 0, 1, 1], [], []>} : vector<64x256xbf16>, vector<256x256xbf16>, vector<64x256xf32> -> vector<64x256xf32>
    %194 = arith.index_cast %arg1 : i32 to index
    %c0_65 = arith.constant 0 : index
    %c0_66 = arith.constant 0 : index
    %195 = vector.load %arg17[%194, %c0_65, %c0_66] : memref<6x1x256xf32, #tpu.memory_space<vmem>>, vector<1x1x256xf32>
    %196 = vector.shape_cast %195 : vector<1x1x256xf32> to vector<1x256xf32>
    %197 = vector.broadcast %196 : vector<1x256xf32> to vector<64x256xf32>
    %198 = arith.addf %193, %197 : vector<64x256xf32>
    %cst_67 = arith.constant 0.000000e+00 : f32
    %199 = vector.broadcast %cst_67 : f32 to vector<64x256xf32>
    %200 = arith.maximumf %198, %199 : vector<64x256xf32>
    %201 = arith.addf %176, %200 : vector<64x256xf32>
    %c0_68 = arith.constant 0 : index
    %c0_69 = arith.constant 0 : index
    %202 = vector.load %arg21[%c0_68, %c0_69] : memref<64x256xf32, #tpu.memory_space<vmem>>, vector<64x256xf32>
    tpu.vector_store %arg21[%c0_68, %c0_69], %201 {strides = array<i32>} : memref<64x256xf32, #tpu.memory_space<vmem>>, vector<64x256xf32>,
    %c5_i32 = arith.constant 5 : i32
    %203 = arith.cmpi eq, %arg1, %c5_i32 : i32
    %204 = arith.extui %203 : i1 to i32
    %c0_i32_70 = arith.constant 0 : i32
    %205 = arith.cmpi ne, %204, %c0_i32_70 : i32
    scf.if %205 {
      %cst_71 = arith.constant dense<0.000000e+00> : vector<256xf32>
      %206 = vector.multi_reduction <add>, %201, %cst_71 [0] : vector<64x256xf32> to vector<256xf32>
      %207 = vector.shape_cast %206 : vector<256xf32> to vector<1x256xf32>
      %cst_72 = arith.constant 6.400000e+01 : f32
      %208 = vector.broadcast %cst_72 : f32 to vector<1x256xf32>
      %209 = arith.divf %207, %208 : vector<1x256xf32>
      %c0_73 = arith.constant 0 : index
      %c0_74 = arith.constant 0 : index
      %210 = vector.load %arg18[%c0_73, %c0_74] : memref<256x2xf32, #tpu.memory_space<vmem>>, vector<256x2xf32>
      %cst_75 = arith.constant dense<0.000000e+00> : vector<1x2xf32>
      %211 = tpu.matmul %209, %210, %cst_75 {dimension_numbers = #tpu.dot_dimension_numbers<[1], [0], [0], [1], [0, 0, 1, 1], [], []>} : vector<1x256xf32>, vector<256x2xf32>, vector<1x2xf32> -> vector<1x2xf32>
      %c0_76 = arith.constant 0 : index
      %c0_77 = arith.constant 0 : index
      %212 = vector.load %arg19[%c0_76, %c0_77] : memref<1x2xf32, #tpu.memory_space<vmem>>, vector<1x2xf32>
      %213 = arith.addf %211, %212 : vector<1x2xf32>
      %c0_78 = arith.constant 0 : index
      %c0_79 = arith.constant 0 : index
      %c0_80 = arith.constant 0 : index
      %214 = vector.load %arg20[%c0_78, %c0_79, %c0_80] : memref<1x1x2xf32, #tpu.memory_space<vmem>>, vector<1x1x2xf32>
      %215 = vector.shape_cast %214 : vector<1x1x2xf32> to vector<1x2xf32>
      %216 = vector.shape_cast %213 : vector<1x2xf32> to vector<1x1x2xf32>
      tpu.vector_store %arg20[%c0_78, %c0_79, %c0_80], %216 {strides = array<i32>} : memref<1x1x2xf32, #tpu.memory_space<vmem>>, vector<1x1x2xf32>,
    } else {
    }
    return
  }
  func.func @transform_0(%arg0: i32, %arg1: i32) -> (i32, i32, i32) {
    %c0_i32 = arith.constant 0 : i32
    %c0_i32_0 = arith.constant 0 : i32
    %c0_i32_1 = arith.constant 0 : i32
    return %arg0, %c0_i32, %c0_i32_0 : i32, i32, i32
  }
  func.func @transform_1(%arg0: i32, %arg1: i32) -> (i32, i32) {
    %c0_i32 = arith.constant 0 : i32
    %c0_i32_0 = arith.constant 0 : i32
    %c0_i32_1 = arith.constant 0 : i32
    return %c0_i32, %c0_i32_0 : i32, i32
  }
  func.func @transform_2(%arg0: i32, %arg1: i32) -> (i32, i32) {
    %c0_i32 = arith.constant 0 : i32
    %c0_i32_0 = arith.constant 0 : i32
    %c0_i32_1 = arith.constant 0 : i32
    return %c0_i32, %c0_i32_0 : i32, i32
  }
  func.func @transform_3(%arg0: i32, %arg1: i32) -> (i32, i32, i32) {
    %c0_i32 = arith.constant 0 : i32
    %c0_i32_0 = arith.constant 0 : i32
    %c0_i32_1 = arith.constant 0 : i32
    return %arg0, %c0_i32, %c0_i32_0 : i32, i32, i32
  }
  func.func @transform_4(%arg0: i32, %arg1: i32) -> (i32, i32, i32) {
    %c0_i32 = arith.constant 0 : i32
    %c0_i32_0 = arith.constant 0 : i32
    %c0_i32_1 = arith.constant 0 : i32
    %c0_i32_2 = arith.constant 0 : i32
    return %c0_i32, %c0_i32_0, %c0_i32_1 : i32, i32, i32
  }
  func.func @transform_5(%arg0: i32, %arg1: i32) -> (i32, i32, i32) {
    %c0_i32 = arith.constant 0 : i32
    %c0_i32_0 = arith.constant 0 : i32
    %c0_i32_1 = arith.constant 0 : i32
    %c0_i32_2 = arith.constant 0 : i32
    return %c0_i32, %c0_i32_0, %c0_i32_1 : i32, i32, i32
  }
  func.func @transform_6(%arg0: i32, %arg1: i32) -> (i32, i32, i32) {
    %c0_i32 = arith.constant 0 : i32
    %c0_i32_0 = arith.constant 0 : i32
    %c0_i32_1 = arith.constant 0 : i32
    %c0_i32_2 = arith.constant 0 : i32
    return %c0_i32, %c0_i32_0, %c0_i32_1 : i32, i32, i32
  }
  func.func @transform_7(%arg0: i32, %arg1: i32) -> (i32, i32, i32) {
    %c0_i32 = arith.constant 0 : i32
    %c0_i32_0 = arith.constant 0 : i32
    %c0_i32_1 = arith.constant 0 : i32
    %c0_i32_2 = arith.constant 0 : i32
    return %c0_i32, %c0_i32_0, %c0_i32_1 : i32, i32, i32
  }
  func.func @transform_8(%arg0: i32, %arg1: i32) -> (i32, i32, i32) {
    %c0_i32 = arith.constant 0 : i32
    %c0_i32_0 = arith.constant 0 : i32
    %c0_i32_1 = arith.constant 0 : i32
    %c0_i32_2 = arith.constant 0 : i32
    return %c0_i32, %c0_i32_0, %c0_i32_1 : i32, i32, i32
  }
  func.func @transform_9(%arg0: i32, %arg1: i32) -> (i32, i32, i32) {
    %c0_i32 = arith.constant 0 : i32
    %c0_i32_0 = arith.constant 0 : i32
    %c0_i32_1 = arith.constant 0 : i32
    %c0_i32_2 = arith.constant 0 : i32
    return %c0_i32, %c0_i32_0, %c0_i32_1 : i32, i32, i32
  }
  func.func @transform_10(%arg0: i32, %arg1: i32) -> (i32, i32, i32) {
    %c0_i32 = arith.constant 0 : i32
    %c0_i32_0 = arith.constant 0 : i32
    %c0_i32_1 = arith.constant 0 : i32
    %c0_i32_2 = arith.constant 0 : i32
    return %c0_i32, %c0_i32_0, %c0_i32_1 : i32, i32, i32
  }
  func.func @transform_11(%arg0: i32, %arg1: i32) -> (i32, i32, i32) {
    %c0_i32 = arith.constant 0 : i32
    %c0_i32_0 = arith.constant 0 : i32
    %c0_i32_1 = arith.constant 0 : i32
    %c0_i32_2 = arith.constant 0 : i32
    return %c0_i32, %c0_i32_0, %c0_i32_1 : i32, i32, i32
  }
  func.func @transform_12(%arg0: i32, %arg1: i32) -> (i32, i32, i32) {
    %c0_i32 = arith.constant 0 : i32
    %c0_i32_0 = arith.constant 0 : i32
    %c0_i32_1 = arith.constant 0 : i32
    %c0_i32_2 = arith.constant 0 : i32
    return %c0_i32, %c0_i32_0, %c0_i32_1 : i32, i32, i32
  }
  func.func @transform_13(%arg0: i32, %arg1: i32) -> (i32, i32, i32) {
    %c0_i32 = arith.constant 0 : i32
    %c0_i32_0 = arith.constant 0 : i32
    %c0_i32_1 = arith.constant 0 : i32
    %c0_i32_2 = arith.constant 0 : i32
    return %c0_i32, %c0_i32_0, %c0_i32_1 : i32, i32, i32
  }
  func.func @transform_14(%arg0: i32, %arg1: i32) -> (i32, i32, i32) {
    %c0_i32 = arith.constant 0 : i32
    %c0_i32_0 = arith.constant 0 : i32
    %c0_i32_1 = arith.constant 0 : i32
    %c0_i32_2 = arith.constant 0 : i32
    return %c0_i32, %c0_i32_0, %c0_i32_1 : i32, i32, i32
  }
  func.func @transform_15(%arg0: i32, %arg1: i32) -> (i32, i32, i32) {
    %c0_i32 = arith.constant 0 : i32
    %c0_i32_0 = arith.constant 0 : i32
    %c0_i32_1 = arith.constant 0 : i32
    %c0_i32_2 = arith.constant 0 : i32
    return %c0_i32, %c0_i32_0, %c0_i32_1 : i32, i32, i32
  }
  func.func @transform_16(%arg0: i32, %arg1: i32) -> (i32, i32) {
    %c0_i32 = arith.constant 0 : i32
    %c0_i32_0 = arith.constant 0 : i32
    %c0_i32_1 = arith.constant 0 : i32
    return %c0_i32, %c0_i32_0 : i32, i32
  }
  func.func @transform_17(%arg0: i32, %arg1: i32) -> (i32, i32) {
    %c0_i32 = arith.constant 0 : i32
    %c0_i32_0 = arith.constant 0 : i32
    %c0_i32_1 = arith.constant 0 : i32
    return %c0_i32, %c0_i32_0 : i32, i32
  }
  func.func @transform_18(%arg0: i32, %arg1: i32) -> (i32, i32, i32) {
    %c0_i32 = arith.constant 0 : i32
    %c0_i32_0 = arith.constant 0 : i32
    %c0_i32_1 = arith.constant 0 : i32
    return %arg0, %c0_i32, %c0_i32_0 : i32, i32, i32
  }
}

</mosaic_0001>

<llo_original>
// kernel: _lambda_.2
$region0: #{_lambda_.2}
  #allocation0 [shape = 'u32[]', space=smem, size = 0x4, offset = 0x4, fixed_abs, tag = 'smem constant byte address 0x4 - core index']
  #allocation1 [shape = 'u32[144,128]{1,0:T(1,128)}', space=vmem, size = 0x12000, scoped, tag = 'internal scratch']
  %s0 = inlined_call_operand.vmem [shape: f32[128,2], index: 0, kind: input, shape index: {}]
  %s1 = inlined_call_operand.vmem [shape: f32[2,256], index: 1, kind: input, shape index: {}]
  %s2 = inlined_call_operand.vmem [shape: f32[1,256], index: 2, kind: input, shape index: {}]
  %s3 = inlined_call_operand.vmem [shape: bf16[128,256], index: 3, kind: output, shape index: {}]
  %s4 = sld [smem:[#allocation0]]
  $region22: #{_lambda_.2} parent=0
    _
  %s6 = ssub.s32 1, %s4
  %s7 = scalar_select 0, %s6, %s4
  // Predicated region
  $region2: #{_lambda_.2} parent=0 // pred_check
    _
  $region3: #{_lambda_.2} parent=0 // pred_check_branch
    %9 = sbr.rel (0) target = $region5
  $region4: #{_lambda_.2} parent=0 // pred_region
    _
  $region5: #{_lambda_.2} parent=0 // pred_fallthru
    _
  // Predicated region
  $region6: #{_lambda_.2} parent=0 // pred_check
    _
  $region7: #{_lambda_.2} parent=0 // pred_check_branch
    %11 = sbr.rel (0) target = $region9
  $region8: #{_lambda_.2} parent=0 // pred_region
    _
  $region9: #{_lambda_.2} parent=0 // pred_fallthru
    _
  // Predicated region
  $region10: #{_lambda_.2} parent=0 // pred_check
    _
  $region11: #{_lambda_.2} parent=0 // pred_check_branch
    %13 = sbr.rel (0) target = $region13
  $region12: #{_lambda_.2} parent=0 // pred_region
    _
  $region13: #{_lambda_.2} parent=0 // pred_fallthru
    _
  %v14 = vld [vmem:[%s0] sm:$0xff]
  %v15 = vld [vmem:[%s0 + $0x8] sm:$0xff]
  %v16 = vld [vmem:[%s0 + $0x10] sm:$0xff]
  %v17 = vld [vmem:[%s0 + $0x18] sm:$0xff]
  %v18 = vld [vmem:[%s0 + $0x20] sm:$0xff]
  %v19 = vld [vmem:[%s0 + $0x28] sm:$0xff]
  %v20 = vld [vmem:[%s0 + $0x30] sm:$0xff]
  %v21 = vld [vmem:[%s0 + $0x38] sm:$0xff]
  %v22 = vld [vmem:[%s0 + $0x40] sm:$0xff]
  %v23 = vld [vmem:[%s0 + $0x48] sm:$0xff]
  %v24 = vld [vmem:[%s0 + $0x50] sm:$0xff]
  %v25 = vld [vmem:[%s0 + $0x58] sm:$0xff]
  %v26 = vld [vmem:[%s0 + $0x60] sm:$0xff]
  %v27 = vld [vmem:[%s0 + $0x68] sm:$0xff]
  %v28 = vld [vmem:[%s0 + $0x70] sm:$0xff]
  %v29 = vld [vmem:[%s0 + $0x78] sm:$0xff]
  %v30 = vld [vmem:[%s1] sm:$0xf]
  %v31 = vld [vmem:[%s2] sm:$0x3]
  %v33 = vlaneseq
  %v34 = vshrl.u32 %v33, 7
  %v35 = vsub.s32 0, %v34
  %v36 = vrot.slane %v31, %v35
  %v37 = vlaneseq
  %v38 = vshrl.u32 %v37, 7
  %v39 = vsub.s32 1, %v38
  %v40 = vrot.slane %v31, %v39
  %v45 = vunpack.c.l.s4 1983009808
  %v46 = vunpack.c.0.s8 %v45
  %v47 = vlaneseq
  %v48 = vshrl.u32 %v47, 7
  %v49 = vsub.s32 %v46, %v48
  %v50 = vrot.slane %v30, %v49
  %v51 = vcombine.high %v50, %v50
  %vm52 = vcmask 15360
  %v54 = vsel %vm52, %v14, 0
  %v57 = vsel %vm52, %v15, 0
  %v60 = vsel %vm52, %v16, 0
  %v63 = vsel %vm52, %v17, 0
  %v66 = vsel %vm52, %v18, 0
  %v69 = vsel %vm52, %v19, 0
  %v72 = vsel %vm52, %v20, 0
  %v75 = vsel %vm52, %v21, 0
  %v78 = vsel %vm52, %v22, 0
  %v81 = vsel %vm52, %v23, 0
  %v84 = vsel %vm52, %v24, 0
  %v87 = vsel %vm52, %v25, 0
  %v90 = vsel %vm52, %v26, 0
  %v93 = vsel %vm52, %v27, 0
  %v96 = vsel %vm52, %v28, 0
  %v99 = vsel %vm52, %v29, 0
  %vm101 = vcmask 1041408
  %v102 = vsel %vm101, %v50, 0
  %v104 = vsel %vm101, %v51, 0
  %106 = vmatprep.subr.mxu0 %v104
  %107 = vmatpush1.msra.mxu0 %v102
  %108 = vmatprep.subr.mxu0 0.0
  %109 = vmatpush1.msra.mxu0 0.0
  %110 = vmatprep.subr.mxu0 0.0
  %111 = vmatpush1.msra.mxu0 0.0
  %112 = vmatprep.subr.mxu0 0.0
  %113 = vmatpush1.msra.mxu0 0.0
  %114 = vmatprep.subr.mxu0 0.0
  %115 = vmatpush1.msra.mxu0 0.0
  %116 = vmatprep.subr.mxu0 0.0
  %117 = vmatpush1.msra.mxu0 0.0
  %118 = vmatprep.subr.mxu0 0.0
  %119 = vmatpush1.msra.mxu0 0.0
  %120 = vmatprep.subr.mxu0 0.0
  %121 = vmatpush1.msra.mxu0 0.0
  %122 = vmatprep.subr.mxu0 0.0
  %123 = vmatpush1.msra.mxu0 0.0
  %124 = vmatprep.subr.mxu0 0.0
  %125 = vmatpush1.msra.mxu0 0.0
  %126 = vmatprep.subr.mxu0 0.0
  %127 = vmatpush1.msra.mxu0 0.0
  %128 = vmatprep.subr.mxu0 0.0
  %129 = vmatpush1.msra.mxu0 0.0
  %130 = vmatprep.subr.mxu0 0.0
  %131 = vmatpush1.msra.mxu0 0.0
  %132 = vmatprep.subr.mxu0 0.0
  %133 = vmatpush1.msra.mxu0 0.0
  %134 = vmatprep.subr.mxu0 0.0
  %135 = vmatpush1.msra.mxu0 0.0
  %136 = vmatprep.subr.mxu0 0.0
  %137 = vmatpush1.msra.mxu0 0.0
  %138 = vmatprep.subr.mxu0 0.0
  %139 = vmatpush1.msra.mxu0 0.0
  %140 = vmatprep.subr.mxu0 0.0
  %141 = vmatpush1.msra.mxu0 0.0
  %142 = vmatprep.subr.mxu0 0.0
  %143 = vmatpush1.msra.mxu0 0.0
  %144 = vmatprep.subr.mxu0 0.0
  %145 = vmatpush1.msra.mxu0 0.0
  %146 = vmatprep.subr.mxu0 0.0
  %147 = vmatpush1.msra.mxu0 0.0
  %148 = vmatprep.subr.mxu0 0.0
  %149 = vmatpush1.msra.mxu0 0.0
  %150 = vmatprep.subr.mxu0 0.0
  %151 = vmatpush1.msra.mxu0 0.0
  %152 = vmatprep.subr.mxu0 0.0
  %153 = vmatpush1.msra.mxu0 0.0
  %154 = vmatprep.subr.mxu0 0.0
  %155 = vmatpush1.msra.mxu0 0.0
  %156 = vmatprep.subr.mxu0 0.0
  %157 = vmatpush1.msra.mxu0 0.0
  %158 = vmatprep.subr.mxu0 0.0
  %159 = vmatpush1.msra.mxu0 0.0
  %160 = vmatprep.subr.mxu0 0.0
  %161 = vmatpush1.msra.mxu0 0.0
  %162 = vmatprep.subr.mxu0 0.0
  %163 = vmatpush1.msra.mxu0 0.0
  %164 = vmatprep.subr.mxu0 0.0
  %165 = vmatpush1.msra.mxu0 0.0
  %166 = vmatprep.subr.mxu0 0.0
  %167 = vmatpush1.msra.mxu0 0.0
  %168 = vmatprep.subr.mxu0 0.0
  %169 = vmatpush1.msra.mxu0 0.0
  %170 = vmatprep.mubr.f32.mxu0 0.0
  %171 = vmatmul.mubr.f32.gmra.mrb[0].mxu0 %v54
  %v172 = vpop.f32.mrb[0].mxu0
  %v173 = vadd.f32 %v36, %v172
  %v174 = vpop.f32.mrb[0].mxu0
  %v175 = vadd.f32 %v40, %v174
  %176 = vmatprep.mubr.f32.mxu0 0.0
  %177 = vmatmul.mubr.f32.gmra.mrb[0].mxu0 %v57
  %v178 = vpop.f32.mrb[0].mxu0
  %v179 = vadd.f32 %v36, %v178
  %v180 = vpop.f32.mrb[0].mxu0
  %v181 = vadd.f32 %v40, %v180
  %182 = vmatprep.mubr.f32.mxu0 0.0
  %183 = vmatmul.mubr.f32.gmra.mrb[0].mxu0 %v60
  %v184 = vpop.f32.mrb[0].mxu0
  %v185 = vadd.f32 %v36, %v184
  %v186 = vpop.f32.mrb[0].mxu0
  %v187 = vadd.f32 %v40, %v186
  %188 = vmatprep.mubr.f32.mxu0 0.0
  %189 = vmatmul.mubr.f32.gmra.mrb[0].mxu0 %v63
  %v190 = vpop.f32.mrb[0].mxu0
  %v191 = vadd.f32 %v36, %v190
  %v192 = vpop.f32.mrb[0].mxu0
  %v193 = vadd.f32 %v40, %v192
  %194 = vmatprep.mubr.f32.mxu0 0.0
  %195 = vmatmul.mubr.f32.gmra.mrb[0].mxu0 %v66
  %v196 = vpop.f32.mrb[0].mxu0
  %v197 = vadd.f32 %v36, %v196
  %v198 = vpop.f32.mrb[0].mxu0
  %v199 = vadd.f32 %v40, %v198
  %200 = vmatprep.mubr.f32.mxu0 0.0
  %201 = vmatmul.mubr.f32.gmra.mrb[0].mxu0 %v69
  %v202 = vpop.f32.mrb[0].mxu0
  %v203 = vadd.f32 %v36, %v202
  %v204 = vpop.f32.mrb[0].mxu0
  %v205 = vadd.f32 %v40, %v204
  %206 = vmatprep.mubr.f32.mxu0 0.0
  %207 = vmatmul.mubr.f32.gmra.mrb[0].mxu0 %v72
  %v208 = vpop.f32.mrb[0].mxu0
  %v209 = vadd.f32 %v36, %v208
  %v210 = vpop.f32.mrb[0].mxu0
  %v211 = vadd.f32 %v40, %v210
  %212 = vmatprep.mubr.f32.mxu0 0.0
  %213 = vmatmul.mubr.f32.gmra.mrb[0].mxu0 %v75
  %v214 = vpop.f32.mrb[0].mxu0
  %v215 = vadd.f32 %v36, %v214
  %v216 = vpop.f32.mrb[0].mxu0
  %v217 = vadd.f32 %v40, %v216
  %218 = vmatprep.mubr.f32.mxu0 0.0
  %219 = vmatmul.mubr.f32.gmra.mrb[0].mxu0 %v78
  %v220 = vpop.f32.mrb[0].mxu0
  %v221 = vadd.f32 %v36, %v220
  %v222 = vpop.f32.mrb[0].mxu0
  %v223 = vadd.f32 %v40, %v222
  %224 = vmatprep.mubr.f32.mxu0 0.0
  %225 = vmatmul.mubr.f32.gmra.mrb[0].mxu0 %v81
  %v226 = vpop.f32.mrb[0].mxu0
  %v227 = vadd.f32 %v36, %v226
  %v228 = vpop.f32.mrb[0].mxu0
  %v229 = vadd.f32 %v40, %v228
  %230 = vmatprep.mubr.f32.mxu0 0.0
  %231 = vmatmul.mubr.f32.gmra.mrb[0].mxu0 %v84
  %v232 = vpop.f32.mrb[0].mxu0
  %v233 = vadd.f32 %v36, %v232
  %v234 = vpop.f32.mrb[0].mxu0
  %v235 = vadd.f32 %v40, %v234
  %236 = vmatprep.mubr.f32.mxu0 0.0
  %237 = vmatmul.mubr.f32.gmra.mrb[0].mxu0 %v87
  %v238 = vpop.f32.mrb[0].mxu0
  %v239 = vadd.f32 %v36, %v238
  %v240 = vpop.f32.mrb[0].mxu0
  %v241 = vadd.f32 %v40, %v240
  %242 = vmatprep.mubr.f32.mxu0 0.0
  %243 = vmatmul.mubr.f32.gmra.mrb[0].mxu0 %v90
  %v244 = vpop.f32.mrb[0].mxu0
  %v245 = vadd.f32 %v36, %v244
  %v246 = vpop.f32.mrb[0].mxu0
  %v247 = vadd.f32 %v40, %v246
  %248 = vmatprep.mubr.f32.mxu0 0.0
  %249 = vmatmul.mubr.f32.gmra.mrb[0].mxu0 %v93
  %v250 = vpop.f32.mrb[0].mxu0
  %v251 = vadd.f32 %v36, %v250
  %v252 = vpop.f32.mrb[0].mxu0
  %v253 = vadd.f32 %v40, %v252
  %254 = vmatprep.mubr.f32.mxu0 0.0
  %255 = vmatmul.mubr.f32.gmra.mrb[0].mxu0 %v96
  %v256 = vpop.f32.mrb[0].mxu0
  %v257 = vadd.f32 %v36, %v256
  %v258 = vpop.f32.mrb[0].mxu0
  %v259 = vadd.f32 %v40, %v258
  %260 = vmatprep.mubr.f32.mxu0 0.0
  %261 = vmatmul.mubr.f32.gmra.mrb[0].mxu0 %v99
  %v262 = vpop.f32.mrb[0].mxu0
  %v263 = vadd.f32 %v36, %v262
  %v264 = vpop.f32.mrb[0].mxu0
  %v265 = vadd.f32 %v40, %v264
  %266 = vdwg.mxu0
  %v267 = vmax.f32 %v173, 0.0
  %v268 = vmax.f32 %v175, 0.0
  %v269 = vmax.f32 %v179, 0.0
  %v270 = vmax.f32 %v181, 0.0
  %v271 = vmax.f32 %v185, 0.0
  %v272 = vmax.f32 %v187, 0.0
  %v273 = vmax.f32 %v191, 0.0
  %v274 = vmax.f32 %v193, 0.0
  %v275 = vmax.f32 %v197, 0.0
  %v276 = vmax.f32 %v199, 0.0
  %v277 = vmax.f32 %v203, 0.0
  %v278 = vmax.f32 %v205, 0.0
  %v279 = vmax.f32 %v209, 0.0
  %v280 = vmax.f32 %v211, 0.0
  %v281 = vmax.f32 %v215, 0.0
  %v282 = vmax.f32 %v217, 0.0
  %v283 = vmax.f32 %v221, 0.0
  %v284 = vmax.f32 %v223, 0.0
  %v285 = vmax.f32 %v227, 0.0
  %v286 = vmax.f32 %v229, 0.0
  %v287 = vmax.f32 %v233, 0.0
  %v288 = vmax.f32 %v235, 0.0
  %v289 = vmax.f32 %v239, 0.0
  %v290 = vmax.f32 %v241, 0.0
  %v291 = vmax.f32 %v245, 0.0
  %v292 = vmax.f32 %v247, 0.0
  %v293 = vmax.f32 %v251, 0.0
  %v294 = vmax.f32 %v253, 0.0
  %v295 = vmax.f32 %v257, 0.0
  %v296 = vmax.f32 %v259, 0.0
  %v297 = vmax.f32 %v263, 0.0
  %v298 = vmax.f32 %v265, 0.0
  %v299 = vpack.c.bf16 %v269, %v267
  %v300 = vpack.c.bf16 %v270, %v268
  %v301 = vpack.c.bf16 %v273, %v271
  %v302 = vpack.c.bf16 %v274, %v272
  %v303 = vpack.c.bf16 %v277, %v275
  %v304 = vpack.c.bf16 %v278, %v276
  %v305 = vpack.c.bf16 %v281, %v279
  %v306 = vpack.c.bf16 %v282, %v280
  %v307 = vpack.c.bf16 %v285, %v283
  %v308 = vpack.c.bf16 %v286, %v284
  %v309 = vpack.c.bf16 %v289, %v287
  %v310 = vpack.c.bf16 %v290, %v288
  %v311 = vpack.c.bf16 %v293, %v291
  %v312 = vpack.c.bf16 %v294, %v292
  %v313 = vpack.c.bf16 %v297, %v295
  %v314 = vpack.c.bf16 %v298, %v296
  %v331 = vunpack.c.l.b16 %v299
  %v332 = vunpack.c.l.b16 %v300
  %v333 = vunpack.c.h.b16 %v299
  %v334 = vunpack.c.h.b16 %v300
  %v335 = vunpack.c.l.b16 %v301
  %v336 = vunpack.c.l.b16 %v302
  %v337 = vunpack.c.h.b16 %v301
  %v338 = vunpack.c.h.b16 %v302
  %v339 = vunpack.c.l.b16 %v303
  %v340 = vunpack.c.l.b16 %v304
  %v341 = vunpack.c.h.b16 %v303
  %v342 = vunpack.c.h.b16 %v304
  %v343 = vunpack.c.l.b16 %v305
  %v344 = vunpack.c.l.b16 %v306
  %v345 = vunpack.c.h.b16 %v305
  %v346 = vunpack.c.h.b16 %v306
  %v347 = vunpack.c.l.b16 %v307
  %v348 = vunpack.c.l.b16 %v308
  %v349 = vunpack.c.h.b16 %v307
  %v350 = vunpack.c.h.b16 %v308
  %v351 = vunpack.c.l.b16 %v309
  %v352 = vunpack.c.l.b16 %v310
  %v353 = vunpack.c.h.b16 %v309
  %v354 = vunpack.c.h.b16 %v310
  %v355 = vunpack.c.l.b16 %v311
  %v356 = vunpack.c.l.b16 %v312
  %v357 = vunpack.c.h.b16 %v311
  %v358 = vunpack.c.h.b16 %v312
  %v359 = vunpack.c.l.b16 %v313
  %v360 = vunpack.c.l.b16 %v314
  %v361 = vunpack.c.h.b16 %v313
  %v362 = vunpack.c.h.b16 %v314
  %v363 = vpack.c.b16 %v332, %v331
  %v364 = vpack.c.b16 %v334, %v333
  %v365 = vpack.c.b16 %v336, %v335
  %v366 = vpack.c.b16 %v338, %v337
  %v367 = vpack.c.b16 %v340, %v339
  %v368 = vpack.c.b16 %v342, %v341
  %v369 = vpack.c.b16 %v344, %v343
  %v370 = vpack.c.b16 %v346, %v345
  %v371 = vpack.c.b16 %v348, %v347
  %v372 = vpack.c.b16 %v350, %v349
  %v373 = vpack.c.b16 %v352, %v351
  %v374 = vpack.c.b16 %v354, %v353
  %v375 = vpack.c.b16 %v356, %v355
  %v376 = vpack.c.b16 %v358, %v357
  %v377 = vpack.c.b16 %v360, %v359
  %v378 = vpack.c.b16 %v362, %v361
  %395 = vst [vmem:[%s3] sm:$0xff] %v363
  %396 = vst [vmem:[%s3 + $0x8] sm:$0xff] %v364
  %397 = vst [vmem:[%s3 + $0x10] sm:$0xff] %v365
  %398 = vst [vmem:[%s3 + $0x18] sm:$0xff] %v366
  %399 = vst [vmem:[%s3 + $0x20] sm:$0xff] %v367
  %400 = vst [vmem:[%s3 + $0x28] sm:$0xff] %v368
  %401 = vst [vmem:[%s3 + $0x30] sm:$0xff] %v369
  %402 = vst [vmem:[%s3 + $0x38] sm:$0xff] %v370
  %403 = vst [vmem:[%s3 + $0x40] sm:$0xff] %v371
  %404 = vst [vmem:[%s3 + $0x48] sm:$0xff] %v372
  %405 = vst [vmem:[%s3 + $0x50] sm:$0xff] %v373
  %406 = vst [vmem:[%s3 + $0x58] sm:$0xff] %v374
  %407 = vst [vmem:[%s3 + $0x60] sm:$0xff] %v375
  %408 = vst [vmem:[%s3 + $0x68] sm:$0xff] %v376
  %409 = vst [vmem:[%s3 + $0x70] sm:$0xff] %v377
  %410 = vst [vmem:[%s3 + $0x78] sm:$0xff] %v378
  // Predicated region
  $region14: #{_lambda_.2} parent=0 // pred_check
    _
  $region15: #{_lambda_.2} parent=0 // pred_check_branch
    %412 = sbr.rel (0) target = $region17
  $region16: #{_lambda_.2} parent=0 // pred_region
    _
  $region17: #{_lambda_.2} parent=0 // pred_fallthru
    _
  // Predicated region
  $region18: #{_lambda_.2} parent=0 // pred_check
    _
  $region19: #{_lambda_.2} parent=0 // pred_check_branch
    %414 = sbr.rel (0) target = $region21
  $region20: #{_lambda_.2} parent=0 // pred_region
    _
  $region21: #{_lambda_.2} parent=0 // pred_fallthru
    _

// kernel: _lambda_.3
$region0: #{_lambda_.3}
  #allocation0 [shape = 'u32[]', space=smem, size = 0x4, offset = 0x4, fixed_abs, tag = 'smem constant byte address 0x4 - core index']
  #allocation1 [shape = 'u32[144,128]{1,0:T(1,128)}', space=vmem, size = 0x12000, scoped, tag = 'internal scratch']
  #allocation2 [shape = 'f32[64,256]{1,0:T(8,128)}', space=vmem, size = 0x10000, scoped, tag = 'scratch operand']
  %s0 = inlined_call_operand.vmem [shape: bf16[4,64,2], index: 0, kind: input, shape index: {}]
  %s1 = inlined_call_operand.vmem [shape: bf16[2,256], index: 1, kind: input, shape index: {}]
  %s2 = inlined_call_operand.vmem [shape: f32[1,256], index: 2, kind: input, shape index: {}]
  %s3 = inlined_call_operand.vmem [shape: bf16[4,64,256], index: 3, kind: input, shape index: {}]
  %s4 = inlined_call_operand.vmem [shape: bf16[6,256,256], index: 4, kind: input, shape index: {}]
  %s5 = inlined_call_operand.vmem [shape: f32[6,1,256], index: 5, kind: input, shape index: {}]
  %s6 = inlined_call_operand.vmem [shape: bf16[6,256,256], index: 6, kind: input, shape index: {}]
  %s7 = inlined_call_operand.vmem [shape: f32[6,1,256], index: 7, kind: input, shape index: {}]
  %s8 = inlined_call_operand.vmem [shape: bf16[6,256,256], index: 8, kind: input, shape index: {}]
  %s9 = inlined_call_operand.vmem [shape: f32[6,1,256], index: 9, kind: input, shape index: {}]
  %s10 = inlined_call_operand.vmem [shape: bf16[6,256,256], index: 10, kind: input, shape index: {}]
  %s11 = inlined_call_operand.vmem [shape: f32[6,1,256], index: 11, kind: input, shape index: {}]
  %s12 = inlined_call_operand.vmem [shape: bf16[6,256,256], index: 12, kind: input, shape index: {}]
  %s13 = inlined_call_operand.vmem [shape: f32[6,1,256], index: 13, kind: input, shape index: {}, may-alias: {13,15}]
  %s14 = inlined_call_operand.vmem [shape: bf16[6,256,256], index: 14, kind: input, shape index: {}]
  %s15 = inlined_call_operand.vmem [shape: f32[6,1,256], index: 15, kind: input, shape index: {}, may-alias: {13,15}]
  %s16 = inlined_call_operand.vmem [shape: f32[256,2], index: 16, kind: input, shape index: {}]
  %s17 = inlined_call_operand.vmem [shape: f32[1,2], index: 17, kind: input, shape index: {}]
  %s18 = inlined_call_operand.vmem [shape: f32[4,1,2], index: 18, kind: output, shape index: {}]
  %s19 = sld [smem:[#allocation0]]
  $region113: #{_lambda_.3} parent=0
    _
  %s21 = ssub.s32 1, %s19
  %s22 = scalar_select 0, %s21, %s19
  loop: start=0, step=1, limit=26
  $region2: #{_lambda_.3} parent=0 // loop_pre_header
    _
  $region3: #{_lambda_.3} parent=0 // loop_header
    %s24 = sphi 0, %s28
    %p25 = scmp.ge.s32.totalorder %s24, 26
    %s31 = sphi 0, %s43
    %s32 = sphi 0, %s39
    %s33 = sphi 0, %s31
    %s34 = sphi 0, %s32
    %s35 = sphi 0, %s33
    %s36 = sphi 0, %s34
    %s46 = sphi 0, %s48
    %s49 = sphi 0, %s46
    %s50 = sphi 0, %s49
    %s66 = sphi 0, %s50
    %s70 = sphi 0, %s70
    %s72 = sphi 0, %s70
    %s73 = sphi 0, %s72
    %s87 = sphi 0, %s73
    %s91 = sphi 0, %s91
    %s93 = sphi 0, %s91
    %s94 = sphi 0, %s93
    %s108 = sphi 0, %s94
    %s114 = sphi 0, %s116
    %s117 = sphi 0, %s114
    %s118 = sphi 0, %s117
    %s134 = sphi 0, %s118
    %s138 = sphi 0, %s138
    %s140 = sphi 0, %s138
    %s141 = sphi 0, %s140
    %s155 = sphi 0, %s141
    %s159 = sphi 0, %s159
    %s161 = sphi 0, %s159
    %s162 = sphi 0, %s161
    %s176 = sphi 0, %s162
    %s180 = sphi 0, %s180
    %s182 = sphi 0, %s180
    %s183 = sphi 0, %s182
    %s197 = sphi 0, %s183
    %s201 = sphi 0, %s201
    %s203 = sphi 0, %s201
    %s204 = sphi 0, %s203
    %s218 = sphi 0, %s204
    %s222 = sphi 0, %s222
    %s224 = sphi 0, %s222
    %s225 = sphi 0, %s224
    %s239 = sphi 0, %s225
    %s243 = sphi 0, %s243
    %s245 = sphi 0, %s243
    %s246 = sphi 0, %s245
    %s260 = sphi 0, %s246
    %s264 = sphi 0, %s264
    %s266 = sphi 0, %s264
    %s267 = sphi 0, %s266
    %s281 = sphi 0, %s267
    %s285 = sphi 0, %s285
    %s287 = sphi 0, %s285
    %s288 = sphi 0, %s287
    %s302 = sphi 0, %s288
    %s306 = sphi 0, %s306
    %s308 = sphi 0, %s306
    %s309 = sphi 0, %s308
    %s323 = sphi 0, %s309
    %s327 = sphi 0, %s327
    %s329 = sphi 0, %s327
    %s330 = sphi 0, %s329
    %s344 = sphi 0, %s330
    %s348 = sphi 0, %s348
    %s350 = sphi 0, %s348
    %s351 = sphi 0, %s350
    %s365 = sphi 0, %s351
    %s369 = sphi 0, %s369
    %s371 = sphi 0, %s369
    %s372 = sphi 0, %s371
    %s386 = sphi 0, %s372
    %s390 = sphi 0, %s390
    %s392 = sphi 0, %s390
    %s393 = sphi 0, %s392
    %s407 = sphi 0, %s393
    %s411 = sphi 0, %s411
    %s413 = sphi 0, %s411
    %s414 = sphi 0, %s413
    %s428 = sphi 0, %s414
    %s434 = sphi 0, %s436
    %s437 = sphi 0, %s434
    %s438 = sphi 0, %s437
    %s454 = sphi 0, %s438
  $region4: #{_lambda_.3} parent=0 // loop_header_branch
    %27 = sbr.rel (%p25) target = $region8
  $region5: #{_lambda_.3} parent=0 // loop_body
    %s29 = ssub.s32 %s24, 1
    %s30 = ssub.s32 %s24, 2
    %s37 = sadd.s32 1, %s32
    %p38 = scmp.ge.s32.totalorder %s37, 6
    %s39 = scalar_select %p38, 0, %s37
    %s40 = sadd.s32 1, %s31
    %s41 = scalar_select %p38, %s40, %s31
    %p42 = scmp.ge.s32.totalorder %s41, 4
    %s43 = scalar_select %p42, 0, %s41
    %s44 = ssub.s32 %s31, %s43
    %p45 = scmp.eq.s32.totalorder %s44, 0
    %s47 = sadd.s32 %s46, 1
    %s48 = scalar_select %p45, %s46, %s47
    %p51 = pneg %p45
    %p52 = scmp.eq.s32.totalorder %s24, 23
    %p53 = por %p51, %p52
    %p54 = scmp.ne.s32.totalorder %s46, %s49
    %p55 = scmp.eq.s32.totalorder %s24, 0
    %p56 = por %p54, %p55
    %p57 = scmp.ne.s32.totalorder %s46, %s49
    %p58 = scmp.eq.s32.totalorder %s29, 23
    %p59 = por %p57, %p58
    %p60 = scmp.ne.s32.totalorder %s49, %s50
    %p61 = scmp.eq.s32.totalorder %s29, 0
    %p62 = por %p60, %p61
    %p63 = scmp.ne.s32.totalorder %s49, %s50
    %p64 = scmp.eq.s32.totalorder %s30, 23
    %p65 = por %p63, %p64
    %p67 = scmp.ne.s32.totalorder %s50, %s66
    %p68 = scmp.eq.s32.totalorder %s30, 0
    %p69 = por %p67, %p68
    %s71 = sadd.s32 %s70, 1
    %p74 = scmp.eq.s32.totalorder %s24, 23
    %p75 = scmp.ne.s32.totalorder %s70, %s72
    %p76 = scmp.eq.s32.totalorder %s24, 0
    %p77 = por %p75, %p76
    %p78 = scmp.ne.s32.totalorder %s70, %s72
    %p79 = scmp.eq.s32.totalorder %s29, 23
    %p80 = por %p78, %p79
    %p81 = scmp.ne.s32.totalorder %s72, %s73
    %p82 = scmp.eq.s32.totalorder %s29, 0
    %p83 = por %p81, %p82
    %p84 = scmp.ne.s32.totalorder %s72, %s73
    %p85 = scmp.eq.s32.totalorder %s30, 23
    %p86 = por %p84, %p85
    %p88 = scmp.ne.s32.totalorder %s73, %s87
    %p89 = scmp.eq.s32.totalorder %s30, 0
    %p90 = por %p88, %p89
    %s92 = sadd.s32 %s91, 1
    %p95 = scmp.eq.s32.totalorder %s24, 23
    %p96 = scmp.ne.s32.totalorder %s91, %s93
    %p97 = scmp.eq.s32.totalorder %s24, 0
    %p98 = por %p96, %p97
    %p99 = scmp.ne.s32.totalorder %s91, %s93
    %p100 = scmp.eq.s32.totalorder %s29, 23
    %p101 = por %p99, %p100
    %p102 = scmp.ne.s32.totalorder %s93, %s94
    %p103 = scmp.eq.s32.totalorder %s29, 0
    %p104 = por %p102, %p103
    %p105 = scmp.ne.s32.totalorder %s93, %s94
    %p106 = scmp.eq.s32.totalorder %s30, 23
    %p107 = por %p105, %p106
    %p109 = scmp.ne.s32.totalorder %s94, %s108
    %p110 = scmp.eq.s32.totalorder %s30, 0
    %p111 = por %p109, %p110
    %s112 = ssub.s32 %s31, %s43
    %p113 = scmp.eq.s32.totalorder %s112, 0
    %s115 = sadd.s32 %s114, 1
    %s116 = scalar_select %p113, %s114, %s115
    %p119 = pneg %p113
    %p120 = scmp.eq.s32.totalorder %s24, 23
    %p121 = por %p119, %p120
    %p122 = scmp.ne.s32.totalorder %s114, %s117
    %p123 = scmp.eq.s32.totalorder %s24, 0
    %p124 = por %p122, %p123
    %p125 = scmp.ne.s32.totalorder %s114, %s117
    %p126 = scmp.eq.s32.totalorder %s29, 23
    %p127 = por %p125, %p126
    %p128 = scmp.ne.s32.totalorder %s117, %s118
    %p129 = scmp.eq.s32.totalorder %s29, 0
    %p130 = por %p128, %p129
    %p131 = scmp.ne.s32.totalorder %s117, %s118
    %p132 = scmp.eq.s32.totalorder %s30, 23
    %p133 = por %p131, %p132
    %p135 = scmp.ne.s32.totalorder %s118, %s134
    %p136 = scmp.eq.s32.totalorder %s30, 0
    %p137 = por %p135, %p136
    %s139 = sadd.s32 %s138, 1
    %p142 = scmp.eq.s32.totalorder %s24, 23
    %p143 = scmp.ne.s32.totalorder %s138, %s140
    %p144 = scmp.eq.s32.totalorder %s24, 0
    %p145 = por %p143, %p144
    %p146 = scmp.ne.s32.totalorder %s138, %s140
    %p147 = scmp.eq.s32.totalorder %s29, 23
    %p148 = por %p146, %p147
    %p149 = scmp.ne.s32.totalorder %s140, %s141
    %p150 = scmp.eq.s32.totalorder %s29, 0
    %p151 = por %p149, %p150
    %p152 = scmp.ne.s32.totalorder %s140, %s141
    %p153 = scmp.eq.s32.totalorder %s30, 23
    %p154 = por %p152, %p153
    %p156 = scmp.ne.s32.totalorder %s141, %s155
    %p157 = scmp.eq.s32.totalorder %s30, 0
    %p158 = por %p156, %p157
    %s160 = sadd.s32 %s159, 1
    %p163 = scmp.eq.s32.totalorder %s24, 23
    %p164 = scmp.ne.s32.totalorder %s159, %s161
    %p165 = scmp.eq.s32.totalorder %s24, 0
    %p166 = por %p164, %p165
    %p167 = scmp.ne.s32.totalorder %s159, %s161
    %p168 = scmp.eq.s32.totalorder %s29, 23
    %p169 = por %p167, %p168
    %p170 = scmp.ne.s32.totalorder %s161, %s162
    %p171 = scmp.eq.s32.totalorder %s29, 0
    %p172 = por %p170, %p171
    %p173 = scmp.ne.s32.totalorder %s161, %s162
    %p174 = scmp.eq.s32.totalorder %s30, 23
    %p175 = por %p173, %p174
    %p177 = scmp.ne.s32.totalorder %s162, %s176
    %p178 = scmp.eq.s32.totalorder %s30, 0
    %p179 = por %p177, %p178
    %s181 = sadd.s32 %s180, 1
    %p184 = scmp.eq.s32.totalorder %s24, 23
    %p185 = scmp.ne.s32.totalorder %s180, %s182
    %p186 = scmp.eq.s32.totalorder %s24, 0
    %p187 = por %p185, %p186
    %p188 = scmp.ne.s32.totalorder %s180, %s182
    %p189 = scmp.eq.s32.totalorder %s29, 23
    %p190 = por %p188, %p189
    %p191 = scmp.ne.s32.totalorder %s182, %s183
    %p192 = scmp.eq.s32.totalorder %s29, 0
    %p193 = por %p191, %p192
    %p194 = scmp.ne.s32.totalorder %s182, %s183
    %p195 = scmp.eq.s32.totalorder %s30, 23
    %p196 = por %p194, %p195
    %p198 = scmp.ne.s32.totalorder %s183, %s197
    %p199 = scmp.eq.s32.totalorder %s30, 0
    %p200 = por %p198, %p199
    %s202 = sadd.s32 %s201, 1
    %p205 = scmp.eq.s32.totalorder %s24, 23
    %p206 = scmp.ne.s32.totalorder %s201, %s203
    %p207 = scmp.eq.s32.totalorder %s24, 0
    %p208 = por %p206, %p207
    %p209 = scmp.ne.s32.totalorder %s201, %s203
    %p210 = scmp.eq.s32.totalorder %s29, 23
    %p211 = por %p209, %p210
    %p212 = scmp.ne.s32.totalorder %s203, %s204
    %p213 = scmp.eq.s32.totalorder %s29, 0
    %p214 = por %p212, %p213
    %p215 = scmp.ne.s32.totalorder %s203, %s204
    %p216 = scmp.eq.s32.totalorder %s30, 23
    %p217 = por %p215, %p216
    %p219 = scmp.ne.s32.totalorder %s204, %s218
    %p220 = scmp.eq.s32.totalorder %s30, 0
    %p221 = por %p219, %p220
    %s223 = sadd.s32 %s222, 1
    %p226 = scmp.eq.s32.totalorder %s24, 23
    %p227 = scmp.ne.s32.totalorder %s222, %s224
    %p228 = scmp.eq.s32.totalorder %s24, 0
    %p229 = por %p227, %p228
    %p230 = scmp.ne.s32.totalorder %s222, %s224
    %p231 = scmp.eq.s32.totalorder %s29, 23
    %p232 = por %p230, %p231
    %p233 = scmp.ne.s32.totalorder %s224, %s225
    %p234 = scmp.eq.s32.totalorder %s29, 0
    %p235 = por %p233, %p234
    %p236 = scmp.ne.s32.totalorder %s224, %s225
    %p237 = scmp.eq.s32.totalorder %s30, 23
    %p238 = por %p236, %p237
    %p240 = scmp.ne.s32.totalorder %s225, %s239
    %p241 = scmp.eq.s32.totalorder %s30, 0
    %p242 = por %p240, %p241
    %s244 = sadd.s32 %s243, 1
    %p247 = scmp.eq.s32.totalorder %s24, 23
    %p248 = scmp.ne.s32.totalorder %s243, %s245
    %p249 = scmp.eq.s32.totalorder %s24, 0
    %p250 = por %p248, %p249
    %p251 = scmp.ne.s32.totalorder %s243, %s245
    %p252 = scmp.eq.s32.totalorder %s29, 23
    %p253 = por %p251, %p252
    %p254 = scmp.ne.s32.totalorder %s245, %s246
    %p255 = scmp.eq.s32.totalorder %s29, 0
    %p256 = por %p254, %p255
    %p257 = scmp.ne.s32.totalorder %s245, %s246
    %p258 = scmp.eq.s32.totalorder %s30, 23
    %p259 = por %p257, %p258
    %p261 = scmp.ne.s32.totalorder %s246, %s260
    %p262 = scmp.eq.s32.totalorder %s30, 0
    %p263 = por %p261, %p262
    %s265 = sadd.s32 %s264, 1
    %p268 = scmp.eq.s32.totalorder %s24, 23
    %p269 = scmp.ne.s32.totalorder %s264, %s266
    %p270 = scmp.eq.s32.totalorder %s24, 0
    %p271 = por %p269, %p270
    %p272 = scmp.ne.s32.totalorder %s264, %s266
    %p273 = scmp.eq.s32.totalorder %s29, 23
    %p274 = por %p272, %p273
    %p275 = scmp.ne.s32.totalorder %s266, %s267
    %p276 = scmp.eq.s32.totalorder %s29, 0
    %p277 = por %p275, %p276
    %p278 = scmp.ne.s32.totalorder %s266, %s267
    %p279 = scmp.eq.s32.totalorder %s30, 23
    %p280 = por %p278, %p279
    %p282 = scmp.ne.s32.totalorder %s267, %s281
    %p283 = scmp.eq.s32.totalorder %s30, 0
    %p284 = por %p282, %p283
    %s286 = sadd.s32 %s285, 1
    %p289 = scmp.eq.s32.totalorder %s24, 23
    %p290 = scmp.ne.s32.totalorder %s285, %s287
    %p291 = scmp.eq.s32.totalorder %s24, 0
    %p292 = por %p290, %p291
    %p293 = scmp.ne.s32.totalorder %s285, %s287
    %p294 = scmp.eq.s32.totalorder %s29, 23
    %p295 = por %p293, %p294
    %p296 = scmp.ne.s32.totalorder %s287, %s288
    %p297 = scmp.eq.s32.totalorder %s29, 0
    %p298 = por %p296, %p297
    %p299 = scmp.ne.s32.totalorder %s287, %s288
    %p300 = scmp.eq.s32.totalorder %s30, 23
    %p301 = por %p299, %p300
    %p303 = scmp.ne.s32.totalorder %s288, %s302
    %p304 = scmp.eq.s32.totalorder %s30, 0
    %p305 = por %p303, %p304
    %s307 = sadd.s32 %s306, 1
    %p310 = scmp.eq.s32.totalorder %s24, 23
    %p311 = scmp.ne.s32.totalorder %s306, %s308
    %p312 = scmp.eq.s32.totalorder %s24, 0
    %p313 = por %p311, %p312
    %p314 = scmp.ne.s32.totalorder %s306, %s308
    %p315 = scmp.eq.s32.totalorder %s29, 23
    %p316 = por %p314, %p315
    %p317 = scmp.ne.s32.totalorder %s308, %s309
    %p318 = scmp.eq.s32.totalorder %s29, 0
    %p319 = por %p317, %p318
    %p320 = scmp.ne.s32.totalorder %s308, %s309
    %p321 = scmp.eq.s32.totalorder %s30, 23
    %p322 = por %p320, %p321
    %p324 = scmp.ne.s32.totalorder %s309, %s323
    %p325 = scmp.eq.s32.totalorder %s30, 0
    %p326 = por %p324, %p325
    %s328 = sadd.s32 %s327, 1
    %p331 = scmp.eq.s32.totalorder %s24, 23
    %p332 = scmp.ne.s32.totalorder %s327, %s329
    %p333 = scmp.eq.s32.totalorder %s24, 0
    %p334 = por %p332, %p333
    %p335 = scmp.ne.s32.totalorder %s327, %s329
    %p336 = scmp.eq.s32.totalorder %s29, 23
    %p337 = por %p335, %p336
    %p338 = scmp.ne.s32.totalorder %s329, %s330
    %p339 = scmp.eq.s32.totalorder %s29, 0
    %p340 = por %p338, %p339
    %p341 = scmp.ne.s32.totalorder %s329, %s330
    %p342 = scmp.eq.s32.totalorder %s30, 23
    %p343 = por %p341, %p342
    %p345 = scmp.ne.s32.totalorder %s330, %s344
    %p346 = scmp.eq.s32.totalorder %s30, 0
    %p347 = por %p345, %p346
    %s349 = sadd.s32 %s348, 1
    %p352 = scmp.eq.s32.totalorder %s24, 23
    %p353 = scmp.ne.s32.totalorder %s348, %s350
    %p354 = scmp.eq.s32.totalorder %s24, 0
    %p355 = por %p353, %p354
    %p356 = scmp.ne.s32.totalorder %s348, %s350
    %p357 = scmp.eq.s32.totalorder %s29, 23
    %p358 = por %p356, %p357
    %p359 = scmp.ne.s32.totalorder %s350, %s351
    %p360 = scmp.eq.s32.totalorder %s29, 0
    %p361 = por %p359, %p360
    %p362 = scmp.ne.s32.totalorder %s350, %s351
    %p363 = scmp.eq.s32.totalorder %s30, 23
    %p364 = por %p362, %p363
    %p366 = scmp.ne.s32.totalorder %s351, %s365
    %p367 = scmp.eq.s32.totalorder %s30, 0
    %p368 = por %p366, %p367
    %s370 = sadd.s32 %s369, 1
    %p373 = scmp.eq.s32.totalorder %s24, 23
    %p374 = scmp.ne.s32.totalorder %s369, %s371
    %p375 = scmp.eq.s32.totalorder %s24, 0
    %p376 = por %p374, %p375
    %p377 = scmp.ne.s32.totalorder %s369, %s371
    %p378 = scmp.eq.s32.totalorder %s29, 23
    %p379 = por %p377, %p378
    %p380 = scmp.ne.s32.totalorder %s371, %s372
    %p381 = scmp.eq.s32.totalorder %s29, 0
    %p382 = por %p380, %p381
    %p383 = scmp.ne.s32.totalorder %s371, %s372
    %p384 = scmp.eq.s32.totalorder %s30, 23
    %p385 = por %p383, %p384
    %p387 = scmp.ne.s32.totalorder %s372, %s386
    %p388 = scmp.eq.s32.totalorder %s30, 0
    %p389 = por %p387, %p388
    %s391 = sadd.s32 %s390, 1
    %p394 = scmp.eq.s32.totalorder %s24, 23
    %p395 = scmp.ne.s32.totalorder %s390, %s392
    %p396 = scmp.eq.s32.totalorder %s24, 0
    %p397 = por %p395, %p396
    %p398 = scmp.ne.s32.totalorder %s390, %s392
    %p399 = scmp.eq.s32.totalorder %s29, 23
    %p400 = por %p398, %p399
    %p401 = scmp.ne.s32.totalorder %s392, %s393
    %p402 = scmp.eq.s32.totalorder %s29, 0
    %p403 = por %p401, %p402
    %p404 = scmp.ne.s32.totalorder %s392, %s393
    %p405 = scmp.eq.s32.totalorder %s30, 23
    %p406 = por %p404, %p405
    %p408 = scmp.ne.s32.totalorder %s393, %s407
    %p409 = scmp.eq.s32.totalorder %s30, 0
    %p410 = por %p408, %p409
    %s412 = sadd.s32 %s411, 1
    %p415 = scmp.eq.s32.totalorder %s24, 23
    %p416 = scmp.ne.s32.totalorder %s411, %s413
    %p417 = scmp.eq.s32.totalorder %s24, 0
    %p418 = por %p416, %p417
    %p419 = scmp.ne.s32.totalorder %s411, %s413
    %p420 = scmp.eq.s32.totalorder %s29, 23
    %p421 = por %p419, %p420
    %p422 = scmp.ne.s32.totalorder %s413, %s414
    %p423 = scmp.eq.s32.totalorder %s29, 0
    %p424 = por %p422, %p423
    %p425 = scmp.ne.s32.totalorder %s413, %s414
    %p426 = scmp.eq.s32.totalorder %s30, 23
    %p427 = por %p425, %p426
    %p429 = scmp.ne.s32.totalorder %s414, %s428
    %p430 = scmp.eq.s32.totalorder %s30, 0
    %p431 = por %p429, %p430
    %s432 = ssub.s32 %s31, %s43
    %p433 = scmp.eq.s32.totalorder %s432, 0
    %s435 = sadd.s32 %s434, 1
    %s436 = scalar_select %p433, %s434, %s435
    %p439 = pneg %p433
    %p440 = scmp.eq.s32.totalorder %s24, 23
    %p441 = por %p439, %p440
    %p442 = scmp.ne.s32.totalorder %s434, %s437
    %p443 = scmp.eq.s32.totalorder %s24, 0
    %p444 = por %p442, %p443
    %p445 = scmp.ne.s32.totalorder %s434, %s437
    %p446 = scmp.eq.s32.totalorder %s29, 23
    %p447 = por %p445, %p446
    %p448 = scmp.ne.s32.totalorder %s437, %s438
    %p449 = scmp.eq.s32.totalorder %s29, 0
    %p450 = por %p448, %p449
    %p451 = scmp.ne.s32.totalorder %s437, %s438
    %p452 = scmp.eq.s32.totalorder %s30, 23
    %p453 = por %p451, %p452
    %p455 = scmp.ne.s32.totalorder %s438, %s454
    %p456 = scmp.eq.s32.totalorder %s30, 0
    %p457 = por %p455, %p456
    %p458 = scmp.le.s32.totalorder 1, %s24
    %p459 = scmp.lt.s32.totalorder %s24, 25
    %p460 = pnand %p458, %p459
    %p461 = pneg %p460
    // Predicated region
    $region9: #{_lambda_.3} parent=5 // pred_check
      _
    $region10: #{_lambda_.3} parent=5 // pred_check_branch
      %463 = sbr.rel (%p460) target = $region12
    $region11: #{_lambda_.3} parent=5 // pred_region
      %s464 = ssub.s32 %s24, 1
      // Predicated region
      $region13: #{_lambda_.3} parent=11 // pred_check
        %p465 = pneg %p83
      $region14: #{_lambda_.3} parent=11 // pred_check_branch
        %467 = sbr.rel (%p465) target = $region16
      $region15: #{_lambda_.3} parent=11 // pred_region
        _
      $region16: #{_lambda_.3} parent=11 // pred_fallthru
        _
      // Predicated region
      $region17: #{_lambda_.3} parent=11 // pred_check
        %p468 = pneg %p104
      $region18: #{_lambda_.3} parent=11 // pred_check_branch
        %470 = sbr.rel (%p468) target = $region20
      $region19: #{_lambda_.3} parent=11 // pred_region
        _
      $region20: #{_lambda_.3} parent=11 // pred_fallthru
        _
      // Predicated region
      $region21: #{_lambda_.3} parent=11 // pred_check
        %p471 = pneg %p151
      $region22: #{_lambda_.3} parent=11 // pred_check_branch
        %473 = sbr.rel (%p471) target = $region24
      $region23: #{_lambda_.3} parent=11 // pred_region
        _
      $region24: #{_lambda_.3} parent=11 // pred_fallthru
        _
      // Predicated region
      $region25: #{_lambda_.3} parent=11 // pred_check
        %p474 = pneg %p172
      $region26: #{_lambda_.3} parent=11 // pred_check_branch
        %476 = sbr.rel (%p474) target = $region28
      $region27: #{_lambda_.3} parent=11 // pred_region
        _
      $region28: #{_lambda_.3} parent=11 // pred_fallthru
        _
      // Predicated region
      $region29: #{_lambda_.3} parent=11 // pred_check
        %p477 = pneg %p193
      $region30: #{_lambda_.3} parent=11 // pred_check_branch
        %479 = sbr.rel (%p477) target = $region32
      $region31: #{_lambda_.3} parent=11 // pred_region
        _
      $region32: #{_lambda_.3} parent=11 // pred_fallthru
        _
      // Predicated region
      $region33: #{_lambda_.3} parent=11 // pred_check
        %p480 = pneg %p214
      $region34: #{_lambda_.3} parent=11 // pred_check_branch
        %482 = sbr.rel (%p480) target = $region36
      $region35: #{_lambda_.3} parent=11 // pred_region
        _
      $region36: #{_lambda_.3} parent=11 // pred_fallthru
        _
      // Predicated region
      $region37: #{_lambda_.3} parent=11 // pred_check
        %p483 = pneg %p235
      $region38: #{_lambda_.3} parent=11 // pred_check_branch
        %485 = sbr.rel (%p483) target = $region40
      $region39: #{_lambda_.3} parent=11 // pred_region
        _
      $region40: #{_lambda_.3} parent=11 // pred_fallthru
        _
      // Predicated region
      $region41: #{_lambda_.3} parent=11 // pred_check
        %p486 = pneg %p256
      $region42: #{_lambda_.3} parent=11 // pred_check_branch
        %488 = sbr.rel (%p486) target = $region44
      $region43: #{_lambda_.3} parent=11 // pred_region
        _
      $region44: #{_lambda_.3} parent=11 // pred_fallthru
        _
      // Predicated region
      $region45: #{_lambda_.3} parent=11 // pred_check
        %p489 = pneg %p277
      $region46: #{_lambda_.3} parent=11 // pred_check_branch
        %491 = sbr.rel (%p489) target = $region48
      $region47: #{_lambda_.3} parent=11 // pred_region
        _
      $region48: #{_lambda_.3} parent=11 // pred_fallthru
        _
      // Predicated region
      $region49: #{_lambda_.3} parent=11 // pred_check
        %p492 = pneg %p298
      $region50: #{_lambda_.3} parent=11 // pred_check_branch
        %494 = sbr.rel (%p492) target = $region52
      $region51: #{_lambda_.3} parent=11 // pred_region
        _
      $region52: #{_lambda_.3} parent=11 // pred_fallthru
        _
      // Predicated region
      $region53: #{_lambda_.3} parent=11 // pred_check
        %p495 = pneg %p319
      $region54: #{_lambda_.3} parent=11 // pred_check_branch
        %497 = sbr.rel (%p495) target = $region56
      $region55: #{_lambda_.3} parent=11 // pred_region
        _
      $region56: #{_lambda_.3} parent=11 // pred_fallthru
        _
      // Predicated region
      $region57: #{_lambda_.3} parent=11 // pred_check
        %p498 = pneg %p340
      $region58: #{_lambda_.3} parent=11 // pred_check_branch
        %500 = sbr.rel (%p498) target = $region60
      $region59: #{_lambda_.3} parent=11 // pred_region
        _
      $region60: #{_lambda_.3} parent=11 // pred_fallthru
        _
      // Predicated region
      $region61: #{_lambda_.3} parent=11 // pred_check
        %p501 = pneg %p361
      $region62: #{_lambda_.3} parent=11 // pred_check_branch
        %503 = sbr.rel (%p501) target = $region64
      $region63: #{_lambda_.3} parent=11 // pred_region
        _
      $region64: #{_lambda_.3} parent=11 // pred_fallthru
        _
      // Predicated region
      $region65: #{_lambda_.3} parent=11 // pred_check
        %p504 = pneg %p382
      $region66: #{_lambda_.3} parent=11 // pred_check_branch
        %506 = sbr.rel (%p504) target = $region68
      $region67: #{_lambda_.3} parent=11 // pred_region
        _
      $region68: #{_lambda_.3} parent=11 // pred_fallthru
        _
      // Predicated region
      $region69: #{_lambda_.3} parent=11 // pred_check
        %p507 = pneg %p403
      $region70: #{_lambda_.3} parent=11 // pred_check_branch
        %509 = sbr.rel (%p507) target = $region72
      $region71: #{_lambda_.3} parent=11 // pred_region
        _
      $region72: #{_lambda_.3} parent=11 // pred_fallthru
        _
      // Predicated region
      $region73: #{_lambda_.3} parent=11 // pred_check
        %p510 = pneg %p424
      $region74: #{_lambda_.3} parent=11 // pred_check_branch
        %512 = sbr.rel (%p510) target = $region76
      $region75: #{_lambda_.3} parent=11 // pred_region
        _
      $region76: #{_lambda_.3} parent=11 // pred_fallthru
        _
    $region12: #{_lambda_.3} parent=5 // pred_fallthru
      _
    %p513 = scmp.lt.s32.totalorder %s24, 24
    // Predicated region
    $region77: #{_lambda_.3} parent=5 // pred_check
      %p514 = pneg %p513
    $region78: #{_lambda_.3} parent=5 // pred_check_branch
      %516 = sbr.rel (%p514) target = $region80
    $region79: #{_lambda_.3} parent=5 // pred_region
      // Predicated region
      $region81: #{_lambda_.3} parent=79 // pred_check
        %p517 = pneg %p56
      $region82: #{_lambda_.3} parent=79 // pred_check_branch
        %519 = sbr.rel (%p517) target = $region84
      $region83: #{_lambda_.3} parent=79 // pred_region
        %p520 = scmp.lt.s32.totalorder %s31, 3
        %s521 = scalar_select %p520, %s31, 3
        %s522 = smul.addr %s521, 8
        %s523 = smul.addr %s522, 4
        %s524 = scalar_lea.vmem %s0, %s523
      $region84: #{_lambda_.3} parent=79 // pred_fallthru
        _
      // Predicated region
      $region85: #{_lambda_.3} parent=79 // pred_check
        %p525 = pneg %p124
      $region86: #{_lambda_.3} parent=79 // pred_check_branch
        %527 = sbr.rel (%p525) target = $region88
      $region87: #{_lambda_.3} parent=79 // pred_region
        %p528 = scmp.lt.s32.totalorder %s31, 3
        %s529 = scalar_select %p528, %s31, 3
        %s530 = smul.addr %s529, 16
        %s531 = smul.addr %s530, 4
        %s532 = scalar_lea.vmem %s3, %s531
      $region88: #{_lambda_.3} parent=79 // pred_fallthru
        _
    $region80: #{_lambda_.3} parent=5 // pred_fallthru
      _
    %p533 = scmp.le.s32.totalorder 1, %s24
    %p534 = scmp.lt.s32.totalorder %s24, 25
    %p535 = pnand %p533, %p534
    %p536 = pneg %p535
    // Predicated region
    $region89: #{_lambda_.3} parent=5 // pred_check
      _
    $region90: #{_lambda_.3} parent=5 // pred_check_branch
      %538 = sbr.rel (%p535) target = $region92
    $region91: #{_lambda_.3} parent=5 // pred_region
      %s539 = ssub.s32 %s24, 1
      %p540 = scmp.lt.s32.totalorder %s33, 3
      %s541 = scalar_select %p540, %s33, 3
      %s542 = smul.addr %s541, 8
      %s543 = smul.addr %s542, 4
      %s544 = scalar_lea.vmem %s0, %s543
      %p545 = pneg %p62
      %p546 = pneg %p59
      %p547 = pneg %p83
      %p548 = pneg %p80
      %p549 = pneg %p104
      %p550 = pneg %p101
      %p551 = scmp.lt.s32.totalorder %s33, 3
      %s552 = scalar_select %p551, %s33, 3
      %s553 = smul.addr %s552, 16
      %s554 = smul.addr %s553, 4
      %s555 = scalar_lea.vmem %s3, %s554
      %p556 = pneg %p130
      %p557 = pneg %p127
      %p558 = pneg %p151
      %p559 = pneg %p148
      %p560 = pneg %p172
      %p561 = pneg %p169
      %p562 = pneg %p193
      %p563 = pneg %p190
      %p564 = pneg %p214
      %p565 = pneg %p211
      %p566 = pneg %p235
      %p567 = pneg %p232
      %p568 = pneg %p256
      %p569 = pneg %p253
      %p570 = pneg %p277
      %p571 = pneg %p274
      %p572 = pneg %p298
      %p573 = pneg %p295
      %p574 = pneg %p319
      %p575 = pneg %p316
      %p576 = pneg %p340
      %p577 = pneg %p337
      %p578 = pneg %p361
      %p579 = pneg %p358
      %p580 = pneg %p382
      %p581 = pneg %p379
      %p582 = pneg %p403
      %p583 = pneg %p400
      %p584 = pneg %p424
      %p585 = pneg %p421
      %p586 = pneg %p450
      %p587 = pneg %p447
      %p588 = scmp.lt.s32.totalorder %s33, 3
      %s589 = scalar_select %p588, %s33, 3
      %s590 = scalar_lea.vmem %s18, %s589
      %p591 = scmp.lt.s32.totalorder %s33, 3
      %s592 = scalar_select %p591, %s33, 3
      %s593 = smul.addr %s592, 8
      %s594 = smul.addr %s593, 4
      %s595 = scalar_lea.vmem %s0, %s594
      %p596 = scmp.lt.s32.totalorder %s33, 3
      %s597 = scalar_select %p596, %s33, 3
      %s598 = smul.addr %s597, 16
      %s599 = smul.addr %s598, 4
      %s600 = scalar_lea.vmem %s3, %s599
      %p601 = scmp.lt.s32.totalorder %s33, 3
      %s602 = scalar_select %p601, %s33, 3
      %s603 = scalar_lea.vmem %s18, %s602
      %p605 = scmp.eq.s32.totalorder %s34, 0
      // Predicated region
      $region93: #{_lambda_.3} parent=91 // pred_check
        %p606 = pneg %p605
      $region94: #{_lambda_.3} parent=91 // pred_check_branch
        %608 = sbr.rel (%p606) target = $region96
      $region95: #{_lambda_.3} parent=91 // pred_region
        %v609 = vld [vmem:[%s595] sm:$0xf]
        %v610 = vld [vmem:[%s595 + $0x4] sm:$0xf]
        %v611 = vld [vmem:[%s595 + $0x8] sm:$0xf]
        %v612 = vld [vmem:[%s595 + $0xc] sm:$0xf]
        %v613 = vld [vmem:[%s595 + $0x10] sm:$0xf]
        %v614 = vld [vmem:[%s595 + $0x14] sm:$0xf]
        %v615 = vld [vmem:[%s595 + $0x18] sm:$0xf]
        %v616 = vld [vmem:[%s595 + $0x1c] sm:$0xf]
        %v617 = vld [vmem:[%s1] sm:$0x3]
        %v618 = vld [vmem:[%s2] sm:$0x3]
        %v620 = vlaneseq
        %v621 = vshrl.u32 %v620, 7
        %v622 = vsub.s32 0, %v621
        %v623 = vrot.slane %v618, %v622
        %v624 = vlaneseq
        %v625 = vshrl.u32 %v624, 7
        %v626 = vsub.s32 1, %v625
        %v627 = vrot.slane %v618, %v626
        %v638 = vunpack.c.l.b16 %v609
        %v639 = vunpack.c.l.b16 %v610
        %v640 = vunpack.c.l.b16 %v611
        %v641 = vunpack.c.l.b16 %v612
        %v642 = vunpack.c.l.b16 %v613
        %v643 = vunpack.c.l.b16 %v614
        %v644 = vunpack.c.l.b16 %v615
        %v645 = vunpack.c.l.b16 %v616
        %v646 = vpack.c.b16 %v639, %v638
        %v647 = vpack.c.b16 %v641, %v640
        %v648 = vpack.c.b16 %v643, %v642
        %v649 = vpack.c.b16 %v645, %v644
        %v652 = vunpack.c.l.s4 1966171168
        %v653 = vunpack.c.0.s8 %v652
        %v654 = vlaneseq
        %v655 = vshrl.u32 %v654, 7
        %v656 = vsub.s32 %v653, %v655
        %v657 = vrot.slane %v617, %v656
        %v658 = vcombine.high %v657, %v657
        %v660 = vunpack.c.l.s4 1966171168
        %v661 = vunpack.c.0.s8 %v660
        %v662 = vlaneseq
        %v663 = vshrl.u32 %v662, 7
        %v664 = vsub.s32 %v661, %v663
        %v665 = vrot.slane %v657, %v664
        %v667 = vunpack.c.l.s4 1966171168
        %v668 = vunpack.c.0.s8 %v667
        %v669 = vlaneseq
        %v670 = vshrl.u32 %v669, 7
        %v671 = vsub.s32 %v668, %v670
        %v672 = vrot.slane %v658, %v671
        %vm673 = vcmask 15360
        %v675 = vsel %vm673, %v646, 0
        %v678 = vsel %vm673, %v647, 0
        %v681 = vsel %vm673, %v648, 0
        %v684 = vsel %vm673, %v649, 0
        %vm686 = vcmask 1040384
        %v688 = vsel %vm686, %v665, 0
        %v691 = vsel %vm686, %v672, 0
        %693 = vmatprep.subr.bf16.mxu0 %v691
        %694 = vmatpush1.bf16.msra.mxu0 %v688
        %695 = vmatprep.subr.bf16.mxu0 0
        %696 = vmatpush1.bf16.msra.mxu0 0
        %697 = vmatprep.subr.bf16.mxu0 0
        %698 = vmatpush1.bf16.msra.mxu0 0
        %699 = vmatprep.subr.bf16.mxu0 0
        %700 = vmatpush1.bf16.msra.mxu0 0
        %701 = vmatprep.subr.bf16.mxu0 0
        %702 = vmatpush1.bf16.msra.mxu0 0
        %703 = vmatprep.subr.bf16.mxu0 0
        %704 = vmatpush1.bf16.msra.mxu0 0
        %705 = vmatprep.subr.bf16.mxu0 0
        %706 = vmatpush1.bf16.msra.mxu0 0
        %707 = vmatprep.subr.bf16.mxu0 0
        %708 = vmatpush1.bf16.msra.mxu0 0
        %709 = vmatprep.subr.bf16.mxu0 0
        %710 = vmatpush1.bf16.msra.mxu0 0
        %711 = vmatprep.subr.bf16.mxu0 0
        %712 = vmatpush1.bf16.msra.mxu0 0
        %713 = vmatprep.subr.bf16.mxu0 0
        %714 = vmatpush1.bf16.msra.mxu0 0
        %715 = vmatprep.subr.bf16.mxu0 0
        %716 = vmatpush1.bf16.msra.mxu0 0
        %717 = vmatprep.subr.bf16.mxu0 0
        %718 = vmatpush1.bf16.msra.mxu0 0
        %719 = vmatprep.subr.bf16.mxu0 0
        %720 = vmatpush1.bf16.msra.mxu0 0
        %721 = vmatprep.subr.bf16.mxu0 0
        %722 = vmatpush1.bf16.msra.mxu0 0
        %723 = vmatprep.subr.bf16.mxu0 0
        %724 = vmatpush1.bf16.msra.mxu0 0
        %725 = vmatprep.mubr.bf16.mxu0 0
        %726 = vmatmul.mubr.bf16.gmra.mrb[0].mxu0 %v675
        %v727 = vpop.f32.mrb[0].mxu0
        %v728 = vadd.f32 %v623, %v727
        %v729 = vpop.f32.mrb[0].mxu0
        %v730 = vadd.f32 %v627, %v729
        %v731 = vpop.f32.mrb[0].mxu0
        %v732 = vadd.f32 %v623, %v731
        %v733 = vpop.f32.mrb[0].mxu0
        %v734 = vadd.f32 %v627, %v733
        %735 = vmatprep.mubr.bf16.mxu0 0
        %736 = vmatmul.mubr.bf16.gmra.mrb[0].mxu0 %v678
        %v737 = vpop.f32.mrb[0].mxu0
        %v738 = vadd.f32 %v623, %v737
        %v739 = vpop.f32.mrb[0].mxu0
        %v740 = vadd.f32 %v627, %v739
        %v741 = vpop.f32.mrb[0].mxu0
        %v742 = vadd.f32 %v623, %v741
        %v743 = vpop.f32.mrb[0].mxu0
        %v744 = vadd.f32 %v627, %v743
        %745 = vmatprep.mubr.bf16.mxu0 0
        %746 = vmatmul.mubr.bf16.gmra.mrb[0].mxu0 %v681
        %v747 = vpop.f32.mrb[0].mxu0
        %v748 = vadd.f32 %v623, %v747
        %v749 = vpop.f32.mrb[0].mxu0
        %v750 = vadd.f32 %v627, %v749
        %v751 = vpop.f32.mrb[0].mxu0
        %v752 = vadd.f32 %v623, %v751
        %v753 = vpop.f32.mrb[0].mxu0
        %v754 = vadd.f32 %v627, %v753
        %755 = vmatprep.mubr.bf16.mxu0 0
        %756 = vmatmul.mubr.bf16.gmra.mrb[0].mxu0 %v684
        %v757 = vpop.f32.mrb[0].mxu0
        %v758 = vadd.f32 %v623, %v757
        %v759 = vpop.f32.mrb[0].mxu0
        %v760 = vadd.f32 %v627, %v759
        %v761 = vpop.f32.mrb[0].mxu0
        %v762 = vadd.f32 %v623, %v761
        %v763 = vpop.f32.mrb[0].mxu0
        %v764 = vadd.f32 %v627, %v763
        %765 = vdwg.mxu0
        %v766 = vmax.f32 %v728, 0.0
        %v767 = vmax.f32 %v730, 0.0
        %v768 = vmax.f32 %v732, 0.0
        %v769 = vmax.f32 %v734, 0.0
        %v770 = vmax.f32 %v738, 0.0
        %v771 = vmax.f32 %v740, 0.0
        %v772 = vmax.f32 %v742, 0.0
        %v773 = vmax.f32 %v744, 0.0
        %v774 = vmax.f32 %v748, 0.0
        %v775 = vmax.f32 %v750, 0.0
        %v776 = vmax.f32 %v752, 0.0
        %v777 = vmax.f32 %v754, 0.0
        %v778 = vmax.f32 %v758, 0.0
        %v779 = vmax.f32 %v760, 0.0
        %v780 = vmax.f32 %v762, 0.0
        %v781 = vmax.f32 %v764, 0.0
        %782 = vst [vmem:[#allocation2] sm:$0xff] %v766
        %783 = vst [vmem:[#allocation2 + $0x8] sm:$0xff] %v767
        %784 = vst [vmem:[#allocation2 + $0x10] sm:$0xff] %v768
        %785 = vst [vmem:[#allocation2 + $0x18] sm:$0xff] %v769
        %786 = vst [vmem:[#allocation2 + $0x20] sm:$0xff] %v770
        %787 = vst [vmem:[#allocation2 + $0x28] sm:$0xff] %v771
        %788 = vst [vmem:[#allocation2 + $0x30] sm:$0xff] %v772
        %789 = vst [vmem:[#allocation2 + $0x38] sm:$0xff] %v773
        %790 = vst [vmem:[#allocation2 + $0x40] sm:$0xff] %v774
        %791 = vst [vmem:[#allocation2 + $0x48] sm:$0xff] %v775
        %792 = vst [vmem:[#allocation2 + $0x50] sm:$0xff] %v776
        %793 = vst [vmem:[#allocation2 + $0x58] sm:$0xff] %v777
        %794 = vst [vmem:[#allocation2 + $0x60] sm:$0xff] %v778
        %795 = vst [vmem:[#allocation2 + $0x68] sm:$0xff] %v779
        %796 = vst [vmem:[#allocation2 + $0x70] sm:$0xff] %v780
        %797 = vst [vmem:[#allocation2 + $0x78] sm:$0xff] %v781
      $region96: #{_lambda_.3} parent=91 // pred_fallthru
        _
      %v798 = vld [vmem:[#allocation2] sm:$0xff]
      %v799 = vld [vmem:[#allocation2 + $0x8] sm:$0xff]
      %v800 = vld [vmem:[#allocation2 + $0x10] sm:$0xff]
      %v801 = vld [vmem:[#allocation2 + $0x18] sm:$0xff]
      %v802 = vld [vmem:[#allocation2 + $0x20] sm:$0xff]
      %v803 = vld [vmem:[#allocation2 + $0x28] sm:$0xff]
      %v804 = vld [vmem:[#allocation2 + $0x30] sm:$0xff]
      %v805 = vld [vmem:[#allocation2 + $0x38] sm:$0xff]
      %v806 = vld [vmem:[#allocation2 + $0x40] sm:$0xff]
      %v807 = vld [vmem:[#allocation2 + $0x48] sm:$0xff]
      %v808 = vld [vmem:[#allocation2 + $0x50] sm:$0xff]
      %v809 = vld [vmem:[#allocation2 + $0x58] sm:$0xff]
      %v810 = vld [vmem:[#allocation2 + $0x60] sm:$0xff]
      %v811 = vld [vmem:[#allocation2 + $0x68] sm:$0xff]
      %v812 = vld [vmem:[#allocation2 + $0x70] sm:$0xff]
      %v813 = vld [vmem:[#allocation2 + $0x78] sm:$0xff]
      %v814 = vpack.c.bf16 %v800, %v798
      %v815 = vpack.c.bf16 %v801, %v799
      %v816 = vpack.c.bf16 %v804, %v802
      %v817 = vpack.c.bf16 %v805, %v803
      %v818 = vpack.c.bf16 %v808, %v806
      %v819 = vpack.c.bf16 %v809, %v807
      %v820 = vpack.c.bf16 %v812, %v810
      %v821 = vpack.c.bf16 %v813, %v811
      %v822 = vld [vmem:[%s600] sm:$0xff]
      %v823 = vld [vmem:[%s600 + $0x8] sm:$0xff]
      %v824 = vld [vmem:[%s600 + $0x10] sm:$0xff]
      %v825 = vld [vmem:[%s600 + $0x18] sm:$0xff]
      %v826 = vld [vmem:[%s600 + $0x20] sm:$0xff]
      %v827 = vld [vmem:[%s600 + $0x28] sm:$0xff]
      %v828 = vld [vmem:[%s600 + $0x30] sm:$0xff]
      %v829 = vld [vmem:[%s600 + $0x38] sm:$0xff]
      %s830 = smul.u32 %s34, 64
      %s831 = smul.addr %s830, 4
      %s832 = scalar_lea.vmem %s4, %s831
      %v833 = vld [vmem:[%s832] sm:$0xff]
      %v834 = vld [vmem:[%s832 + $0x8] sm:$0xff]
      %v835 = vld [vmem:[%s832 + $0x10] sm:$0xff]
      %v836 = vld [vmem:[%s832 + $0x18] sm:$0xff]
      %v837 = vld [vmem:[%s832 + $0x20] sm:$0xff]
      %v838 = vld [vmem:[%s832 + $0x28] sm:$0xff]
      %v839 = vld [vmem:[%s832 + $0x30] sm:$0xff]
      %v840 = vld [vmem:[%s832 + $0x38] sm:$0xff]
      %v841 = vld [vmem:[%s832 + $0x40] sm:$0xff]
      %v842 = vld [vmem:[%s832 + $0x48] sm:$0xff]
      %v843 = vld [vmem:[%s832 + $0x50] sm:$0xff]
      %v844 = vld [vmem:[%s832 + $0x58] sm:$0xff]
      %v845 = vld [vmem:[%s832 + $0x60] sm:$0xff]
      %v846 = vld [vmem:[%s832 + $0x68] sm:$0xff]
      %v847 = vld [vmem:[%s832 + $0x70] sm:$0xff]
      %v848 = vld [vmem:[%s832 + $0x78] sm:$0xff]
      %v849 = vld [vmem:[%s832 + $0x80] sm:$0xff]
      %v850 = vld [vmem:[%s832 + $0x88] sm:$0xff]
      %v851 = vld [vmem:[%s832 + $0x90] sm:$0xff]
      %v852 = vld [vmem:[%s832 + $0x98] sm:$0xff]
      %v853 = vld [vmem:[%s832 + $0xa0] sm:$0xff]
      %v854 = vld [vmem:[%s832 + $0xa8] sm:$0xff]
      %v855 = vld [vmem:[%s832 + $0xb0] sm:$0xff]
      %v856 = vld [vmem:[%s832 + $0xb8] sm:$0xff]
      %v857 = vld [vmem:[%s832 + $0xc0] sm:$0xff]
      %v858 = vld [vmem:[%s832 + $0xc8] sm:$0xff]
      %v859 = vld [vmem:[%s832 + $0xd0] sm:$0xff]
      %v860 = vld [vmem:[%s832 + $0xd8] sm:$0xff]
      %v861 = vld [vmem:[%s832 + $0xe0] sm:$0xff]
      %v862 = vld [vmem:[%s832 + $0xe8] sm:$0xff]
      %v863 = vld [vmem:[%s832 + $0xf0] sm:$0xff]
      %v864 = vld [vmem:[%s832 + $0xf8] sm:$0xff]
      %s865 = smul.u32 %s34, 2
      %s866 = scalar_lea.vmem %s5, %s865
      %v867 = vld [vmem:[%s866] sm:$0x3]
      %v869 = vlaneseq
      %v870 = vshrl.u32 %v869, 7
      %v871 = vsub.s32 0, %v870
      %v872 = vrot.slane %v867, %v871
      %v873 = vlaneseq
      %v874 = vshrl.u32 %v873, 7
      %v875 = vsub.s32 1, %v874
      %v876 = vrot.slane %v867, %v875
      %v911 = vunpack.c.l.b16 %v833
      %v912 = vunpack.c.h.b16 %v833
      %v913 = vunpack.c.l.b16 %v834
      %v914 = vunpack.c.h.b16 %v834
      %v915 = vunpack.c.l.b16 %v835
      %v916 = vunpack.c.h.b16 %v835
      %v917 = vunpack.c.l.b16 %v836
      %v918 = vunpack.c.h.b16 %v836
      %v919 = vunpack.c.l.b16 %v837
      %v920 = vunpack.c.h.b16 %v837
      %v921 = vunpack.c.l.b16 %v838
      %v922 = vunpack.c.h.b16 %v838
      %v923 = vunpack.c.l.b16 %v839
      %v924 = vunpack.c.h.b16 %v839
      %v925 = vunpack.c.l.b16 %v840
      %v926 = vunpack.c.h.b16 %v840
      %v927 = vunpack.c.l.b16 %v841
      %v928 = vunpack.c.h.b16 %v841
      %v929 = vunpack.c.l.b16 %v842
      %v930 = vunpack.c.h.b16 %v842
      %v931 = vunpack.c.l.b16 %v843
      %v932 = vunpack.c.h.b16 %v843
      %v933 = vunpack.c.l.b16 %v844
      %v934 = vunpack.c.h.b16 %v844
      %v935 = vunpack.c.l.b16 %v845
      %v936 = vunpack.c.h.b16 %v845
      %v937 = vunpack.c.l.b16 %v846
      %v938 = vunpack.c.h.b16 %v846
      %v939 = vunpack.c.l.b16 %v847
      %v940 = vunpack.c.h.b16 %v847
      %v941 = vunpack.c.l.b16 %v848
      %v942 = vunpack.c.h.b16 %v848
      %v943 = vunpack.c.l.b16 %v849
      %v944 = vunpack.c.h.b16 %v849
      %v945 = vunpack.c.l.b16 %v850
      %v946 = vunpack.c.h.b16 %v850
      %v947 = vunpack.c.l.b16 %v851
      %v948 = vunpack.c.h.b16 %v851
      %v949 = vunpack.c.l.b16 %v852
      %v950 = vunpack.c.h.b16 %v852
      %v951 = vunpack.c.l.b16 %v853
      %v952 = vunpack.c.h.b16 %v853
      %v953 = vunpack.c.l.b16 %v854
      %v954 = vunpack.c.h.b16 %v854
      %v955 = vunpack.c.l.b16 %v855
      %v956 = vunpack.c.h.b16 %v855
      %v957 = vunpack.c.l.b16 %v856
      %v958 = vunpack.c.h.b16 %v856
      %v959 = vunpack.c.l.b16 %v857
      %v960 = vunpack.c.h.b16 %v857
      %v961 = vunpack.c.l.b16 %v858
      %v962 = vunpack.c.h.b16 %v858
      %v963 = vunpack.c.l.b16 %v859
      %v964 = vunpack.c.h.b16 %v859
      %v965 = vunpack.c.l.b16 %v860
      %v966 = vunpack.c.h.b16 %v860
      %v967 = vunpack.c.l.b16 %v861
      %v968 = vunpack.c.h.b16 %v861
      %v969 = vunpack.c.l.b16 %v862
      %v970 = vunpack.c.h.b16 %v862
      %v971 = vunpack.c.l.b16 %v863
      %v972 = vunpack.c.h.b16 %v863
      %v973 = vunpack.c.l.b16 %v864
      %v974 = vunpack.c.h.b16 %v864
      %v975 = vpack.c.b16 %v913, %v911
      %v976 = vpack.c.b16 %v914, %v912
      %v977 = vpack.c.b16 %v917, %v915
      %v978 = vpack.c.b16 %v918, %v916
      %v979 = vpack.c.b16 %v921, %v919
      %v980 = vpack.c.b16 %v922, %v920
      %v981 = vpack.c.b16 %v925, %v923
      %v982 = vpack.c.b16 %v926, %v924
      %v983 = vpack.c.b16 %v929, %v927
      %v984 = vpack.c.b16 %v930, %v928
      %v985 = vpack.c.b16 %v933, %v931
      %v986 = vpack.c.b16 %v934, %v932
      %v987 = vpack.c.b16 %v937, %v935
      %v988 = vpack.c.b16 %v938, %v936
      %v989 = vpack.c.b16 %v941, %v939
      %v990 = vpack.c.b16 %v942, %v940
      %v991 = vpack.c.b16 %v945, %v943
      %v992 = vpack.c.b16 %v946, %v944
      %v993 = vpack.c.b16 %v949, %v947
      %v994 = vpack.c.b16 %v950, %v948
      %v995 = vpack.c.b16 %v953, %v951
      %v996 = vpack.c.b16 %v954, %v952
      %v997 = vpack.c.b16 %v957, %v955
      %v998 = vpack.c.b16 %v958, %v956
      %v999 = vpack.c.b16 %v961, %v959
      %v1000 = vpack.c.b16 %v962, %v960
      %v1001 = vpack.c.b16 %v965, %v963
      %v1002 = vpack.c.b16 %v966, %v964
      %v1003 = vpack.c.b16 %v969, %v967
      %v1004 = vpack.c.b16 %v970, %v968
      %v1005 = vpack.c.b16 %v973, %v971
      %v1006 = vpack.c.b16 %v974, %v972
      %1039 = vmatprep.subr.bf16.mxu0 %v976
      %1040 = vmatpush1.bf16.msra.mxu0 %v975
      %1041 = vmatprep.subr.bf16.mxu0 %v978
      %1042 = vmatpush1.bf16.msra.mxu0 %v977
      %1043 = vmatprep.subr.bf16.mxu0 %v980
      %1044 = vmatpush1.bf16.msra.mxu0 %v979
      %1045 = vmatprep.subr.bf16.mxu0 %v982
      %1046 = vmatpush1.bf16.msra.mxu0 %v981
      %1047 = vmatprep.subr.bf16.mxu0 %v984
      %1048 = vmatpush1.bf16.msra.mxu0 %v983
      %1049 = vmatprep.subr.bf16.mxu0 %v986
      %1050 = vmatpush1.bf16.msra.mxu0 %v985
      %1051 = vmatprep.subr.bf16.mxu0 %v988
      %1052 = vmatpush1.bf16.msra.mxu0 %v987
      %1053 = vmatprep.subr.bf16.mxu0 %v990
      %1054 = vmatpush1.bf16.msra.mxu0 %v989
      %1055 = vmatprep.subr.bf16.mxu0 %v992
      %1056 = vmatpush1.bf16.msra.mxu0 %v991
      %1057 = vmatprep.subr.bf16.mxu0 %v994
      %1058 = vmatpush1.bf16.msra.mxu0 %v993
      %1059 = vmatprep.subr.bf16.mxu0 %v996
      %1060 = vmatpush1.bf16.msra.mxu0 %v995
      %1061 = vmatprep.subr.bf16.mxu0 %v998
      %1062 = vmatpush1.bf16.msra.mxu0 %v997
      %1063 = vmatprep.subr.bf16.mxu0 %v1000
      %1064 = vmatpush1.bf16.msra.mxu0 %v999
      %1065 = vmatprep.subr.bf16.mxu0 %v1002
      %1066 = vmatpush1.bf16.msra.mxu0 %v1001
      %1067 = vmatprep.subr.bf16.mxu0 %v1004
      %1068 = vmatpush1.bf16.msra.mxu0 %v1003
      %1069 = vmatprep.subr.bf16.mxu0 %v1006
      %1070 = vmatpush1.bf16.msra.mxu0 %v1005
      %1071 = vmatprep.mubr.bf16.mxu0 %v815
      %1072 = vmatmul.mubr.bf16.gmra.mrb[0].mxu0 %v814
      %v1073 = vpop.f32.mrb[0].mxu0
      %v1074 = vadd.f32 %v872, %v1073
      %v1075 = vpop.f32.mrb[0].mxu0
      %v1076 = vadd.f32 %v876, %v1075
      %v1077 = vpop.f32.mrb[0].mxu0
      %v1078 = vadd.f32 %v872, %v1077
      %v1079 = vpop.f32.mrb[0].mxu0
      %v1080 = vadd.f32 %v876, %v1079
      %1081 = vmatprep.mubr.bf16.mxu0 %v817
      %1082 = vmatmul.mubr.bf16.gmra.mrb[0].mxu0 %v816
      %v1083 = vpop.f32.mrb[0].mxu0
      %v1084 = vadd.f32 %v872, %v1083
      %v1085 = vpop.f32.mrb[0].mxu0
      %v1086 = vadd.f32 %v876, %v1085
      %v1087 = vpop.f32.mrb[0].mxu0
      %v1088 = vadd.f32 %v872, %v1087
      %v1089 = vpop.f32.mrb[0].mxu0
      %v1090 = vadd.f32 %v876, %v1089
      %1091 = vmatprep.mubr.bf16.mxu0 %v819
      %1092 = vmatmul.mubr.bf16.gmra.mrb[0].mxu0 %v818
      %v1093 = vpop.f32.mrb[0].mxu0
      %v1094 = vadd.f32 %v872, %v1093
      %v1095 = vpop.f32.mrb[0].mxu0
      %v1096 = vadd.f32 %v876, %v1095
      %v1097 = vpop.f32.mrb[0].mxu0
      %v1098 = vadd.f32 %v872, %v1097
      %v1099 = vpop.f32.mrb[0].mxu0
      %v1100 = vadd.f32 %v876, %v1099
      %1101 = vmatprep.mubr.bf16.mxu0 %v821
      %1102 = vmatmul.mubr.bf16.gmra.mrb[0].mxu0 %v820
      %v1103 = vpop.f32.mrb[0].mxu0
      %v1104 = vadd.f32 %v872, %v1103
      %v1105 = vpop.f32.mrb[0].mxu0
      %v1106 = vadd.f32 %v876, %v1105
      %v1107 = vpop.f32.mrb[0].mxu0
      %v1108 = vadd.f32 %v872, %v1107
      %v1109 = vpop.f32.mrb[0].mxu0
      %v1110 = vadd.f32 %v876, %v1109
      %1111 = vdwg.mxu0
      %s1112 = smul.addr %s830, 4
      %s1113 = scalar_lea.vmem %s6, %s1112
      %v1114 = vld [vmem:[%s1113] sm:$0xff]
      %v1115 = vld [vmem:[%s1113 + $0x8] sm:$0xff]
      %v1116 = vld [vmem:[%s1113 + $0x10] sm:$0xff]
      %v1117 = vld [vmem:[%s1113 + $0x18] sm:$0xff]
      %v1118 = vld [vmem:[%s1113 + $0x20] sm:$0xff]
      %v1119 = vld [vmem:[%s1113 + $0x28] sm:$0xff]
      %v1120 = vld [vmem:[%s1113 + $0x30] sm:$0xff]
      %v1121 = vld [vmem:[%s1113 + $0x38] sm:$0xff]
      %v1122 = vld [vmem:[%s1113 + $0x40] sm:$0xff]
      %v1123 = vld [vmem:[%s1113 + $0x48] sm:$0xff]
      %v1124 = vld [vmem:[%s1113 + $0x50] sm:$0xff]
      %v1125 = vld [vmem:[%s1113 + $0x58] sm:$0xff]
      %v1126 = vld [vmem:[%s1113 + $0x60] sm:$0xff]
      %v1127 = vld [vmem:[%s1113 + $0x68] sm:$0xff]
      %v1128 = vld [vmem:[%s1113 + $0x70] sm:$0xff]
      %v1129 = vld [vmem:[%s1113 + $0x78] sm:$0xff]
      %v1130 = vld [vmem:[%s1113 + $0x80] sm:$0xff]
      %v1131 = vld [vmem:[%s1113 + $0x88] sm:$0xff]
      %v1132 = vld [vmem:[%s1113 + $0x90] sm:$0xff]
      %v1133 = vld [vmem:[%s1113 + $0x98] sm:$0xff]
      %v1134 = vld [vmem:[%s1113 + $0xa0] sm:$0xff]
      %v1135 = vld [vmem:[%s1113 + $0xa8] sm:$0xff]
      %v1136 = vld [vmem:[%s1113 + $0xb0] sm:$0xff]
      %v1137 = vld [vmem:[%s1113 + $0xb8] sm:$0xff]
      %v1138 = vld [vmem:[%s1113 + $0xc0] sm:$0xff]
      %v1139 = vld [vmem:[%s1113 + $0xc8] sm:$0xff]
      %v1140 = vld [vmem:[%s1113 + $0xd0] sm:$0xff]
      %v1141 = vld [vmem:[%s1113 + $0xd8] sm:$0xff]
      %v1142 = vld [vmem:[%s1113 + $0xe0] sm:$0xff]
      %v1143 = vld [vmem:[%s1113 + $0xe8] sm:$0xff]
      %v1144 = vld [vmem:[%s1113 + $0xf0] sm:$0xff]
      %v1145 = vld [vmem:[%s1113 + $0xf8] sm:$0xff]
      %s1146 = scalar_lea.vmem %s7, %s865
      %v1147 = vld [vmem:[%s1146] sm:$0x3]
      %v1149 = vlaneseq
      %v1150 = vshrl.u32 %v1149, 7
      %v1151 = vsub.s32 0, %v1150
      %v1152 = vrot.slane %v1147, %v1151
      %v1153 = vlaneseq
      %v1154 = vshrl.u32 %v1153, 7
      %v1155 = vsub.s32 1, %v1154
      %v1156 = vrot.slane %v1147, %v1155
      %v1167 = vunpack.c.l.b16 %v822
      %v1168 = vunpack.c.h.b16 %v822
      %v1169 = vunpack.c.l.b16 %v823
      %v1170 = vunpack.c.h.b16 %v823
      %v1171 = vunpack.c.l.b16 %v824
      %v1172 = vunpack.c.h.b16 %v824
      %v1173 = vunpack.c.l.b16 %v825
      %v1174 = vunpack.c.h.b16 %v825
      %v1175 = vunpack.c.l.b16 %v826
      %v1176 = vunpack.c.h.b16 %v826
      %v1177 = vunpack.c.l.b16 %v827
      %v1178 = vunpack.c.h.b16 %v827
      %v1179 = vunpack.c.l.b16 %v828
      %v1180 = vunpack.c.h.b16 %v828
      %v1181 = vunpack.c.l.b16 %v829
      %v1182 = vunpack.c.h.b16 %v829
      %v1183 = vpack.c.b16 %v1169, %v1167
      %v1184 = vpack.c.b16 %v1170, %v1168
      %v1185 = vpack.c.b16 %v1173, %v1171
      %v1186 = vpack.c.b16 %v1174, %v1172
      %v1187 = vpack.c.b16 %v1177, %v1175
      %v1188 = vpack.c.b16 %v1178, %v1176
      %v1189 = vpack.c.b16 %v1181, %v1179
      %v1190 = vpack.c.b16 %v1182, %v1180
      %v1231 = vunpack.c.l.b16 %v1114
      %v1232 = vunpack.c.h.b16 %v1114
      %v1233 = vunpack.c.l.b16 %v1115
      %v1234 = vunpack.c.h.b16 %v1115
      %v1235 = vunpack.c.l.b16 %v1116
      %v1236 = vunpack.c.h.b16 %v1116
      %v1237 = vunpack.c.l.b16 %v1117
      %v1238 = vunpack.c.h.b16 %v1117
      %v1239 = vunpack.c.l.b16 %v1118
      %v1240 = vunpack.c.h.b16 %v1118
      %v1241 = vunpack.c.l.b16 %v1119
      %v1242 = vunpack.c.h.b16 %v1119
      %v1243 = vunpack.c.l.b16 %v1120
      %v1244 = vunpack.c.h.b16 %v1120
      %v1245 = vunpack.c.l.b16 %v1121
      %v1246 = vunpack.c.h.b16 %v1121
      %v1247 = vunpack.c.l.b16 %v1122
      %v1248 = vunpack.c.h.b16 %v1122
      %v1249 = vunpack.c.l.b16 %v1123
      %v1250 = vunpack.c.h.b16 %v1123
      %v1251 = vunpack.c.l.b16 %v1124
      %v1252 = vunpack.c.h.b16 %v1124
      %v1253 = vunpack.c.l.b16 %v1125
      %v1254 = vunpack.c.h.b16 %v1125
      %v1255 = vunpack.c.l.b16 %v1126
      %v1256 = vunpack.c.h.b16 %v1126
      %v1257 = vunpack.c.l.b16 %v1127
      %v1258 = vunpack.c.h.b16 %v1127
      %v1259 = vunpack.c.l.b16 %v1128
      %v1260 = vunpack.c.h.b16 %v1128
      %v1261 = vunpack.c.l.b16 %v1129
      %v1262 = vunpack.c.h.b16 %v1129
      %v1263 = vunpack.c.l.b16 %v1130
      %v1264 = vunpack.c.h.b16 %v1130
      %v1265 = vunpack.c.l.b16 %v1131
      %v1266 = vunpack.c.h.b16 %v1131
      %v1267 = vunpack.c.l.b16 %v1132
      %v1268 = vunpack.c.h.b16 %v1132
      %v1269 = vunpack.c.l.b16 %v1133
      %v1270 = vunpack.c.h.b16 %v1133
      %v1271 = vunpack.c.l.b16 %v1134
      %v1272 = vunpack.c.h.b16 %v1134
      %v1273 = vunpack.c.l.b16 %v1135
      %v1274 = vunpack.c.h.b16 %v1135
      %v1275 = vunpack.c.l.b16 %v1136
      %v1276 = vunpack.c.h.b16 %v1136
      %v1277 = vunpack.c.l.b16 %v1137
      %v1278 = vunpack.c.h.b16 %v1137
      %v1279 = vunpack.c.l.b16 %v1138
      %v1280 = vunpack.c.h.b16 %v1138
      %v1281 = vunpack.c.l.b16 %v1139
      %v1282 = vunpack.c.h.b16 %v1139
      %v1283 = vunpack.c.l.b16 %v1140
      %v1284 = vunpack.c.h.b16 %v1140
      %v1285 = vunpack.c.l.b16 %v1141
      %v1286 = vunpack.c.h.b16 %v1141
      %v1287 = vunpack.c.l.b16 %v1142
      %v1288 = vunpack.c.h.b16 %v1142
      %v1289 = vunpack.c.l.b16 %v1143
      %v1290 = vunpack.c.h.b16 %v1143
      %v1291 = vunpack.c.l.b16 %v1144
      %v1292 = vunpack.c.h.b16 %v1144
      %v1293 = vunpack.c.l.b16 %v1145
      %v1294 = vunpack.c.h.b16 %v1145
      %v1295 = vpack.c.b16 %v1233, %v1231
      %v1296 = vpack.c.b16 %v1234, %v1232
      %v1297 = vpack.c.b16 %v1237, %v1235
      %v1298 = vpack.c.b16 %v1238, %v1236
      %v1299 = vpack.c.b16 %v1241, %v1239
      %v1300 = vpack.c.b16 %v1242, %v1240
      %v1301 = vpack.c.b16 %v1245, %v1243
      %v1302 = vpack.c.b16 %v1246, %v1244
      %v1303 = vpack.c.b16 %v1249, %v1247
      %v1304 = vpack.c.b16 %v1250, %v1248
      %v1305 = vpack.c.b16 %v1253, %v1251
      %v1306 = vpack.c.b16 %v1254, %v1252
      %v1307 = vpack.c.b16 %v1257, %v1255
      %v1308 = vpack.c.b16 %v1258, %v1256
      %v1309 = vpack.c.b16 %v1261, %v1259
      %v1310 = vpack.c.b16 %v1262, %v1260
      %v1311 = vpack.c.b16 %v1265, %v1263
      %v1312 = vpack.c.b16 %v1266, %v1264
      %v1313 = vpack.c.b16 %v1269, %v1267
      %v1314 = vpack.c.b16 %v1270, %v1268
      %v1315 = vpack.c.b16 %v1273, %v1271
      %v1316 = vpack.c.b16 %v1274, %v1272
      %v1317 = vpack.c.b16 %v1277, %v1275
      %v1318 = vpack.c.b16 %v1278, %v1276
      %v1319 = vpack.c.b16 %v1281, %v1279
      %v1320 = vpack.c.b16 %v1282, %v1280
      %v1321 = vpack.c.b16 %v1285, %v1283
      %v1322 = vpack.c.b16 %v1286, %v1284
      %v1323 = vpack.c.b16 %v1289, %v1287
      %v1324 = vpack.c.b16 %v1290, %v1288
      %v1325 = vpack.c.b16 %v1293, %v1291
      %v1326 = vpack.c.b16 %v1294, %v1292
      %1359 = vmatprep.subr.bf16.mxu0 %v1296
      %1360 = vmatpush1.bf16.msra.mxu0 %v1295
      %1361 = vmatprep.subr.bf16.mxu0 %v1298
      %1362 = vmatpush1.bf16.msra.mxu0 %v1297
      %1363 = vmatprep.subr.bf16.mxu0 %v1300
      %1364 = vmatpush1.bf16.msra.mxu0 %v1299
      %1365 = vmatprep.subr.bf16.mxu0 %v1302
      %1366 = vmatpush1.bf16.msra.mxu0 %v1301
      %1367 = vmatprep.subr.bf16.mxu0 %v1304
      %1368 = vmatpush1.bf16.msra.mxu0 %v1303
      %1369 = vmatprep.subr.bf16.mxu0 %v1306
      %1370 = vmatpush1.bf16.msra.mxu0 %v1305
      %1371 = vmatprep.subr.bf16.mxu0 %v1308
      %1372 = vmatpush1.bf16.msra.mxu0 %v1307
      %1373 = vmatprep.subr.bf16.mxu0 %v1310
      %1374 = vmatpush1.bf16.msra.mxu0 %v1309
      %1375 = vmatprep.subr.bf16.mxu0 %v1312
      %1376 = vmatpush1.bf16.msra.mxu0 %v1311
      %1377 = vmatprep.subr.bf16.mxu0 %v1314
      %1378 = vmatpush1.bf16.msra.mxu0 %v1313
      %1379 = vmatprep.subr.bf16.mxu0 %v1316
      %1380 = vmatpush1.bf16.msra.mxu0 %v1315
      %1381 = vmatprep.subr.bf16.mxu0 %v1318
      %1382 = vmatpush1.bf16.msra.mxu0 %v1317
      %1383 = vmatprep.subr.bf16.mxu0 %v1320
      %1384 = vmatpush1.bf16.msra.mxu0 %v1319
      %1385 = vmatprep.subr.bf16.mxu0 %v1322
      %1386 = vmatpush1.bf16.msra.mxu0 %v1321
      %1387 = vmatprep.subr.bf16.mxu0 %v1324
      %1388 = vmatpush1.bf16.msra.mxu0 %v1323
      %1389 = vmatprep.subr.bf16.mxu0 %v1326
      %1390 = vmatpush1.bf16.msra.mxu0 %v1325
      %1391 = vmatprep.mubr.bf16.mxu0 %v1184
      %1392 = vmatmul.mubr.bf16.gmra.mrb[0].mxu0 %v1183
      %v1393 = vpop.f32.mrb[0].mxu0
      %v1394 = vadd.f32 %v1152, %v1393
      %v1395 = vpop.f32.mrb[0].mxu0
      %v1396 = vadd.f32 %v1156, %v1395
      %v1397 = vpop.f32.mrb[0].mxu0
      %v1398 = vadd.f32 %v1152, %v1397
      %v1399 = vpop.f32.mrb[0].mxu0
      %v1400 = vadd.f32 %v1156, %v1399
      %1401 = vmatprep.mubr.bf16.mxu0 %v1186
      %1402 = vmatmul.mubr.bf16.gmra.mrb[0].mxu0 %v1185
      %v1403 = vpop.f32.mrb[0].mxu0
      %v1404 = vadd.f32 %v1152, %v1403
      %v1405 = vpop.f32.mrb[0].mxu0
      %v1406 = vadd.f32 %v1156, %v1405
      %v1407 = vpop.f32.mrb[0].mxu0
      %v1408 = vadd.f32 %v1152, %v1407
      %v1409 = vpop.f32.mrb[0].mxu0
      %v1410 = vadd.f32 %v1156, %v1409
      %1411 = vmatprep.mubr.bf16.mxu0 %v1188
      %1412 = vmatmul.mubr.bf16.gmra.mrb[0].mxu0 %v1187
      %v1413 = vpop.f32.mrb[0].mxu0
      %v1414 = vadd.f32 %v1152, %v1413
      %v1415 = vpop.f32.mrb[0].mxu0
      %v1416 = vadd.f32 %v1156, %v1415
      %v1417 = vpop.f32.mrb[0].mxu0
      %v1418 = vadd.f32 %v1152, %v1417
      %v1419 = vpop.f32.mrb[0].mxu0
      %v1420 = vadd.f32 %v1156, %v1419
      %1421 = vmatprep.mubr.bf16.mxu0 %v1190
      %1422 = vmatmul.mubr.bf16.gmra.mrb[0].mxu0 %v1189
      %v1423 = vpop.f32.mrb[0].mxu0
      %v1424 = vadd.f32 %v1152, %v1423
      %v1425 = vpop.f32.mrb[0].mxu0
      %v1426 = vadd.f32 %v1156, %v1425
      %v1427 = vpop.f32.mrb[0].mxu0
      %v1428 = vadd.f32 %v1152, %v1427
      %v1429 = vpop.f32.mrb[0].mxu0
      %v1430 = vadd.f32 %v1156, %v1429
      %1431 = vdwg.mxu0
      %s1432 = smul.addr %s830, 4
      %s1433 = scalar_lea.vmem %s8, %s1432
      %v1434 = vld [vmem:[%s1433] sm:$0xff]
      %v1435 = vld [vmem:[%s1433 + $0x8] sm:$0xff]
      %v1436 = vld [vmem:[%s1433 + $0x10] sm:$0xff]
      %v1437 = vld [vmem:[%s1433 + $0x18] sm:$0xff]
      %v1438 = vld [vmem:[%s1433 + $0x20] sm:$0xff]
      %v1439 = vld [vmem:[%s1433 + $0x28] sm:$0xff]
      %v1440 = vld [vmem:[%s1433 + $0x30] sm:$0xff]
      %v1441 = vld [vmem:[%s1433 + $0x38] sm:$0xff]
      %v1442 = vld [vmem:[%s1433 + $0x40] sm:$0xff]
      %v1443 = vld [vmem:[%s1433 + $0x48] sm:$0xff]
      %v1444 = vld [vmem:[%s1433 + $0x50] sm:$0xff]
      %v1445 = vld [vmem:[%s1433 + $0x58] sm:$0xff]
      %v1446 = vld [vmem:[%s1433 + $0x60] sm:$0xff]
      %v1447 = vld [vmem:[%s1433 + $0x68] sm:$0xff]
      %v1448 = vld [vmem:[%s1433 + $0x70] sm:$0xff]
      %v1449 = vld [vmem:[%s1433 + $0x78] sm:$0xff]
      %v1450 = vld [vmem:[%s1433 + $0x80] sm:$0xff]
      %v1451 = vld [vmem:[%s1433 + $0x88] sm:$0xff]
      %v1452 = vld [vmem:[%s1433 + $0x90] sm:$0xff]
      %v1453 = vld [vmem:[%s1433 + $0x98] sm:$0xff]
      %v1454 = vld [vmem:[%s1433 + $0xa0] sm:$0xff]
      %v1455 = vld [vmem:[%s1433 + $0xa8] sm:$0xff]
      %v1456 = vld [vmem:[%s1433 + $0xb0] sm:$0xff]
      %v1457 = vld [vmem:[%s1433 + $0xb8] sm:$0xff]
      %v1458 = vld [vmem:[%s1433 + $0xc0] sm:$0xff]
      %v1459 = vld [vmem:[%s1433 + $0xc8] sm:$0xff]
      %v1460 = vld [vmem:[%s1433 + $0xd0] sm:$0xff]
      %v1461 = vld [vmem:[%s1433 + $0xd8] sm:$0xff]
      %v1462 = vld [vmem:[%s1433 + $0xe0] sm:$0xff]
      %v1463 = vld [vmem:[%s1433 + $0xe8] sm:$0xff]
      %v1464 = vld [vmem:[%s1433 + $0xf0] sm:$0xff]
      %v1465 = vld [vmem:[%s1433 + $0xf8] sm:$0xff]
      %s1466 = scalar_lea.vmem %s9, %s865
      %v1467 = vld [vmem:[%s1466] sm:$0x3]
      %v1469 = vlaneseq
      %v1470 = vshrl.u32 %v1469, 7
      %v1471 = vsub.s32 0, %v1470
      %v1472 = vrot.slane %v1467, %v1471
      %v1473 = vlaneseq
      %v1474 = vshrl.u32 %v1473, 7
      %v1475 = vsub.s32 1, %v1474
      %v1476 = vrot.slane %v1467, %v1475
      %v1511 = vunpack.c.l.b16 %v1434
      %v1512 = vunpack.c.h.b16 %v1434
      %v1513 = vunpack.c.l.b16 %v1435
      %v1514 = vunpack.c.h.b16 %v1435
      %v1515 = vunpack.c.l.b16 %v1436
      %v1516 = vunpack.c.h.b16 %v1436
      %v1517 = vunpack.c.l.b16 %v1437
      %v1518 = vunpack.c.h.b16 %v1437
      %v1519 = vunpack.c.l.b16 %v1438
      %v1520 = vunpack.c.h.b16 %v1438
      %v1521 = vunpack.c.l.b16 %v1439
      %v1522 = vunpack.c.h.b16 %v1439
      %v1523 = vunpack.c.l.b16 %v1440
      %v1524 = vunpack.c.h.b16 %v1440
      %v1525 = vunpack.c.l.b16 %v1441
      %v1526 = vunpack.c.h.b16 %v1441
      %v1527 = vunpack.c.l.b16 %v1442
      %v1528 = vunpack.c.h.b16 %v1442
      %v1529 = vunpack.c.l.b16 %v1443
      %v1530 = vunpack.c.h.b16 %v1443
      %v1531 = vunpack.c.l.b16 %v1444
      %v1532 = vunpack.c.h.b16 %v1444
      %v1533 = vunpack.c.l.b16 %v1445
      %v1534 = vunpack.c.h.b16 %v1445
      %v1535 = vunpack.c.l.b16 %v1446
      %v1536 = vunpack.c.h.b16 %v1446
      %v1537 = vunpack.c.l.b16 %v1447
      %v1538 = vunpack.c.h.b16 %v1447
      %v1539 = vunpack.c.l.b16 %v1448
      %v1540 = vunpack.c.h.b16 %v1448
      %v1541 = vunpack.c.l.b16 %v1449
      %v1542 = vunpack.c.h.b16 %v1449
      %v1543 = vunpack.c.l.b16 %v1450
      %v1544 = vunpack.c.h.b16 %v1450
      %v1545 = vunpack.c.l.b16 %v1451
      %v1546 = vunpack.c.h.b16 %v1451
      %v1547 = vunpack.c.l.b16 %v1452
      %v1548 = vunpack.c.h.b16 %v1452
      %v1549 = vunpack.c.l.b16 %v1453
      %v1550 = vunpack.c.h.b16 %v1453
      %v1551 = vunpack.c.l.b16 %v1454
      %v1552 = vunpack.c.h.b16 %v1454
      %v1553 = vunpack.c.l.b16 %v1455
      %v1554 = vunpack.c.h.b16 %v1455
      %v1555 = vunpack.c.l.b16 %v1456
      %v1556 = vunpack.c.h.b16 %v1456
      %v1557 = vunpack.c.l.b16 %v1457
      %v1558 = vunpack.c.h.b16 %v1457
      %v1559 = vunpack.c.l.b16 %v1458
      %v1560 = vunpack.c.h.b16 %v1458
      %v1561 = vunpack.c.l.b16 %v1459
      %v1562 = vunpack.c.h.b16 %v1459
      %v1563 = vunpack.c.l.b16 %v1460
      %v1564 = vunpack.c.h.b16 %v1460
      %v1565 = vunpack.c.l.b16 %v1461
      %v1566 = vunpack.c.h.b16 %v1461
      %v1567 = vunpack.c.l.b16 %v1462
      %v1568 = vunpack.c.h.b16 %v1462
      %v1569 = vunpack.c.l.b16 %v1463
      %v1570 = vunpack.c.h.b16 %v1463
      %v1571 = vunpack.c.l.b16 %v1464
      %v1572 = vunpack.c.h.b16 %v1464
      %v1573 = vunpack.c.l.b16 %v1465
      %v1574 = vunpack.c.h.b16 %v1465
      %v1575 = vpack.c.b16 %v1513, %v1511
      %v1576 = vpack.c.b16 %v1514, %v1512
      %v1577 = vpack.c.b16 %v1517, %v1515
      %v1578 = vpack.c.b16 %v1518, %v1516
      %v1579 = vpack.c.b16 %v1521, %v1519
      %v1580 = vpack.c.b16 %v1522, %v1520
      %v1581 = vpack.c.b16 %v1525, %v1523
      %v1582 = vpack.c.b16 %v1526, %v1524
      %v1583 = vpack.c.b16 %v1529, %v1527
      %v1584 = vpack.c.b16 %v1530, %v1528
      %v1585 = vpack.c.b16 %v1533, %v1531
      %v1586 = vpack.c.b16 %v1534, %v1532
      %v1587 = vpack.c.b16 %v1537, %v1535
      %v1588 = vpack.c.b16 %v1538, %v1536
      %v1589 = vpack.c.b16 %v1541, %v1539
      %v1590 = vpack.c.b16 %v1542, %v1540
      %v1591 = vpack.c.b16 %v1545, %v1543
      %v1592 = vpack.c.b16 %v1546, %v1544
      %v1593 = vpack.c.b16 %v1549, %v1547
      %v1594 = vpack.c.b16 %v1550, %v1548
      %v1595 = vpack.c.b16 %v1553, %v1551
      %v1596 = vpack.c.b16 %v1554, %v1552
      %v1597 = vpack.c.b16 %v1557, %v1555
      %v1598 = vpack.c.b16 %v1558, %v1556
      %v1599 = vpack.c.b16 %v1561, %v1559
      %v1600 = vpack.c.b16 %v1562, %v1560
      %v1601 = vpack.c.b16 %v1565, %v1563
      %v1602 = vpack.c.b16 %v1566, %v1564
      %v1603 = vpack.c.b16 %v1569, %v1567
      %v1604 = vpack.c.b16 %v1570, %v1568
      %v1605 = vpack.c.b16 %v1573, %v1571
      %v1606 = vpack.c.b16 %v1574, %v1572
      %1639 = vmatprep.subr.bf16.mxu0 %v1576
      %1640 = vmatpush1.bf16.msra.mxu0 %v1575
      %1641 = vmatprep.subr.bf16.mxu0 %v1578
      %1642 = vmatpush1.bf16.msra.mxu0 %v1577
      %1643 = vmatprep.subr.bf16.mxu0 %v1580
      %1644 = vmatpush1.bf16.msra.mxu0 %v1579
      %1645 = vmatprep.subr.bf16.mxu0 %v1582
      %1646 = vmatpush1.bf16.msra.mxu0 %v1581
      %1647 = vmatprep.subr.bf16.mxu0 %v1584
      %1648 = vmatpush1.bf16.msra.mxu0 %v1583
      %1649 = vmatprep.subr.bf16.mxu0 %v1586
      %1650 = vmatpush1.bf16.msra.mxu0 %v1585
      %1651 = vmatprep.subr.bf16.mxu0 %v1588
      %1652 = vmatpush1.bf16.msra.mxu0 %v1587
      %1653 = vmatprep.subr.bf16.mxu0 %v1590
      %1654 = vmatpush1.bf16.msra.mxu0 %v1589
      %1655 = vmatprep.subr.bf16.mxu0 %v1592
      %1656 = vmatpush1.bf16.msra.mxu0 %v1591
      %1657 = vmatprep.subr.bf16.mxu0 %v1594
      %1658 = vmatpush1.bf16.msra.mxu0 %v1593
      %1659 = vmatprep.subr.bf16.mxu0 %v1596
      %1660 = vmatpush1.bf16.msra.mxu0 %v1595
      %1661 = vmatprep.subr.bf16.mxu0 %v1598
      %1662 = vmatpush1.bf16.msra.mxu0 %v1597
      %1663 = vmatprep.subr.bf16.mxu0 %v1600
      %1664 = vmatpush1.bf16.msra.mxu0 %v1599
      %1665 = vmatprep.subr.bf16.mxu0 %v1602
      %1666 = vmatpush1.bf16.msra.mxu0 %v1601
      %1667 = vmatprep.subr.bf16.mxu0 %v1604
      %1668 = vmatpush1.bf16.msra.mxu0 %v1603
      %1669 = vmatprep.subr.bf16.mxu0 %v1606
      %1670 = vmatpush1.bf16.msra.mxu0 %v1605
      %1671 = vmatprep.mubr.bf16.mxu0 %v1184
      %1672 = vmatmul.mubr.bf16.gmra.mrb[0].mxu0 %v1183
      %v1673 = vpop.f32.mrb[0].mxu0
      %v1674 = vadd.f32 %v1472, %v1673
      %v1675 = vpop.f32.mrb[0].mxu0
      %v1676 = vadd.f32 %v1476, %v1675
      %v1677 = vpop.f32.mrb[0].mxu0
      %v1678 = vadd.f32 %v1472, %v1677
      %v1679 = vpop.f32.mrb[0].mxu0
      %v1680 = vadd.f32 %v1476, %v1679
      %1681 = vmatprep.mubr.bf16.mxu0 %v1186
      %1682 = vmatmul.mubr.bf16.gmra.mrb[0].mxu0 %v1185
      %v1683 = vpop.f32.mrb[0].mxu0
      %v1684 = vadd.f32 %v1472, %v1683
      %v1685 = vpop.f32.mrb[0].mxu0
      %v1686 = vadd.f32 %v1476, %v1685
      %v1687 = vpop.f32.mrb[0].mxu0
      %v1688 = vadd.f32 %v1472, %v1687
      %v1689 = vpop.f32.mrb[0].mxu0
      %v1690 = vadd.f32 %v1476, %v1689
      %1691 = vmatprep.mubr.bf16.mxu0 %v1188
      %1692 = vmatmul.mubr.bf16.gmra.mrb[0].mxu0 %v1187
      %v1693 = vpop.f32.mrb[0].mxu0
      %v1694 = vadd.f32 %v1472, %v1693
      %v1695 = vpop.f32.mrb[0].mxu0
      %v1696 = vadd.f32 %v1476, %v1695
      %v1697 = vpop.f32.mrb[0].mxu0
      %v1698 = vadd.f32 %v1472, %v1697
      %v1699 = vpop.f32.mrb[0].mxu0
      %v1700 = vadd.f32 %v1476, %v1699
      %1701 = vmatprep.mubr.bf16.mxu0 %v1190
      %1702 = vmatmul.mubr.bf16.gmra.mrb[0].mxu0 %v1189
      %v1703 = vpop.f32.mrb[0].mxu0
      %v1704 = vadd.f32 %v1472, %v1703
      %v1705 = vpop.f32.mrb[0].mxu0
      %v1706 = vadd.f32 %v1476, %v1705
      %v1707 = vpop.f32.mrb[0].mxu0
      %v1708 = vadd.f32 %v1472, %v1707
      %v1709 = vpop.f32.mrb[0].mxu0
      %v1710 = vadd.f32 %v1476, %v1709
      %1711 = vdwg.mxu0
      %v1712 = vpack.c.bf16 %v1078, %v1074
      %v1713 = vpack.c.bf16 %v1080, %v1076
      %v1714 = vpack.c.bf16 %v1088, %v1084
      %v1715 = vpack.c.bf16 %v1090, %v1086
      %v1716 = vpack.c.bf16 %v1098, %v1094
      %v1717 = vpack.c.bf16 %v1100, %v1096
      %v1718 = vpack.c.bf16 %v1108, %v1104
      %v1719 = vpack.c.bf16 %v1110, %v1106
      %v1720 = vpack.c.bf16 %v1398, %v1394
      %v1721 = vpack.c.bf16 %v1400, %v1396
      %v1722 = vpack.c.bf16 %v1408, %v1404
      %v1723 = vpack.c.bf16 %v1410, %v1406
      %v1724 = vpack.c.bf16 %v1418, %v1414
      %v1725 = vpack.c.bf16 %v1420, %v1416
      %v1726 = vpack.c.bf16 %v1428, %v1424
      %v1727 = vpack.c.bf16 %v1430, %v1426
      %v1728 = vpack.c.bf16 %v1678, %v1674
      %v1729 = vpack.c.bf16 %v1680, %v1676
      %v1730 = vpack.c.bf16 %v1688, %v1684
      %v1731 = vpack.c.bf16 %v1690, %v1686
      %v1732 = vpack.c.bf16 %v1698, %v1694
      %v1733 = vpack.c.bf16 %v1700, %v1696
      %v1734 = vpack.c.bf16 %v1708, %v1704
      %v1735 = vpack.c.bf16 %v1710, %v1706
      %vm1736 = vcmask 261120
      %v1738 = vsel %vm1736, %v1712, 0
      %v1741 = vsel %vm1736, %v1714, 0
      %v1744 = vsel %vm1736, %v1716, 0
      %v1747 = vsel %vm1736, %v1718, 0
      %v1750 = vsel %vm1736, %v1720, 0
      %v1753 = vsel %vm1736, %v1722, 0
      %v1756 = vsel %vm1736, %v1724, 0
      %v1759 = vsel %vm1736, %v1726, 0
      %1761 = vmatprep.subr.bf16.mxu0 0
      %1762 = vmatpush1.bf16.xpose.msra.mxu0 %v1750
      %1763 = vmatprep.subr.bf16.mxu0 0
      %1764 = vmatpush1.bf16.xpose.msra.mxu0 %v1753
      %1765 = vmatprep.subr.bf16.mxu0 0
      %1766 = vmatpush1.bf16.xpose.msra.mxu0 %v1756
      %1767 = vmatprep.subr.bf16.mxu0 0
      %1768 = vmatpush1.bf16.xpose.msra.mxu0 %v1759
      %1769 = vmatprep.subr.bf16.mxu0 0
      %1770 = vmatpush1.bf16.xpose.msra.mxu0 0
      %1771 = vmatprep.subr.bf16.mxu0 0
      %1772 = vmatpush1.bf16.xpose.msra.mxu0 0
      %1773 = vmatprep.subr.bf16.mxu0 0
      %1774 = vmatpush1.bf16.xpose.msra.mxu0 0
      %1775 = vmatprep.subr.bf16.mxu0 0
      %1776 = vmatpush1.bf16.xpose.msra.mxu0 0
      %1777 = vmatprep.subr.bf16.mxu0 0
      %1778 = vmatpush1.bf16.xpose.msra.mxu0 0
      %1779 = vmatprep.subr.bf16.mxu0 0
      %1780 = vmatpush1.bf16.xpose.msra.mxu0 0
      %1781 = vmatprep.subr.bf16.mxu0 0
      %1782 = vmatpush1.bf16.xpose.msra.mxu0 0
      %1783 = vmatprep.subr.bf16.mxu0 0
      %1784 = vmatpush1.bf16.xpose.msra.mxu0 0
      %1785 = vmatprep.subr.bf16.mxu0 0
      %1786 = vmatpush1.bf16.xpose.msra.mxu0 0
      %1787 = vmatprep.subr.bf16.mxu0 0
      %1788 = vmatpush1.bf16.xpose.msra.mxu0 0
      %1789 = vmatprep.subr.bf16.mxu0 0
      %1790 = vmatpush1.bf16.xpose.msra.mxu0 0
      %1791 = vmatprep.subr.bf16.mxu0 0
      %1792 = vmatpush1.bf16.xpose.msra.mxu0 0
      %1793 = vmatprep.mubr.bf16.mxu0 0
      %1794 = vmatmul.mubr.bf16.gmra.mrb[0].mxu0 %v1738
      %v1795 = vpop.f32.mrb[0].mxu0
      %v1796 = vadd.f32 0.0, %v1795
      %v1797 = vpop.f32.mrb[0].mxu0
      %v1798 = vpop.f32.mrb[0].mxu0
      %v1799 = vadd.f32 0.0, %v1798
      %v1800 = vpop.f32.mrb[0].mxu0
      %1801 = vmatprep.mubr.bf16.mxu0 0
      %1802 = vmatmul.mubr.bf16.gmra.mrb[0].mxu0 %v1741
      %v1803 = vpop.f32.mrb[0].mxu0
      %v1804 = vadd.f32 0.0, %v1803
      %v1805 = vpop.f32.mrb[0].mxu0
      %v1806 = vpop.f32.mrb[0].mxu0
      %v1807 = vadd.f32 0.0, %v1806
      %v1808 = vpop.f32.mrb[0].mxu0
      %1809 = vmatprep.mubr.bf16.mxu0 0
      %1810 = vmatmul.mubr.bf16.gmra.mrb[0].mxu0 %v1744
      %v1811 = vpop.f32.mrb[0].mxu0
      %v1812 = vadd.f32 0.0, %v1811
      %v1813 = vpop.f32.mrb[0].mxu0
      %v1814 = vpop.f32.mrb[0].mxu0
      %v1815 = vadd.f32 0.0, %v1814
      %v1816 = vpop.f32.mrb[0].mxu0
      %1817 = vmatprep.mubr.bf16.mxu0 0
      %1818 = vmatmul.mubr.bf16.gmra.mrb[0].mxu0 %v1747
      %v1819 = vpop.f32.mrb[0].mxu0
      %v1820 = vadd.f32 0.0, %v1819
      %v1821 = vpop.f32.mrb[0].mxu0
      %v1822 = vpop.f32.mrb[0].mxu0
      %v1823 = vadd.f32 0.0, %v1822
      %v1824 = vpop.f32.mrb[0].mxu0
      %1825 = vdwg.mxu0
      %vm1826 = vcmask 523264
      %v1827 = vsel %vm1826, %v1796, -inf
      %1828 = vmax.xlane.f32.xlu0 %v1827
      %v1829 = vpop.xlane.xlu0 %1828
      %v1830 = vsel %vm1826, %v1799, -inf
      %1831 = vmax.xlane.f32.xlu0 %v1830
      %v1832 = vpop.xlane.xlu0 %1831
      %v1833 = vsel %vm1826, %v1804, -inf
      %1834 = vmax.xlane.f32.xlu0 %v1833
      %v1835 = vpop.xlane.xlu0 %1834
      %v1836 = vsel %vm1826, %v1807, -inf
      %1837 = vmax.xlane.f32.xlu0 %v1836
      %v1838 = vpop.xlane.xlu0 %1837
      %v1839 = vsel %vm1826, %v1812, -inf
      %1840 = vmax.xlane.f32.xlu0 %v1839
      %v1841 = vpop.xlane.xlu0 %1840
      %v1842 = vsel %vm1826, %v1815, -inf
      %1843 = vmax.xlane.f32.xlu0 %v1842
      %v1844 = vpop.xlane.xlu0 %1843
      %v1845 = vsel %vm1826, %v1820, -inf
      %1846 = vmax.xlane.f32.xlu0 %v1845
      %v1847 = vpop.xlane.xlu0 %1846
      %v1848 = vsel %vm1826, %v1823, -inf
      %1849 = vmax.xlane.f32.xlu0 %v1848
      %v1850 = vpop.xlane.xlu0 %1849
      %v1851 = vsub.f32 %v1796, %v1829
      %v1852 = vsub.f32 %v1799, %v1832
      %v1853 = vsub.f32 %v1804, %v1835
      %v1854 = vsub.f32 %v1807, %v1838
      %v1855 = vsub.f32 %v1812, %v1841
      %v1856 = vsub.f32 %v1815, %v1844
      %v1857 = vsub.f32 %v1820, %v1847
      %v1858 = vsub.f32 %v1823, %v1850
      %v1859 = vmul.f32 %v1851, 1.442695
      %v1860 = vpow.pop %v1859
      %v1861 = vmul.f32 %v1852, 1.442695
      %v1862 = vpow.pop %v1861
      %v1863 = vmul.f32 %v1853, 1.442695
      %v1864 = vpow.pop %v1863
      %v1865 = vmul.f32 %v1854, 1.442695
      %v1866 = vpow.pop %v1865
      %v1867 = vmul.f32 %v1855, 1.442695
      %v1868 = vpow.pop %v1867
      %v1869 = vmul.f32 %v1856, 1.442695
      %v1870 = vpow.pop %v1869
      %v1871 = vmul.f32 %v1857, 1.442695
      %v1872 = vpow.pop %v1871
      %v1873 = vmul.f32 %v1858, 1.442695
      %v1874 = vpow.pop %v1873
      %v1875 = vsel %vm1826, %v1860, 0.0
      %1876 = vadd.xlane.f32.xlu0 %v1875
      %v1877 = vpop.xlane.xlu0 %1876
      %v1878 = vsel %vm1826, %v1862, 0.0
      %1879 = vadd.xlane.f32.xlu0 %v1878
      %v1880 = vpop.xlane.xlu0 %1879
      %v1881 = vsel %vm1826, %v1864, 0.0
      %1882 = vadd.xlane.f32.xlu0 %v1881
      %v1883 = vpop.xlane.xlu0 %1882
      %v1884 = vsel %vm1826, %v1866, 0.0
      %1885 = vadd.xlane.f32.xlu0 %v1884
      %v1886 = vpop.xlane.xlu0 %1885
      %v1887 = vsel %vm1826, %v1868, 0.0
      %1888 = vadd.xlane.f32.xlu0 %v1887
      %v1889 = vpop.xlane.xlu0 %1888
      %v1890 = vsel %vm1826, %v1870, 0.0
      %1891 = vadd.xlane.f32.xlu0 %v1890
      %v1892 = vpop.xlane.xlu0 %1891
      %v1893 = vsel %vm1826, %v1872, 0.0
      %1894 = vadd.xlane.f32.xlu0 %v1893
      %v1895 = vpop.xlane.xlu0 %1894
      %v1896 = vsel %vm1826, %v1874, 0.0
      %1897 = vadd.xlane.f32.xlu0 %v1896
      %v1898 = vpop.xlane.xlu0 %1897
      %v1899 = vrcp.pop %v1877
      %v1900 = vrcp.pop %v1880
      %v1901 = vrcp.pop %v1883
      %v1902 = vrcp.pop %v1886
      %v1903 = vrcp.pop %v1889
      %v1904 = vrcp.pop %v1892
      %v1905 = vrcp.pop %v1895
      %v1906 = vrcp.pop %v1898
      %v1907 = vmul.f32 %v1860, %v1899
      %v1908 = vmul.f32 %v1862, %v1900
      %v1909 = vmul.f32 %v1864, %v1901
      %v1910 = vmul.f32 %v1866, %v1902
      %v1911 = vmul.f32 %v1868, %v1903
      %v1912 = vmul.f32 %v1870, %v1904
      %v1913 = vmul.f32 %v1872, %v1905
      %v1914 = vmul.f32 %v1874, %v1906
      %v1915 = vpack.c.bf16 %v1908, %v1907
      %v1916 = vpack.c.bf16 %v1910, %v1909
      %v1917 = vpack.c.bf16 %v1912, %v1911
      %v1918 = vpack.c.bf16 %v1914, %v1913
      %v1920 = vsel %vm1826, %v1915, 0
      %v1923 = vsel %vm1826, %v1916, 0
      %v1926 = vsel %vm1826, %v1917, 0
      %v1929 = vsel %vm1826, %v1918, 0
      %1931 = vmatprep.subr.bf16.mxu0 0
      %1932 = vmatpush1.bf16.msra.mxu0 %v1728
      %1933 = vmatprep.subr.bf16.mxu0 0
      %1934 = vmatpush1.bf16.msra.mxu0 %v1730
      %1935 = vmatprep.subr.bf16.mxu0 0
      %1936 = vmatpush1.bf16.msra.mxu0 %v1732
      %1937 = vmatprep.subr.bf16.mxu0 0
      %1938 = vmatpush1.bf16.msra.mxu0 %v1734
      %1939 = vmatprep.subr.bf16.mxu0 0
      %1940 = vmatpush1.bf16.msra.mxu0 0
      %1941 = vmatprep.subr.bf16.mxu0 0
      %1942 = vmatpush1.bf16.msra.mxu0 0
      %1943 = vmatprep.subr.bf16.mxu0 0
      %1944 = vmatpush1.bf16.msra.mxu0 0
      %1945 = vmatprep.subr.bf16.mxu0 0
      %1946 = vmatpush1.bf16.msra.mxu0 0
      %1947 = vmatprep.subr.bf16.mxu0 0
      %1948 = vmatpush1.bf16.msra.mxu0 0
      %1949 = vmatprep.subr.bf16.mxu0 0
      %1950 = vmatpush1.bf16.msra.mxu0 0
      %1951 = vmatprep.subr.bf16.mxu0 0
      %1952 = vmatpush1.bf16.msra.mxu0 0
      %1953 = vmatprep.subr.bf16.mxu0 0
      %1954 = vmatpush1.bf16.msra.mxu0 0
      %1955 = vmatprep.subr.bf16.mxu0 0
      %1956 = vmatpush1.bf16.msra.mxu0 0
      %1957 = vmatprep.subr.bf16.mxu0 0
      %1958 = vmatpush1.bf16.msra.mxu0 0
      %1959 = vmatprep.subr.bf16.mxu0 0
      %1960 = vmatpush1.bf16.msra.mxu0 0
      %1961 = vmatprep.subr.bf16.mxu0 0
      %1962 = vmatpush1.bf16.msra.mxu0 0
      %1963 = vmatprep.mubr.bf16.mxu0 0
      %1964 = vmatmul.mubr.bf16.gmra.mrb[0].mxu0 %v1920
      %v1965 = vpop.f32.mrb[0].mxu0
      %v1966 = vadd.f32 0.0, %v1965
      %v1967 = vpop.f32.mrb[0].mxu0
      %v1968 = vpop.f32.mrb[0].mxu0
      %v1969 = vadd.f32 0.0, %v1968
      %v1970 = vpop.f32.mrb[0].mxu0
      %1971 = vmatprep.mubr.bf16.mxu0 0
      %1972 = vmatmul.mubr.bf16.gmra.mrb[0].mxu0 %v1923
      %v1973 = vpop.f32.mrb[0].mxu0
      %v1974 = vadd.f32 0.0, %v1973
      %v1975 = vpop.f32.mrb[0].mxu0
      %v1976 = vpop.f32.mrb[0].mxu0
      %v1977 = vadd.f32 0.0, %v1976
      %v1978 = vpop.f32.mrb[0].mxu0
      %1979 = vmatprep.mubr.bf16.mxu0 0
      %1980 = vmatmul.mubr.bf16.gmra.mrb[0].mxu0 %v1926
      %v1981 = vpop.f32.mrb[0].mxu0
      %v1982 = vadd.f32 0.0, %v1981
      %v1983 = vpop.f32.mrb[0].mxu0
      %v1984 = vpop.f32.mrb[0].mxu0
      %v1985 = vadd.f32 0.0, %v1984
      %v1986 = vpop.f32.mrb[0].mxu0
      %1987 = vmatprep.mubr.bf16.mxu0 0
      %1988 = vmatmul.mubr.bf16.gmra.mrb[0].mxu0 %v1929
      %v1989 = vpop.f32.mrb[0].mxu0
      %v1990 = vadd.f32 0.0, %v1989
      %v1991 = vpop.f32.mrb[0].mxu0
      %v1992 = vpop.f32.mrb[0].mxu0
      %v1993 = vadd.f32 0.0, %v1992
      %v1994 = vpop.f32.mrb[0].mxu0
      %1995 = vdwg.mxu0
      %2000 = vrot.lane.b32.xlu0 %v1712, 96
      %v2001 = vpop.permute.xlu0 %2000
      %2002 = vrot.lane.b32.xlu0 %v1714, 96
      %v2003 = vpop.permute.xlu0 %2002
      %2004 = vrot.lane.b32.xlu0 %v1716, 96
      %v2005 = vpop.permute.xlu0 %2004
      %2006 = vrot.lane.b32.xlu0 %v1718, 96
      %v2007 = vpop.permute.xlu0 %2006
      %2012 = vrot.lane.b32.xlu0 %v1720, 96
      %v2013 = vpop.permute.xlu0 %2012
      %2014 = vrot.lane.b32.xlu0 %v1722, 96
      %v2015 = vpop.permute.xlu0 %2014
      %2016 = vrot.lane.b32.xlu0 %v1724, 96
      %v2017 = vpop.permute.xlu0 %2016
      %2018 = vrot.lane.b32.xlu0 %v1726, 96
      %v2019 = vpop.permute.xlu0 %2018
      %v2021 = vsel %vm1736, %v2001, 0
      %v2024 = vsel %vm1736, %v2003, 0
      %v2027 = vsel %vm1736, %v2005, 0
      %v2030 = vsel %vm1736, %v2007, 0
      %v2033 = vsel %vm1736, %v2013, 0
      %v2036 = vsel %vm1736, %v2015, 0
      %v2039 = vsel %vm1736, %v2017, 0
      %v2042 = vsel %vm1736, %v2019, 0
      %2044 = vmatprep.subr.bf16.mxu0 0
      %2045 = vmatpush1.bf16.xpose.msra.mxu0 %v2033
      %2046 = vmatprep.subr.bf16.mxu0 0
      %2047 = vmatpush1.bf16.xpose.msra.mxu0 %v2036
      %2048 = vmatprep.subr.bf16.mxu0 0
      %2049 = vmatpush1.bf16.xpose.msra.mxu0 %v2039
      %2050 = vmatprep.subr.bf16.mxu0 0
      %2051 = vmatpush1.bf16.xpose.msra.mxu0 %v2042
      %2052 = vmatprep.subr.bf16.mxu0 0
      %2053 = vmatpush1.bf16.xpose.msra.mxu0 0
      %2054 = vmatprep.subr.bf16.mxu0 0
      %2055 = vmatpush1.bf16.xpose.msra.mxu0 0
      %2056 = vmatprep.subr.bf16.mxu0 0
      %2057 = vmatpush1.bf16.xpose.msra.mxu0 0
      %2058 = vmatprep.subr.bf16.mxu0 0
      %2059 = vmatpush1.bf16.xpose.msra.mxu0 0
      %2060 = vmatprep.subr.bf16.mxu0 0
      %2061 = vmatpush1.bf16.xpose.msra.mxu0 0
      %2062 = vmatprep.subr.bf16.mxu0 0
      %2063 = vmatpush1.bf16.xpose.msra.mxu0 0
      %2064 = vmatprep.subr.bf16.mxu0 0
      %2065 = vmatpush1.bf16.xpose.msra.mxu0 0
      %2066 = vmatprep.subr.bf16.mxu0 0
      %2067 = vmatpush1.bf16.xpose.msra.mxu0 0
      %2068 = vmatprep.subr.bf16.mxu0 0
      %2069 = vmatpush1.bf16.xpose.msra.mxu0 0
      %2070 = vmatprep.subr.bf16.mxu0 0
      %2071 = vmatpush1.bf16.xpose.msra.mxu0 0
      %2072 = vmatprep.subr.bf16.mxu0 0
      %2073 = vmatpush1.bf16.xpose.msra.mxu0 0
      %2074 = vmatprep.subr.bf16.mxu0 0
      %2075 = vmatpush1.bf16.xpose.msra.mxu0 0
      %2076 = vmatprep.mubr.bf16.mxu0 0
      %2077 = vmatmul.mubr.bf16.gmra.mrb[0].mxu0 %v2021
      %v2078 = vpop.f32.mrb[0].mxu0
      %v2079 = vadd.f32 0.0, %v2078
      %v2080 = vpop.f32.mrb[0].mxu0
      %v2081 = vpop.f32.mrb[0].mxu0
      %v2082 = vadd.f32 0.0, %v2081
      %v2083 = vpop.f32.mrb[0].mxu0
      %2084 = vmatprep.mubr.bf16.mxu0 0
      %2085 = vmatmul.mubr.bf16.gmra.mrb[0].mxu0 %v2024
      %v2086 = vpop.f32.mrb[0].mxu0
      %v2087 = vadd.f32 0.0, %v2086
      %v2088 = vpop.f32.mrb[0].mxu0
      %v2089 = vpop.f32.mrb[0].mxu0
      %v2090 = vadd.f32 0.0, %v2089
      %v2091 = vpop.f32.mrb[0].mxu0
      %2092 = vmatprep.mubr.bf16.mxu0 0
      %2093 = vmatmul.mubr.bf16.gmra.mrb[0].mxu0 %v2027
      %v2094 = vpop.f32.mrb[0].mxu0
      %v2095 = vadd.f32 0.0, %v2094
      %v2096 = vpop.f32.mrb[0].mxu0
      %v2097 = vpop.f32.mrb[0].mxu0
      %v2098 = vadd.f32 0.0, %v2097
      %v2099 = vpop.f32.mrb[0].mxu0
      %2100 = vmatprep.mubr.bf16.mxu0 0
      %2101 = vmatmul.mubr.bf16.gmra.mrb[0].mxu0 %v2030
      %v2102 = vpop.f32.mrb[0].mxu0
      %v2103 = vadd.f32 0.0, %v2102
      %v2104 = vpop.f32.mrb[0].mxu0
      %v2105 = vpop.f32.mrb[0].mxu0
      %v2106 = vadd.f32 0.0, %v2105
      %v2107 = vpop.f32.mrb[0].mxu0
      %2108 = vdwg.mxu0
      %v2109 = vsel %vm1826, %v2079, -inf
      %2110 = vmax.xlane.f32.xlu0 %v2109
      %v2111 = vpop.xlane.xlu0 %2110
      %v2112 = vsel %vm1826, %v2082, -inf
      %2113 = vmax.xlane.f32.xlu0 %v2112
      %v2114 = vpop.xlane.xlu0 %2113
      %v2115 = vsel %vm1826, %v2087, -inf
      %2116 = vmax.xlane.f32.xlu0 %v2115
      %v2117 = vpop.xlane.xlu0 %2116
      %v2118 = vsel %vm1826, %v2090, -inf
      %2119 = vmax.xlane.f32.xlu0 %v2118
      %v2120 = vpop.xlane.xlu0 %2119
      %v2121 = vsel %vm1826, %v2095, -inf
      %2122 = vmax.xlane.f32.xlu0 %v2121
      %v2123 = vpop.xlane.xlu0 %2122
      %v2124 = vsel %vm1826, %v2098, -inf
      %2125 = vmax.xlane.f32.xlu0 %v2124
      %v2126 = vpop.xlane.xlu0 %2125
      %v2127 = vsel %vm1826, %v2103, -inf
      %2128 = vmax.xlane.f32.xlu0 %v2127
      %v2129 = vpop.xlane.xlu0 %2128
      %v2130 = vsel %vm1826, %v2106, -inf
      %2131 = vmax.xlane.f32.xlu0 %v2130
      %v2132 = vpop.xlane.xlu0 %2131
      %v2133 = vsub.f32 %v2079, %v2111
      %v2134 = vsub.f32 %v2082, %v2114
      %v2135 = vsub.f32 %v2087, %v2117
      %v2136 = vsub.f32 %v2090, %v2120
      %v2137 = vsub.f32 %v2095, %v2123
      %v2138 = vsub.f32 %v2098, %v2126
      %v2139 = vsub.f32 %v2103, %v2129
      %v2140 = vsub.f32 %v2106, %v2132
      %v2141 = vmul.f32 %v2133, 1.442695
      %v2142 = vpow.pop %v2141
      %v2143 = vmul.f32 %v2134, 1.442695
      %v2144 = vpow.pop %v2143
      %v2145 = vmul.f32 %v2135, 1.442695
      %v2146 = vpow.pop %v2145
      %v2147 = vmul.f32 %v2136, 1.442695
      %v2148 = vpow.pop %v2147
      %v2149 = vmul.f32 %v2137, 1.442695
      %v2150 = vpow.pop %v2149
      %v2151 = vmul.f32 %v2138, 1.442695
      %v2152 = vpow.pop %v2151
      %v2153 = vmul.f32 %v2139, 1.442695
      %v2154 = vpow.pop %v2153
      %v2155 = vmul.f32 %v2140, 1.442695
      %v2156 = vpow.pop %v2155
      %v2157 = vsel %vm1826, %v2142, 0.0
      %2158 = vadd.xlane.f32.xlu0 %v2157
      %v2159 = vpop.xlane.xlu0 %2158
      %v2160 = vsel %vm1826, %v2144, 0.0
      %2161 = vadd.xlane.f32.xlu0 %v2160
      %v2162 = vpop.xlane.xlu0 %2161
      %v2163 = vsel %vm1826, %v2146, 0.0
      %2164 = vadd.xlane.f32.xlu0 %v2163
      %v2165 = vpop.xlane.xlu0 %2164
      %v2166 = vsel %vm1826, %v2148, 0.0
      %2167 = vadd.xlane.f32.xlu0 %v2166
      %v2168 = vpop.xlane.xlu0 %2167
      %v2169 = vsel %vm1826, %v2150, 0.0
      %2170 = vadd.xlane.f32.xlu0 %v2169
      %v2171 = vpop.xlane.xlu0 %2170
      %v2172 = vsel %vm1826, %v2152, 0.0
      %2173 = vadd.xlane.f32.xlu0 %v2172
      %v2174 = vpop.xlane.xlu0 %2173
      %v2175 = vsel %vm1826, %v2154, 0.0
      %2176 = vadd.xlane.f32.xlu0 %v2175
      %v2177 = vpop.xlane.xlu0 %2176
      %v2178 = vsel %vm1826, %v2156, 0.0
      %2179 = vadd.xlane.f32.xlu0 %v2178
      %v2180 = vpop.xlane.xlu0 %2179
      %v2181 = vrcp.pop %v2159
      %v2182 = vrcp.pop %v2162
      %v2183 = vrcp.pop %v2165
      %v2184 = vrcp.pop %v2168
      %v2185 = vrcp.pop %v2171
      %v2186 = vrcp.pop %v2174
      %v2187 = vrcp.pop %v2177
      %v2188 = vrcp.pop %v2180
      %v2189 = vmul.f32 %v2142, %v2181
      %v2190 = vmul.f32 %v2144, %v2182
      %v2191 = vmul.f32 %v2146, %v2183
      %v2192 = vmul.f32 %v2148, %v2184
      %v2193 = vmul.f32 %v2150, %v2185
      %v2194 = vmul.f32 %v2152, %v2186
      %v2195 = vmul.f32 %v2154, %v2187
      %v2196 = vmul.f32 %v2156, %v2188
      %v2197 = vpack.c.bf16 %v2190, %v2189
      %v2198 = vpack.c.bf16 %v2192, %v2191
      %v2199 = vpack.c.bf16 %v2194, %v2193
      %v2200 = vpack.c.bf16 %v2196, %v2195
      %2205 = vrot.lane.b32.xlu0 %v1728, 96
      %v2206 = vpop.permute.xlu0 %2205
      %2207 = vrot.lane.b32.xlu0 %v1730, 96
      %v2208 = vpop.permute.xlu0 %2207
      %2209 = vrot.lane.b32.xlu0 %v1732, 96
      %v2210 = vpop.permute.xlu0 %2209
      %2211 = vrot.lane.b32.xlu0 %v1734, 96
      %v2212 = vpop.permute.xlu0 %2211
      %v2218 = vsel %vm1826, %v2197, 0
      %v2221 = vsel %vm1826, %v2198, 0
      %v2224 = vsel %vm1826, %v2199, 0
      %v2227 = vsel %vm1826, %v2200, 0
      %2229 = vmatprep.subr.bf16.mxu0 0
      %2230 = vmatpush1.bf16.msra.mxu0 %v2206
      %2231 = vmatprep.subr.bf16.mxu0 0
      %2232 = vmatpush1.bf16.msra.mxu0 %v2208
      %2233 = vmatprep.subr.bf16.mxu0 0
      %2234 = vmatpush1.bf16.msra.mxu0 %v2210
      %2235 = vmatprep.subr.bf16.mxu0 0
      %2236 = vmatpush1.bf16.msra.mxu0 %v2212
      %2237 = vmatprep.subr.bf16.mxu0 0
      %2238 = vmatpush1.bf16.msra.mxu0 0
      %2239 = vmatprep.subr.bf16.mxu0 0
      %2240 = vmatpush1.bf16.msra.mxu0 0
      %2241 = vmatprep.subr.bf16.mxu0 0
      %2242 = vmatpush1.bf16.msra.mxu0 0
      %2243 = vmatprep.subr.bf16.mxu0 0
      %2244 = vmatpush1.bf16.msra.mxu0 0
      %2245 = vmatprep.subr.bf16.mxu0 0
      %2246 = vmatpush1.bf16.msra.mxu0 0
      %2247 = vmatprep.subr.bf16.mxu0 0
      %2248 = vmatpush1.bf16.msra.mxu0 0
      %2249 = vmatprep.subr.bf16.mxu0 0
      %2250 = vmatpush1.bf16.msra.mxu0 0
      %2251 = vmatprep.subr.bf16.mxu0 0
      %2252 = vmatpush1.bf16.msra.mxu0 0
      %2253 = vmatprep.subr.bf16.mxu0 0
      %2254 = vmatpush1.bf16.msra.mxu0 0
      %2255 = vmatprep.subr.bf16.mxu0 0
      %2256 = vmatpush1.bf16.msra.mxu0 0
      %2257 = vmatprep.subr.bf16.mxu0 0
      %2258 = vmatpush1.bf16.msra.mxu0 0
      %2259 = vmatprep.subr.bf16.mxu0 0
      %2260 = vmatpush1.bf16.msra.mxu0 0
      %2261 = vmatprep.mubr.bf16.mxu0 0
      %2262 = vmatmul.mubr.bf16.gmra.mrb[0].mxu0 %v2218
      %v2263 = vpop.f32.mrb[0].mxu0
      %v2264 = vadd.f32 0.0, %v2263
      %v2265 = vpop.f32.mrb[0].mxu0
      %v2266 = vpop.f32.mrb[0].mxu0
      %v2267 = vadd.f32 0.0, %v2266
      %v2268 = vpop.f32.mrb[0].mxu0
      %2269 = vmatprep.mubr.bf16.mxu0 0
      %2270 = vmatmul.mubr.bf16.gmra.mrb[0].mxu0 %v2221
      %v2271 = vpop.f32.mrb[0].mxu0
      %v2272 = vadd.f32 0.0, %v2271
      %v2273 = vpop.f32.mrb[0].mxu0
      %v2274 = vpop.f32.mrb[0].mxu0
      %v2275 = vadd.f32 0.0, %v2274
      %v2276 = vpop.f32.mrb[0].mxu0
      %2277 = vmatprep.mubr.bf16.mxu0 0
      %2278 = vmatmul.mubr.bf16.gmra.mrb[0].mxu0 %v2224
      %v2279 = vpop.f32.mrb[0].mxu0
      %v2280 = vadd.f32 0.0, %v2279
      %v2281 = vpop.f32.mrb[0].mxu0
      %v2282 = vpop.f32.mrb[0].mxu0
      %v2283 = vadd.f32 0.0, %v2282
      %v2284 = vpop.f32.mrb[0].mxu0
      %2285 = vmatprep.mubr.bf16.mxu0 0
      %2286 = vmatmul.mubr.bf16.gmra.mrb[0].mxu0 %v2227
      %v2287 = vpop.f32.mrb[0].mxu0
      %v2288 = vadd.f32 0.0, %v2287
      %v2289 = vpop.f32.mrb[0].mxu0
      %v2290 = vpop.f32.mrb[0].mxu0
      %v2291 = vadd.f32 0.0, %v2290
      %v2292 = vpop.f32.mrb[0].mxu0
      %2293 = vdwg.mxu0
      %2294 = vrot.lane.b32.xlu0 %v1712, 64
      %v2295 = vpop.permute.xlu0 %2294
      %2296 = vrot.lane.b32.xlu0 %v1714, 64
      %v2297 = vpop.permute.xlu0 %2296
      %2298 = vrot.lane.b32.xlu0 %v1716, 64
      %v2299 = vpop.permute.xlu0 %2298
      %2300 = vrot.lane.b32.xlu0 %v1718, 64
      %v2301 = vpop.permute.xlu0 %2300
      %2302 = vrot.lane.b32.xlu0 %v1720, 64
      %v2303 = vpop.permute.xlu0 %2302
      %2304 = vrot.lane.b32.xlu0 %v1722, 64
      %v2305 = vpop.permute.xlu0 %2304
      %2306 = vrot.lane.b32.xlu0 %v1724, 64
      %v2307 = vpop.permute.xlu0 %2306
      %2308 = vrot.lane.b32.xlu0 %v1726, 64
      %v2309 = vpop.permute.xlu0 %2308
      %v2311 = vsel %vm1736, %v2295, 0
      %v2314 = vsel %vm1736, %v2297, 0
      %v2317 = vsel %vm1736, %v2299, 0
      %v2320 = vsel %vm1736, %v2301, 0
      %v2323 = vsel %vm1736, %v2303, 0
      %v2326 = vsel %vm1736, %v2305, 0
      %v2329 = vsel %vm1736, %v2307, 0
      %v2332 = vsel %vm1736, %v2309, 0
      %2334 = vmatprep.subr.bf16.mxu0 0
      %2335 = vmatpush1.bf16.xpose.msra.mxu0 %v2323
      %2336 = vmatprep.subr.bf16.mxu0 0
      %2337 = vmatpush1.bf16.xpose.msra.mxu0 %v2326
      %2338 = vmatprep.subr.bf16.mxu0 0
      %2339 = vmatpush1.bf16.xpose.msra.mxu0 %v2329
      %2340 = vmatprep.subr.bf16.mxu0 0
      %2341 = vmatpush1.bf16.xpose.msra.mxu0 %v2332
      %2342 = vmatprep.subr.bf16.mxu0 0
      %2343 = vmatpush1.bf16.xpose.msra.mxu0 0
      %2344 = vmatprep.subr.bf16.mxu0 0
      %2345 = vmatpush1.bf16.xpose.msra.mxu0 0
      %2346 = vmatprep.subr.bf16.mxu0 0
      %2347 = vmatpush1.bf16.xpose.msra.mxu0 0
      %2348 = vmatprep.subr.bf16.mxu0 0
      %2349 = vmatpush1.bf16.xpose.msra.mxu0 0
      %2350 = vmatprep.subr.bf16.mxu0 0
      %2351 = vmatpush1.bf16.xpose.msra.mxu0 0
      %2352 = vmatprep.subr.bf16.mxu0 0
      %2353 = vmatpush1.bf16.xpose.msra.mxu0 0
      %2354 = vmatprep.subr.bf16.mxu0 0
      %2355 = vmatpush1.bf16.xpose.msra.mxu0 0
      %2356 = vmatprep.subr.bf16.mxu0 0
      %2357 = vmatpush1.bf16.xpose.msra.mxu0 0
      %2358 = vmatprep.subr.bf16.mxu0 0
      %2359 = vmatpush1.bf16.xpose.msra.mxu0 0
      %2360 = vmatprep.subr.bf16.mxu0 0
      %2361 = vmatpush1.bf16.xpose.msra.mxu0 0
      %2362 = vmatprep.subr.bf16.mxu0 0
      %2363 = vmatpush1.bf16.xpose.msra.mxu0 0
      %2364 = vmatprep.subr.bf16.mxu0 0
      %2365 = vmatpush1.bf16.xpose.msra.mxu0 0
      %2366 = vmatprep.mubr.bf16.mxu0 0
      %2367 = vmatmul.mubr.bf16.gmra.mrb[0].mxu0 %v2311
      %v2368 = vpop.f32.mrb[0].mxu0
      %v2369 = vadd.f32 0.0, %v2368
      %v2370 = vpop.f32.mrb[0].mxu0
      %v2371 = vpop.f32.mrb[0].mxu0
      %v2372 = vadd.f32 0.0, %v2371
      %v2373 = vpop.f32.mrb[0].mxu0
      %2374 = vmatprep.mubr.bf16.mxu0 0
      %2375 = vmatmul.mubr.bf16.gmra.mrb[0].mxu0 %v2314
      %v2376 = vpop.f32.mrb[0].mxu0
      %v2377 = vadd.f32 0.0, %v2376
      %v2378 = vpop.f32.mrb[0].mxu0
      %v2379 = vpop.f32.mrb[0].mxu0
      %v2380 = vadd.f32 0.0, %v2379
      %v2381 = vpop.f32.mrb[0].mxu0
      %2382 = vmatprep.mubr.bf16.mxu0 0
      %2383 = vmatmul.mubr.bf16.gmra.mrb[0].mxu0 %v2317
      %v2384 = vpop.f32.mrb[0].mxu0
      %v2385 = vadd.f32 0.0, %v2384
      %v2386 = vpop.f32.mrb[0].mxu0
      %v2387 = vpop.f32.mrb[0].mxu0
      %v2388 = vadd.f32 0.0, %v2387
      %v2389 = vpop.f32.mrb[0].mxu0
      %2390 = vmatprep.mubr.bf16.mxu0 0
      %2391 = vmatmul.mubr.bf16.gmra.mrb[0].mxu0 %v2320
      %v2392 = vpop.f32.mrb[0].mxu0
      %v2393 = vadd.f32 0.0, %v2392
      %v2394 = vpop.f32.mrb[0].mxu0
      %v2395 = vpop.f32.mrb[0].mxu0
      %v2396 = vadd.f32 0.0, %v2395
      %v2397 = vpop.f32.mrb[0].mxu0
      %2398 = vdwg.mxu0
      %v2399 = vsel %vm1826, %v2369, -inf
      %2400 = vmax.xlane.f32.xlu0 %v2399
      %v2401 = vpop.xlane.xlu0 %2400
      %v2402 = vsel %vm1826, %v2372, -inf
      %2403 = vmax.xlane.f32.xlu0 %v2402
      %v2404 = vpop.xlane.xlu0 %2403
      %v2405 = vsel %vm1826, %v2377, -inf
      %2406 = vmax.xlane.f32.xlu0 %v2405
      %v2407 = vpop.xlane.xlu0 %2406
      %v2408 = vsel %vm1826, %v2380, -inf
      %2409 = vmax.xlane.f32.xlu0 %v2408
      %v2410 = vpop.xlane.xlu0 %2409
      %v2411 = vsel %vm1826, %v2385, -inf
      %2412 = vmax.xlane.f32.xlu0 %v2411
      %v2413 = vpop.xlane.xlu0 %2412
      %v2414 = vsel %vm1826, %v2388, -inf
      %2415 = vmax.xlane.f32.xlu0 %v2414
      %v2416 = vpop.xlane.xlu0 %2415
      %v2417 = vsel %vm1826, %v2393, -inf
      %2418 = vmax.xlane.f32.xlu0 %v2417
      %v2419 = vpop.xlane.xlu0 %2418
      %v2420 = vsel %vm1826, %v2396, -inf
      %2421 = vmax.xlane.f32.xlu0 %v2420
      %v2422 = vpop.xlane.xlu0 %2421
      %v2423 = vsub.f32 %v2369, %v2401
      %v2424 = vsub.f32 %v2372, %v2404
      %v2425 = vsub.f32 %v2377, %v2407
      %v2426 = vsub.f32 %v2380, %v2410
      %v2427 = vsub.f32 %v2385, %v2413
      %v2428 = vsub.f32 %v2388, %v2416
      %v2429 = vsub.f32 %v2393, %v2419
      %v2430 = vsub.f32 %v2396, %v2422
      %v2431 = vmul.f32 %v2423, 1.442695
      %v2432 = vpow.pop %v2431
      %v2433 = vmul.f32 %v2424, 1.442695
      %v2434 = vpow.pop %v2433
      %v2435 = vmul.f32 %v2425, 1.442695
      %v2436 = vpow.pop %v2435
      %v2437 = vmul.f32 %v2426, 1.442695
      %v2438 = vpow.pop %v2437
      %v2439 = vmul.f32 %v2427, 1.442695
      %v2440 = vpow.pop %v2439
      %v2441 = vmul.f32 %v2428, 1.442695
      %v2442 = vpow.pop %v2441
      %v2443 = vmul.f32 %v2429, 1.442695
      %v2444 = vpow.pop %v2443
      %v2445 = vmul.f32 %v2430, 1.442695
      %v2446 = vpow.pop %v2445
      %v2447 = vsel %vm1826, %v2432, 0.0
      %2448 = vadd.xlane.f32.xlu0 %v2447
      %v2449 = vpop.xlane.xlu0 %2448
      %v2450 = vsel %vm1826, %v2434, 0.0
      %2451 = vadd.xlane.f32.xlu0 %v2450
      %v2452 = vpop.xlane.xlu0 %2451
      %v2453 = vsel %vm1826, %v2436, 0.0
      %2454 = vadd.xlane.f32.xlu0 %v2453
      %v2455 = vpop.xlane.xlu0 %2454
      %v2456 = vsel %vm1826, %v2438, 0.0
      %2457 = vadd.xlane.f32.xlu0 %v2456
      %v2458 = vpop.xlane.xlu0 %2457
      %v2459 = vsel %vm1826, %v2440, 0.0
      %2460 = vadd.xlane.f32.xlu0 %v2459
      %v2461 = vpop.xlane.xlu0 %2460
      %v2462 = vsel %vm1826, %v2442, 0.0
      %2463 = vadd.xlane.f32.xlu0 %v2462
      %v2464 = vpop.xlane.xlu0 %2463
      %v2465 = vsel %vm1826, %v2444, 0.0
      %2466 = vadd.xlane.f32.xlu0 %v2465
      %v2467 = vpop.xlane.xlu0 %2466
      %v2468 = vsel %vm1826, %v2446, 0.0
      %2469 = vadd.xlane.f32.xlu0 %v2468
      %v2470 = vpop.xlane.xlu0 %2469
      %v2471 = vrcp.pop %v2449
      %v2472 = vrcp.pop %v2452
      %v2473 = vrcp.pop %v2455
      %v2474 = vrcp.pop %v2458
      %v2475 = vrcp.pop %v2461
      %v2476 = vrcp.pop %v2464
      %v2477 = vrcp.pop %v2467
      %v2478 = vrcp.pop %v2470
      %v2479 = vmul.f32 %v2432, %v2471
      %v2480 = vmul.f32 %v2434, %v2472
      %v2481 = vmul.f32 %v2436, %v2473
      %v2482 = vmul.f32 %v2438, %v2474
      %v2483 = vmul.f32 %v2440, %v2475
      %v2484 = vmul.f32 %v2442, %v2476
      %v2485 = vmul.f32 %v2444, %v2477
      %v2486 = vmul.f32 %v2446, %v2478
      %v2487 = vpack.c.bf16 %v2480, %v2479
      %v2488 = vpack.c.bf16 %v2482, %v2481
      %v2489 = vpack.c.bf16 %v2484, %v2483
      %v2490 = vpack.c.bf16 %v2486, %v2485
      %2491 = vrot.lane.b32.xlu0 %v1728, 64
      %v2492 = vpop.permute.xlu0 %2491
      %2493 = vrot.lane.b32.xlu0 %v1730, 64
      %v2494 = vpop.permute.xlu0 %2493
      %2495 = vrot.lane.b32.xlu0 %v1732, 64
      %v2496 = vpop.permute.xlu0 %2495
      %2497 = vrot.lane.b32.xlu0 %v1734, 64
      %v2498 = vpop.permute.xlu0 %2497
      %v2504 = vsel %vm1826, %v2487, 0
      %v2507 = vsel %vm1826, %v2488, 0
      %v2510 = vsel %vm1826, %v2489, 0
      %v2513 = vsel %vm1826, %v2490, 0
      %2515 = vmatprep.subr.bf16.mxu0 0
      %2516 = vmatpush1.bf16.msra.mxu0 %v2492
      %2517 = vmatprep.subr.bf16.mxu0 0
      %2518 = vmatpush1.bf16.msra.mxu0 %v2494
      %2519 = vmatprep.subr.bf16.mxu0 0
      %2520 = vmatpush1.bf16.msra.mxu0 %v2496
      %2521 = vmatprep.subr.bf16.mxu0 0
      %2522 = vmatpush1.bf16.msra.mxu0 %v2498
      %2523 = vmatprep.subr.bf16.mxu0 0
      %2524 = vmatpush1.bf16.msra.mxu0 0
      %2525 = vmatprep.subr.bf16.mxu0 0
      %2526 = vmatpush1.bf16.msra.mxu0 0
      %2527 = vmatprep.subr.bf16.mxu0 0
      %2528 = vmatpush1.bf16.msra.mxu0 0
      %2529 = vmatprep.subr.bf16.mxu0 0
      %2530 = vmatpush1.bf16.msra.mxu0 0
      %2531 = vmatprep.subr.bf16.mxu0 0
      %2532 = vmatpush1.bf16.msra.mxu0 0
      %2533 = vmatprep.subr.bf16.mxu0 0
      %2534 = vmatpush1.bf16.msra.mxu0 0
      %2535 = vmatprep.subr.bf16.mxu0 0
      %2536 = vmatpush1.bf16.msra.mxu0 0
      %2537 = vmatprep.subr.bf16.mxu0 0
      %2538 = vmatpush1.bf16.msra.mxu0 0
      %2539 = vmatprep.subr.bf16.mxu0 0
      %2540 = vmatpush1.bf16.msra.mxu0 0
      %2541 = vmatprep.subr.bf16.mxu0 0
      %2542 = vmatpush1.bf16.msra.mxu0 0
      %2543 = vmatprep.subr.bf16.mxu0 0
      %2544 = vmatpush1.bf16.msra.mxu0 0
      %2545 = vmatprep.subr.bf16.mxu0 0
      %2546 = vmatpush1.bf16.msra.mxu0 0
      %2547 = vmatprep.mubr.bf16.mxu0 0
      %2548 = vmatmul.mubr.bf16.gmra.mrb[0].mxu0 %v2504
      %v2549 = vpop.f32.mrb[0].mxu0
      %v2550 = vadd.f32 0.0, %v2549
      %v2551 = vpop.f32.mrb[0].mxu0
      %v2552 = vpop.f32.mrb[0].mxu0
      %v2553 = vadd.f32 0.0, %v2552
      %v2554 = vpop.f32.mrb[0].mxu0
      %2555 = vmatprep.mubr.bf16.mxu0 0
      %2556 = vmatmul.mubr.bf16.gmra.mrb[0].mxu0 %v2507
      %v2557 = vpop.f32.mrb[0].mxu0
      %v2558 = vadd.f32 0.0, %v2557
      %v2559 = vpop.f32.mrb[0].mxu0
      %v2560 = vpop.f32.mrb[0].mxu0
      %v2561 = vadd.f32 0.0, %v2560
      %v2562 = vpop.f32.mrb[0].mxu0
      %2563 = vmatprep.mubr.bf16.mxu0 0
      %2564 = vmatmul.mubr.bf16.gmra.mrb[0].mxu0 %v2510
      %v2565 = vpop.f32.mrb[0].mxu0
      %v2566 = vadd.f32 0.0, %v2565
      %v2567 = vpop.f32.mrb[0].mxu0
      %v2568 = vpop.f32.mrb[0].mxu0
      %v2569 = vadd.f32 0.0, %v2568
      %v2570 = vpop.f32.mrb[0].mxu0
      %2571 = vmatprep.mubr.bf16.mxu0 0
      %2572 = vmatmul.mubr.bf16.gmra.mrb[0].mxu0 %v2513
      %v2573 = vpop.f32.mrb[0].mxu0
      %v2574 = vadd.f32 0.0, %v2573
      %v2575 = vpop.f32.mrb[0].mxu0
      %v2576 = vpop.f32.mrb[0].mxu0
      %v2577 = vadd.f32 0.0, %v2576
      %v2578 = vpop.f32.mrb[0].mxu0
      %2579 = vdwg.mxu0
      %2580 = vrot.lane.b32.xlu0 %v1712, 32
      %v2581 = vpop.permute.xlu0 %2580
      %2582 = vrot.lane.b32.xlu0 %v1714, 32
      %v2583 = vpop.permute.xlu0 %2582
      %2584 = vrot.lane.b32.xlu0 %v1716, 32
      %v2585 = vpop.permute.xlu0 %2584
      %2586 = vrot.lane.b32.xlu0 %v1718, 32
      %v2587 = vpop.permute.xlu0 %2586
      %2588 = vrot.lane.b32.xlu0 %v1720, 32
      %v2589 = vpop.permute.xlu0 %2588
      %2590 = vrot.lane.b32.xlu0 %v1722, 32
      %v2591 = vpop.permute.xlu0 %2590
      %2592 = vrot.lane.b32.xlu0 %v1724, 32
      %v2593 = vpop.permute.xlu0 %2592
      %2594 = vrot.lane.b32.xlu0 %v1726, 32
      %v2595 = vpop.permute.xlu0 %2594
      %v2597 = vsel %vm1736, %v2581, 0
      %v2600 = vsel %vm1736, %v2583, 0
      %v2603 = vsel %vm1736, %v2585, 0
      %v2606 = vsel %vm1736, %v2587, 0
      %v2609 = vsel %vm1736, %v2589, 0
      %v2612 = vsel %vm1736, %v2591, 0
      %v2615 = vsel %vm1736, %v2593, 0
      %v2618 = vsel %vm1736, %v2595, 0
      %2620 = vmatprep.subr.bf16.mxu0 0
      %2621 = vmatpush1.bf16.xpose.msra.mxu0 %v2609
      %2622 = vmatprep.subr.bf16.mxu0 0
      %2623 = vmatpush1.bf16.xpose.msra.mxu0 %v2612
      %2624 = vmatprep.subr.bf16.mxu0 0
      %2625 = vmatpush1.bf16.xpose.msra.mxu0 %v2615
      %2626 = vmatprep.subr.bf16.mxu0 0
      %2627 = vmatpush1.bf16.xpose.msra.mxu0 %v2618
      %2628 = vmatprep.subr.bf16.mxu0 0
      %2629 = vmatpush1.bf16.xpose.msra.mxu0 0
      %2630 = vmatprep.subr.bf16.mxu0 0
      %2631 = vmatpush1.bf16.xpose.msra.mxu0 0
      %2632 = vmatprep.subr.bf16.mxu0 0
      %2633 = vmatpush1.bf16.xpose.msra.mxu0 0
      %2634 = vmatprep.subr.bf16.mxu0 0
      %2635 = vmatpush1.bf16.xpose.msra.mxu0 0
      %2636 = vmatprep.subr.bf16.mxu0 0
      %2637 = vmatpush1.bf16.xpose.msra.mxu0 0
      %2638 = vmatprep.subr.bf16.mxu0 0
      %2639 = vmatpush1.bf16.xpose.msra.mxu0 0
      %2640 = vmatprep.subr.bf16.mxu0 0
      %2641 = vmatpush1.bf16.xpose.msra.mxu0 0
      %2642 = vmatprep.subr.bf16.mxu0 0
      %2643 = vmatpush1.bf16.xpose.msra.mxu0 0
      %2644 = vmatprep.subr.bf16.mxu0 0
      %2645 = vmatpush1.bf16.xpose.msra.mxu0 0
      %2646 = vmatprep.subr.bf16.mxu0 0
      %2647 = vmatpush1.bf16.xpose.msra.mxu0 0
      %2648 = vmatprep.subr.bf16.mxu0 0
      %2649 = vmatpush1.bf16.xpose.msra.mxu0 0
      %2650 = vmatprep.subr.bf16.mxu0 0
      %2651 = vmatpush1.bf16.xpose.msra.mxu0 0
      %2652 = vmatprep.mubr.bf16.mxu0 0
      %2653 = vmatmul.mubr.bf16.gmra.mrb[0].mxu0 %v2597
      %v2654 = vpop.f32.mrb[0].mxu0
      %v2655 = vadd.f32 0.0, %v2654
      %v2656 = vpop.f32.mrb[0].mxu0
      %v2657 = vpop.f32.mrb[0].mxu0
      %v2658 = vadd.f32 0.0, %v2657
      %v2659 = vpop.f32.mrb[0].mxu0
      %2660 = vmatprep.mubr.bf16.mxu0 0
      %2661 = vmatmul.mubr.bf16.gmra.mrb[0].mxu0 %v2600
      %v2662 = vpop.f32.mrb[0].mxu0
      %v2663 = vadd.f32 0.0, %v2662
      %v2664 = vpop.f32.mrb[0].mxu0
      %v2665 = vpop.f32.mrb[0].mxu0
      %v2666 = vadd.f32 0.0, %v2665
      %v2667 = vpop.f32.mrb[0].mxu0
      %2668 = vmatprep.mubr.bf16.mxu0 0
      %2669 = vmatmul.mubr.bf16.gmra.mrb[0].mxu0 %v2603
      %v2670 = vpop.f32.mrb[0].mxu0
      %v2671 = vadd.f32 0.0, %v2670
      %v2672 = vpop.f32.mrb[0].mxu0
      %v2673 = vpop.f32.mrb[0].mxu0
      %v2674 = vadd.f32 0.0, %v2673
      %v2675 = vpop.f32.mrb[0].mxu0
      %2676 = vmatprep.mubr.bf16.mxu0 0
      %2677 = vmatmul.mubr.bf16.gmra.mrb[0].mxu0 %v2606
      %v2678 = vpop.f32.mrb[0].mxu0
      %v2679 = vadd.f32 0.0, %v2678
      %v2680 = vpop.f32.mrb[0].mxu0
      %v2681 = vpop.f32.mrb[0].mxu0
      %v2682 = vadd.f32 0.0, %v2681
      %v2683 = vpop.f32.mrb[0].mxu0
      %2684 = vdwg.mxu0
      %v2685 = vsel %vm1826, %v2655, -inf
      %2686 = vmax.xlane.f32.xlu0 %v2685
      %v2687 = vpop.xlane.xlu0 %2686
      %v2688 = vsel %vm1826, %v2658, -inf
      %2689 = vmax.xlane.f32.xlu0 %v2688
      %v2690 = vpop.xlane.xlu0 %2689
      %v2691 = vsel %vm1826, %v2663, -inf
      %2692 = vmax.xlane.f32.xlu0 %v2691
      %v2693 = vpop.xlane.xlu0 %2692
      %v2694 = vsel %vm1826, %v2666, -inf
      %2695 = vmax.xlane.f32.xlu0 %v2694
      %v2696 = vpop.xlane.xlu0 %2695
      %v2697 = vsel %vm1826, %v2671, -inf
      %2698 = vmax.xlane.f32.xlu0 %v2697
      %v2699 = vpop.xlane.xlu0 %2698
      %v2700 = vsel %vm1826, %v2674, -inf
      %2701 = vmax.xlane.f32.xlu0 %v2700
      %v2702 = vpop.xlane.xlu0 %2701
      %v2703 = vsel %vm1826, %v2679, -inf
      %2704 = vmax.xlane.f32.xlu0 %v2703
      %v2705 = vpop.xlane.xlu0 %2704
      %v2706 = vsel %vm1826, %v2682, -inf
      %2707 = vmax.xlane.f32.xlu0 %v2706
      %v2708 = vpop.xlane.xlu0 %2707
      %v2709 = vsub.f32 %v2655, %v2687
      %v2710 = vsub.f32 %v2658, %v2690
      %v2711 = vsub.f32 %v2663, %v2693
      %v2712 = vsub.f32 %v2666, %v2696
      %v2713 = vsub.f32 %v2671, %v2699
      %v2714 = vsub.f32 %v2674, %v2702
      %v2715 = vsub.f32 %v2679, %v2705
      %v2716 = vsub.f32 %v2682, %v2708
      %v2717 = vmul.f32 %v2709, 1.442695
      %v2718 = vpow.pop %v2717
      %v2719 = vmul.f32 %v2710, 1.442695
      %v2720 = vpow.pop %v2719
      %v2721 = vmul.f32 %v2711, 1.442695
      %v2722 = vpow.pop %v2721
      %v2723 = vmul.f32 %v2712, 1.442695
      %v2724 = vpow.pop %v2723
      %v2725 = vmul.f32 %v2713, 1.442695
      %v2726 = vpow.pop %v2725
      %v2727 = vmul.f32 %v2714, 1.442695
      %v2728 = vpow.pop %v2727
      %v2729 = vmul.f32 %v2715, 1.442695
      %v2730 = vpow.pop %v2729
      %v2731 = vmul.f32 %v2716, 1.442695
      %v2732 = vpow.pop %v2731
      %v2733 = vsel %vm1826, %v2718, 0.0
      %2734 = vadd.xlane.f32.xlu0 %v2733
      %v2735 = vpop.xlane.xlu0 %2734
      %v2736 = vsel %vm1826, %v2720, 0.0
      %2737 = vadd.xlane.f32.xlu0 %v2736
      %v2738 = vpop.xlane.xlu0 %2737
      %v2739 = vsel %vm1826, %v2722, 0.0
      %2740 = vadd.xlane.f32.xlu0 %v2739
      %v2741 = vpop.xlane.xlu0 %2740
      %v2742 = vsel %vm1826, %v2724, 0.0
      %2743 = vadd.xlane.f32.xlu0 %v2742
      %v2744 = vpop.xlane.xlu0 %2743
      %v2745 = vsel %vm1826, %v2726, 0.0
      %2746 = vadd.xlane.f32.xlu0 %v2745
      %v2747 = vpop.xlane.xlu0 %2746
      %v2748 = vsel %vm1826, %v2728, 0.0
      %2749 = vadd.xlane.f32.xlu0 %v2748
      %v2750 = vpop.xlane.xlu0 %2749
      %v2751 = vsel %vm1826, %v2730, 0.0
      %2752 = vadd.xlane.f32.xlu0 %v2751
      %v2753 = vpop.xlane.xlu0 %2752
      %v2754 = vsel %vm1826, %v2732, 0.0
      %2755 = vadd.xlane.f32.xlu0 %v2754
      %v2756 = vpop.xlane.xlu0 %2755
      %v2757 = vrcp.pop %v2735
      %v2758 = vrcp.pop %v2738
      %v2759 = vrcp.pop %v2741
      %v2760 = vrcp.pop %v2744
      %v2761 = vrcp.pop %v2747
      %v2762 = vrcp.pop %v2750
      %v2763 = vrcp.pop %v2753
      %v2764 = vrcp.pop %v2756
      %v2765 = vmul.f32 %v2718, %v2757
      %v2766 = vmul.f32 %v2720, %v2758
      %v2767 = vmul.f32 %v2722, %v2759
      %v2768 = vmul.f32 %v2724, %v2760
      %v2769 = vmul.f32 %v2726, %v2761
      %v2770 = vmul.f32 %v2728, %v2762
      %v2771 = vmul.f32 %v2730, %v2763
      %v2772 = vmul.f32 %v2732, %v2764
      %v2773 = vpack.c.bf16 %v2766, %v2765
      %v2774 = vpack.c.bf16 %v2768, %v2767
      %v2775 = vpack.c.bf16 %v2770, %v2769
      %v2776 = vpack.c.bf16 %v2772, %v2771
      %2777 = vrot.lane.b32.xlu0 %v1728, 32
      %v2778 = vpop.permute.xlu0 %2777
      %2779 = vrot.lane.b32.xlu0 %v1730, 32
      %v2780 = vpop.permute.xlu0 %2779
      %2781 = vrot.lane.b32.xlu0 %v1732, 32
      %v2782 = vpop.permute.xlu0 %2781
      %2783 = vrot.lane.b32.xlu0 %v1734, 32
      %v2784 = vpop.permute.xlu0 %2783
      %v2790 = vsel %vm1826, %v2773, 0
      %v2793 = vsel %vm1826, %v2774, 0
      %v2796 = vsel %vm1826, %v2775, 0
      %v2799 = vsel %vm1826, %v2776, 0
      %2801 = vmatprep.subr.bf16.mxu0 0
      %2802 = vmatpush1.bf16.msra.mxu0 %v2778
      %2803 = vmatprep.subr.bf16.mxu0 0
      %2804 = vmatpush1.bf16.msra.mxu0 %v2780
      %2805 = vmatprep.subr.bf16.mxu0 0
      %2806 = vmatpush1.bf16.msra.mxu0 %v2782
      %2807 = vmatprep.subr.bf16.mxu0 0
      %2808 = vmatpush1.bf16.msra.mxu0 %v2784
      %2809 = vmatprep.subr.bf16.mxu0 0
      %2810 = vmatpush1.bf16.msra.mxu0 0
      %2811 = vmatprep.subr.bf16.mxu0 0
      %2812 = vmatpush1.bf16.msra.mxu0 0
      %2813 = vmatprep.subr.bf16.mxu0 0
      %2814 = vmatpush1.bf16.msra.mxu0 0
      %2815 = vmatprep.subr.bf16.mxu0 0
      %2816 = vmatpush1.bf16.msra.mxu0 0
      %2817 = vmatprep.subr.bf16.mxu0 0
      %2818 = vmatpush1.bf16.msra.mxu0 0
      %2819 = vmatprep.subr.bf16.mxu0 0
      %2820 = vmatpush1.bf16.msra.mxu0 0
      %2821 = vmatprep.subr.bf16.mxu0 0
      %2822 = vmatpush1.bf16.msra.mxu0 0
      %2823 = vmatprep.subr.bf16.mxu0 0
      %2824 = vmatpush1.bf16.msra.mxu0 0
      %2825 = vmatprep.subr.bf16.mxu0 0
      %2826 = vmatpush1.bf16.msra.mxu0 0
      %2827 = vmatprep.subr.bf16.mxu0 0
      %2828 = vmatpush1.bf16.msra.mxu0 0
      %2829 = vmatprep.subr.bf16.mxu0 0
      %2830 = vmatpush1.bf16.msra.mxu0 0
      %2831 = vmatprep.subr.bf16.mxu0 0
      %2832 = vmatpush1.bf16.msra.mxu0 0
      %2833 = vmatprep.mubr.bf16.mxu0 0
      %2834 = vmatmul.mubr.bf16.gmra.mrb[0].mxu0 %v2790
      %v2835 = vpop.f32.mrb[0].mxu0
      %v2836 = vadd.f32 0.0, %v2835
      %v2837 = vpop.f32.mrb[0].mxu0
      %v2838 = vpop.f32.mrb[0].mxu0
      %v2839 = vadd.f32 0.0, %v2838
      %v2840 = vpop.f32.mrb[0].mxu0
      %2841 = vmatprep.mubr.bf16.mxu0 0
      %2842 = vmatmul.mubr.bf16.gmra.mrb[0].mxu0 %v2793
      %v2843 = vpop.f32.mrb[0].mxu0
      %v2844 = vadd.f32 0.0, %v2843
      %v2845 = vpop.f32.mrb[0].mxu0
      %v2846 = vpop.f32.mrb[0].mxu0
      %v2847 = vadd.f32 0.0, %v2846
      %v2848 = vpop.f32.mrb[0].mxu0
      %2849 = vmatprep.mubr.bf16.mxu0 0
      %2850 = vmatmul.mubr.bf16.gmra.mrb[0].mxu0 %v2796
      %v2851 = vpop.f32.mrb[0].mxu0
      %v2852 = vadd.f32 0.0, %v2851
      %v2853 = vpop.f32.mrb[0].mxu0
      %v2854 = vpop.f32.mrb[0].mxu0
      %v2855 = vadd.f32 0.0, %v2854
      %v2856 = vpop.f32.mrb[0].mxu0
      %2857 = vmatprep.mubr.bf16.mxu0 0
      %2858 = vmatmul.mubr.bf16.gmra.mrb[0].mxu0 %v2799
      %v2859 = vpop.f32.mrb[0].mxu0
      %v2860 = vadd.f32 0.0, %v2859
      %v2861 = vpop.f32.mrb[0].mxu0
      %v2862 = vpop.f32.mrb[0].mxu0
      %v2863 = vadd.f32 0.0, %v2862
      %v2864 = vpop.f32.mrb[0].mxu0
      %2865 = vdwg.mxu0
      %v2867 = vsel %vm1736, %v1713, 0
      %v2870 = vsel %vm1736, %v1715, 0
      %v2873 = vsel %vm1736, %v1717, 0
      %v2876 = vsel %vm1736, %v1719, 0
      %v2879 = vsel %vm1736, %v1721, 0
      %v2882 = vsel %vm1736, %v1723, 0
      %v2885 = vsel %vm1736, %v1725, 0
      %v2888 = vsel %vm1736, %v1727, 0
      %2890 = vmatprep.subr.bf16.mxu0 0
      %2891 = vmatpush1.bf16.xpose.msra.mxu0 %v2879
      %2892 = vmatprep.subr.bf16.mxu0 0
      %2893 = vmatpush1.bf16.xpose.msra.mxu0 %v2882
      %2894 = vmatprep.subr.bf16.mxu0 0
      %2895 = vmatpush1.bf16.xpose.msra.mxu0 %v2885
      %2896 = vmatprep.subr.bf16.mxu0 0
      %2897 = vmatpush1.bf16.xpose.msra.mxu0 %v2888
      %2898 = vmatprep.subr.bf16.mxu0 0
      %2899 = vmatpush1.bf16.xpose.msra.mxu0 0
      %2900 = vmatprep.subr.bf16.mxu0 0
      %2901 = vmatpush1.bf16.xpose.msra.mxu0 0
      %2902 = vmatprep.subr.bf16.mxu0 0
      %2903 = vmatpush1.bf16.xpose.msra.mxu0 0
      %2904 = vmatprep.subr.bf16.mxu0 0
      %2905 = vmatpush1.bf16.xpose.msra.mxu0 0
      %2906 = vmatprep.subr.bf16.mxu0 0
      %2907 = vmatpush1.bf16.xpose.msra.mxu0 0
      %2908 = vmatprep.subr.bf16.mxu0 0
      %2909 = vmatpush1.bf16.xpose.msra.mxu0 0
      %2910 = vmatprep.subr.bf16.mxu0 0
      %2911 = vmatpush1.bf16.xpose.msra.mxu0 0
      %2912 = vmatprep.subr.bf16.mxu0 0
      %2913 = vmatpush1.bf16.xpose.msra.mxu0 0
      %2914 = vmatprep.subr.bf16.mxu0 0
      %2915 = vmatpush1.bf16.xpose.msra.mxu0 0
      %2916 = vmatprep.subr.bf16.mxu0 0
      %2917 = vmatpush1.bf16.xpose.msra.mxu0 0
      %2918 = vmatprep.subr.bf16.mxu0 0
      %2919 = vmatpush1.bf16.xpose.msra.mxu0 0
      %2920 = vmatprep.subr.bf16.mxu0 0
      %2921 = vmatpush1.bf16.xpose.msra.mxu0 0
      %2922 = vmatprep.mubr.bf16.mxu0 0
      %2923 = vmatmul.mubr.bf16.gmra.mrb[0].mxu0 %v2867
      %v2924 = vpop.f32.mrb[0].mxu0
      %v2925 = vadd.f32 0.0, %v2924
      %v2926 = vpop.f32.mrb[0].mxu0
      %v2927 = vpop.f32.mrb[0].mxu0
      %v2928 = vadd.f32 0.0, %v2927
      %v2929 = vpop.f32.mrb[0].mxu0
      %2930 = vmatprep.mubr.bf16.mxu0 0
      %2931 = vmatmul.mubr.bf16.gmra.mrb[0].mxu0 %v2870
      %v2932 = vpop.f32.mrb[0].mxu0
      %v2933 = vadd.f32 0.0, %v2932
      %v2934 = vpop.f32.mrb[0].mxu0
      %v2935 = vpop.f32.mrb[0].mxu0
      %v2936 = vadd.f32 0.0, %v2935
      %v2937 = vpop.f32.mrb[0].mxu0
      %2938 = vmatprep.mubr.bf16.mxu0 0
      %2939 = vmatmul.mubr.bf16.gmra.mrb[0].mxu0 %v2873
      %v2940 = vpop.f32.mrb[0].mxu0
      %v2941 = vadd.f32 0.0, %v2940
      %v2942 = vpop.f32.mrb[0].mxu0
      %v2943 = vpop.f32.mrb[0].mxu0
      %v2944 = vadd.f32 0.0, %v2943
      %v2945 = vpop.f32.mrb[0].mxu0
      %2946 = vmatprep.mubr.bf16.mxu0 0
      %2947 = vmatmul.mubr.bf16.gmra.mrb[0].mxu0 %v2876
      %v2948 = vpop.f32.mrb[0].mxu0
      %v2949 = vadd.f32 0.0, %v2948
      %v2950 = vpop.f32.mrb[0].mxu0
      %v2951 = vpop.f32.mrb[0].mxu0
      %v2952 = vadd.f32 0.0, %v2951
      %v2953 = vpop.f32.mrb[0].mxu0
      %2954 = vdwg.mxu0
      %v2955 = vsel %vm1826, %v2925, -inf
      %2956 = vmax.xlane.f32.xlu0 %v2955
      %v2957 = vpop.xlane.xlu0 %2956
      %v2958 = vsel %vm1826, %v2928, -inf
      %2959 = vmax.xlane.f32.xlu0 %v2958
      %v2960 = vpop.xlane.xlu0 %2959
      %v2961 = vsel %vm1826, %v2933, -inf
      %2962 = vmax.xlane.f32.xlu0 %v2961
      %v2963 = vpop.xlane.xlu0 %2962
      %v2964 = vsel %vm1826, %v2936, -inf
      %2965 = vmax.xlane.f32.xlu0 %v2964
      %v2966 = vpop.xlane.xlu0 %2965
      %v2967 = vsel %vm1826, %v2941, -inf
      %2968 = vmax.xlane.f32.xlu0 %v2967
      %v2969 = vpop.xlane.xlu0 %2968
      %v2970 = vsel %vm1826, %v2944, -inf
      %2971 = vmax.xlane.f32.xlu0 %v2970
      %v2972 = vpop.xlane.xlu0 %2971
      %v2973 = vsel %vm1826, %v2949, -inf
      %2974 = vmax.xlane.f32.xlu0 %v2973
      %v2975 = vpop.xlane.xlu0 %2974
      %v2976 = vsel %vm1826, %v2952, -inf
      %2977 = vmax.xlane.f32.xlu0 %v2976
      %v2978 = vpop.xlane.xlu0 %2977
      %v2979 = vsub.f32 %v2925, %v2957
      %v2980 = vsub.f32 %v2928, %v2960
      %v2981 = vsub.f32 %v2933, %v2963
      %v2982 = vsub.f32 %v2936, %v2966
      %v2983 = vsub.f32 %v2941, %v2969
      %v2984 = vsub.f32 %v2944, %v2972
      %v2985 = vsub.f32 %v2949, %v2975
      %v2986 = vsub.f32 %v2952, %v2978
      %v2987 = vmul.f32 %v2979, 1.442695
      %v2988 = vpow.pop %v2987
      %v2989 = vmul.f32 %v2980, 1.442695
      %v2990 = vpow.pop %v2989
      %v2991 = vmul.f32 %v2981, 1.442695
      %v2992 = vpow.pop %v2991
      %v2993 = vmul.f32 %v2982, 1.442695
      %v2994 = vpow.pop %v2993
      %v2995 = vmul.f32 %v2983, 1.442695
      %v2996 = vpow.pop %v2995
      %v2997 = vmul.f32 %v2984, 1.442695
      %v2998 = vpow.pop %v2997
      %v2999 = vmul.f32 %v2985, 1.442695
      %v3000 = vpow.pop %v2999
      %v3001 = vmul.f32 %v2986, 1.442695
      %v3002 = vpow.pop %v3001
      %v3003 = vsel %vm1826, %v2988, 0.0
      %3004 = vadd.xlane.f32.xlu0 %v3003
      %v3005 = vpop.xlane.xlu0 %3004
      %v3006 = vsel %vm1826, %v2990, 0.0
      %3007 = vadd.xlane.f32.xlu0 %v3006
      %v3008 = vpop.xlane.xlu0 %3007
      %v3009 = vsel %vm1826, %v2992, 0.0
      %3010 = vadd.xlane.f32.xlu0 %v3009
      %v3011 = vpop.xlane.xlu0 %3010
      %v3012 = vsel %vm1826, %v2994, 0.0
      %3013 = vadd.xlane.f32.xlu0 %v3012
      %v3014 = vpop.xlane.xlu0 %3013
      %v3015 = vsel %vm1826, %v2996, 0.0
      %3016 = vadd.xlane.f32.xlu0 %v3015
      %v3017 = vpop.xlane.xlu0 %3016
      %v3018 = vsel %vm1826, %v2998, 0.0
      %3019 = vadd.xlane.f32.xlu0 %v3018
      %v3020 = vpop.xlane.xlu0 %3019
      %v3021 = vsel %vm1826, %v3000, 0.0
      %3022 = vadd.xlane.f32.xlu0 %v3021
      %v3023 = vpop.xlane.xlu0 %3022
      %v3024 = vsel %vm1826, %v3002, 0.0
      %3025 = vadd.xlane.f32.xlu0 %v3024
      %v3026 = vpop.xlane.xlu0 %3025
      %v3027 = vrcp.pop %v3005
      %v3028 = vrcp.pop %v3008
      %v3029 = vrcp.pop %v3011
      %v3030 = vrcp.pop %v3014
      %v3031 = vrcp.pop %v3017
      %v3032 = vrcp.pop %v3020
      %v3033 = vrcp.pop %v3023
      %v3034 = vrcp.pop %v3026
      %v3035 = vmul.f32 %v2988, %v3027
      %v3036 = vmul.f32 %v2990, %v3028
      %v3037 = vmul.f32 %v2992, %v3029
      %v3038 = vmul.f32 %v2994, %v3030
      %v3039 = vmul.f32 %v2996, %v3031
      %v3040 = vmul.f32 %v2998, %v3032
      %v3041 = vmul.f32 %v3000, %v3033
      %v3042 = vmul.f32 %v3002, %v3034
      %v3043 = vpack.c.bf16 %v3036, %v3035
      %v3044 = vpack.c.bf16 %v3038, %v3037
      %v3045 = vpack.c.bf16 %v3040, %v3039
      %v3046 = vpack.c.bf16 %v3042, %v3041
      %v3048 = vsel %vm1826, %v3043, 0
      %v3051 = vsel %vm1826, %v3044, 0
      %v3054 = vsel %vm1826, %v3045, 0
      %v3057 = vsel %vm1826, %v3046, 0
      %3059 = vmatprep.subr.bf16.mxu0 0
      %3060 = vmatpush1.bf16.msra.mxu0 %v1729
      %3061 = vmatprep.subr.bf16.mxu0 0
      %3062 = vmatpush1.bf16.msra.mxu0 %v1731
      %3063 = vmatprep.subr.bf16.mxu0 0
      %3064 = vmatpush1.bf16.msra.mxu0 %v1733
      %3065 = vmatprep.subr.bf16.mxu0 0
      %3066 = vmatpush1.bf16.msra.mxu0 %v1735
      %3067 = vmatprep.subr.bf16.mxu0 0
      %3068 = vmatpush1.bf16.msra.mxu0 0
      %3069 = vmatprep.subr.bf16.mxu0 0
      %3070 = vmatpush1.bf16.msra.mxu0 0
      %3071 = vmatprep.subr.bf16.mxu0 0
      %3072 = vmatpush1.bf16.msra.mxu0 0
      %3073 = vmatprep.subr.bf16.mxu0 0
      %3074 = vmatpush1.bf16.msra.mxu0 0
      %3075 = vmatprep.subr.bf16.mxu0 0
      %3076 = vmatpush1.bf16.msra.mxu0 0
      %3077 = vmatprep.subr.bf16.mxu0 0
      %3078 = vmatpush1.bf16.msra.mxu0 0
      %3079 = vmatprep.subr.bf16.mxu0 0
      %3080 = vmatpush1.bf16.msra.mxu0 0
      %3081 = vmatprep.subr.bf16.mxu0 0
      %3082 = vmatpush1.bf16.msra.mxu0 0
      %3083 = vmatprep.subr.bf16.mxu0 0
      %3084 = vmatpush1.bf16.msra.mxu0 0
      %3085 = vmatprep.subr.bf16.mxu0 0
      %3086 = vmatpush1.bf16.msra.mxu0 0
      %3087 = vmatprep.subr.bf16.mxu0 0
      %3088 = vmatpush1.bf16.msra.mxu0 0
      %3089 = vmatprep.subr.bf16.mxu0 0
      %3090 = vmatpush1.bf16.msra.mxu0 0
      %3091 = vmatprep.mubr.bf16.mxu0 0
      %3092 = vmatmul.mubr.bf16.gmra.mrb[0].mxu0 %v3048
      %v3093 = vpop.f32.mrb[0].mxu0
      %v3094 = vadd.f32 0.0, %v3093
      %v3095 = vpop.f32.mrb[0].mxu0
      %v3096 = vpop.f32.mrb[0].mxu0
      %v3097 = vadd.f32 0.0, %v3096
      %v3098 = vpop.f32.mrb[0].mxu0
      %3099 = vmatprep.mubr.bf16.mxu0 0
      %3100 = vmatmul.mubr.bf16.gmra.mrb[0].mxu0 %v3051
      %v3101 = vpop.f32.mrb[0].mxu0
      %v3102 = vadd.f32 0.0, %v3101
      %v3103 = vpop.f32.mrb[0].mxu0
      %v3104 = vpop.f32.mrb[0].mxu0
      %v3105 = vadd.f32 0.0, %v3104
      %v3106 = vpop.f32.mrb[0].mxu0
      %3107 = vmatprep.mubr.bf16.mxu0 0
      %3108 = vmatmul.mubr.bf16.gmra.mrb[0].mxu0 %v3054
      %v3109 = vpop.f32.mrb[0].mxu0
      %v3110 = vadd.f32 0.0, %v3109
      %v3111 = vpop.f32.mrb[0].mxu0
      %v3112 = vpop.f32.mrb[0].mxu0
      %v3113 = vadd.f32 0.0, %v3112
      %v3114 = vpop.f32.mrb[0].mxu0
      %3115 = vmatprep.mubr.bf16.mxu0 0
      %3116 = vmatmul.mubr.bf16.gmra.mrb[0].mxu0 %v3057
      %v3117 = vpop.f32.mrb[0].mxu0
      %v3118 = vadd.f32 0.0, %v3117
      %v3119 = vpop.f32.mrb[0].mxu0
      %v3120 = vpop.f32.mrb[0].mxu0
      %v3121 = vadd.f32 0.0, %v3120
      %v3122 = vpop.f32.mrb[0].mxu0
      %3123 = vdwg.mxu0
      %3128 = vrot.lane.b32.xlu0 %v1713, 96
      %v3129 = vpop.permute.xlu0 %3128
      %3130 = vrot.lane.b32.xlu0 %v1715, 96
      %v3131 = vpop.permute.xlu0 %3130
      %3132 = vrot.lane.b32.xlu0 %v1717, 96
      %v3133 = vpop.permute.xlu0 %3132
      %3134 = vrot.lane.b32.xlu0 %v1719, 96
      %v3135 = vpop.permute.xlu0 %3134
      %3140 = vrot.lane.b32.xlu0 %v1721, 96
      %v3141 = vpop.permute.xlu0 %3140
      %3142 = vrot.lane.b32.xlu0 %v1723, 96
      %v3143 = vpop.permute.xlu0 %3142
      %3144 = vrot.lane.b32.xlu0 %v1725, 96
      %v3145 = vpop.permute.xlu0 %3144
      %3146 = vrot.lane.b32.xlu0 %v1727, 96
      %v3147 = vpop.permute.xlu0 %3146
      %v3149 = vsel %vm1736, %v3129, 0
      %v3152 = vsel %vm1736, %v3131, 0
      %v3155 = vsel %vm1736, %v3133, 0
      %v3158 = vsel %vm1736, %v3135, 0
      %v3161 = vsel %vm1736, %v3141, 0
      %v3164 = vsel %vm1736, %v3143, 0
      %v3167 = vsel %vm1736, %v3145, 0
      %v3170 = vsel %vm1736, %v3147, 0
      %3172 = vmatprep.subr.bf16.mxu0 0
      %3173 = vmatpush1.bf16.xpose.msra.mxu0 %v3161
      %3174 = vmatprep.subr.bf16.mxu0 0
      %3175 = vmatpush1.bf16.xpose.msra.mxu0 %v3164
      %3176 = vmatprep.subr.bf16.mxu0 0
      %3177 = vmatpush1.bf16.xpose.msra.mxu0 %v3167
      %3178 = vmatprep.subr.bf16.mxu0 0
      %3179 = vmatpush1.bf16.xpose.msra.mxu0 %v3170
      %3180 = vmatprep.subr.bf16.mxu0 0
      %3181 = vmatpush1.bf16.xpose.msra.mxu0 0
      %3182 = vmatprep.subr.bf16.mxu0 0
      %3183 = vmatpush1.bf16.xpose.msra.mxu0 0
      %3184 = vmatprep.subr.bf16.mxu0 0
      %3185 = vmatpush1.bf16.xpose.msra.mxu0 0
      %3186 = vmatprep.subr.bf16.mxu0 0
      %3187 = vmatpush1.bf16.xpose.msra.mxu0 0
      %3188 = vmatprep.subr.bf16.mxu0 0
      %3189 = vmatpush1.bf16.xpose.msra.mxu0 0
      %3190 = vmatprep.subr.bf16.mxu0 0
      %3191 = vmatpush1.bf16.xpose.msra.mxu0 0
      %3192 = vmatprep.subr.bf16.mxu0 0
      %3193 = vmatpush1.bf16.xpose.msra.mxu0 0
      %3194 = vmatprep.subr.bf16.mxu0 0
      %3195 = vmatpush1.bf16.xpose.msra.mxu0 0
      %3196 = vmatprep.subr.bf16.mxu0 0
      %3197 = vmatpush1.bf16.xpose.msra.mxu0 0
      %3198 = vmatprep.subr.bf16.mxu0 0
      %3199 = vmatpush1.bf16.xpose.msra.mxu0 0
      %3200 = vmatprep.subr.bf16.mxu0 0
      %3201 = vmatpush1.bf16.xpose.msra.mxu0 0
      %3202 = vmatprep.subr.bf16.mxu0 0
      %3203 = vmatpush1.bf16.xpose.msra.mxu0 0
      %3204 = vmatprep.mubr.bf16.mxu0 0
      %3205 = vmatmul.mubr.bf16.gmra.mrb[0].mxu0 %v3149
      %v3206 = vpop.f32.mrb[0].mxu0
      %v3207 = vadd.f32 0.0, %v3206
      %v3208 = vpop.f32.mrb[0].mxu0
      %v3209 = vpop.f32.mrb[0].mxu0
      %v3210 = vadd.f32 0.0, %v3209
      %v3211 = vpop.f32.mrb[0].mxu0
      %3212 = vmatprep.mubr.bf16.mxu0 0
      %3213 = vmatmul.mubr.bf16.gmra.mrb[0].mxu0 %v3152
      %v3214 = vpop.f32.mrb[0].mxu0
      %v3215 = vadd.f32 0.0, %v3214
      %v3216 = vpop.f32.mrb[0].mxu0
      %v3217 = vpop.f32.mrb[0].mxu0
      %v3218 = vadd.f32 0.0, %v3217
      %v3219 = vpop.f32.mrb[0].mxu0
      %3220 = vmatprep.mubr.bf16.mxu0 0
      %3221 = vmatmul.mubr.bf16.gmra.mrb[0].mxu0 %v3155
      %v3222 = vpop.f32.mrb[0].mxu0
      %v3223 = vadd.f32 0.0, %v3222
      %v3224 = vpop.f32.mrb[0].mxu0
      %v3225 = vpop.f32.mrb[0].mxu0
      %v3226 = vadd.f32 0.0, %v3225
      %v3227 = vpop.f32.mrb[0].mxu0
      %3228 = vmatprep.mubr.bf16.mxu0 0
      %3229 = vmatmul.mubr.bf16.gmra.mrb[0].mxu0 %v3158
      %v3230 = vpop.f32.mrb[0].mxu0
      %v3231 = vadd.f32 0.0, %v3230
      %v3232 = vpop.f32.mrb[0].mxu0
      %v3233 = vpop.f32.mrb[0].mxu0
      %v3234 = vadd.f32 0.0, %v3233
      %v3235 = vpop.f32.mrb[0].mxu0
      %3236 = vdwg.mxu0
      %v3237 = vsel %vm1826, %v3207, -inf
      %3238 = vmax.xlane.f32.xlu0 %v3237
      %v3239 = vpop.xlane.xlu0 %3238
      %v3240 = vsel %vm1826, %v3210, -inf
      %3241 = vmax.xlane.f32.xlu0 %v3240
      %v3242 = vpop.xlane.xlu0 %3241
      %v3243 = vsel %vm1826, %v3215, -inf
      %3244 = vmax.xlane.f32.xlu0 %v3243
      %v3245 = vpop.xlane.xlu0 %3244
      %v3246 = vsel %vm1826, %v3218, -inf
      %3247 = vmax.xlane.f32.xlu0 %v3246
      %v3248 = vpop.xlane.xlu0 %3247
      %v3249 = vsel %vm1826, %v3223, -inf
      %3250 = vmax.xlane.f32.xlu0 %v3249
      %v3251 = vpop.xlane.xlu0 %3250
      %v3252 = vsel %vm1826, %v3226, -inf
      %3253 = vmax.xlane.f32.xlu0 %v3252
      %v3254 = vpop.xlane.xlu0 %3253
      %v3255 = vsel %vm1826, %v3231, -inf
      %3256 = vmax.xlane.f32.xlu0 %v3255
      %v3257 = vpop.xlane.xlu0 %3256
      %v3258 = vsel %vm1826, %v3234, -inf
      %3259 = vmax.xlane.f32.xlu0 %v3258
      %v3260 = vpop.xlane.xlu0 %3259
      %v3261 = vsub.f32 %v3207, %v3239
      %v3262 = vsub.f32 %v3210, %v3242
      %v3263 = vsub.f32 %v3215, %v3245
      %v3264 = vsub.f32 %v3218, %v3248
      %v3265 = vsub.f32 %v3223, %v3251
      %v3266 = vsub.f32 %v3226, %v3254
      %v3267 = vsub.f32 %v3231, %v3257
      %v3268 = vsub.f32 %v3234, %v3260
      %v3269 = vmul.f32 %v3261, 1.442695
      %v3270 = vpow.pop %v3269
      %v3271 = vmul.f32 %v3262, 1.442695
      %v3272 = vpow.pop %v3271
      %v3273 = vmul.f32 %v3263, 1.442695
      %v3274 = vpow.pop %v3273
      %v3275 = vmul.f32 %v3264, 1.442695
      %v3276 = vpow.pop %v3275
      %v3277 = vmul.f32 %v3265, 1.442695
      %v3278 = vpow.pop %v3277
      %v3279 = vmul.f32 %v3266, 1.442695
      %v3280 = vpow.pop %v3279
      %v3281 = vmul.f32 %v3267, 1.442695
      %v3282 = vpow.pop %v3281
      %v3283 = vmul.f32 %v3268, 1.442695
      %v3284 = vpow.pop %v3283
      %v3285 = vsel %vm1826, %v3270, 0.0
      %3286 = vadd.xlane.f32.xlu0 %v3285
      %v3287 = vpop.xlane.xlu0 %3286
      %v3288 = vsel %vm1826, %v3272, 0.0
      %3289 = vadd.xlane.f32.xlu0 %v3288
      %v3290 = vpop.xlane.xlu0 %3289
      %v3291 = vsel %vm1826, %v3274, 0.0
      %3292 = vadd.xlane.f32.xlu0 %v3291
      %v3293 = vpop.xlane.xlu0 %3292
      %v3294 = vsel %vm1826, %v3276, 0.0
      %3295 = vadd.xlane.f32.xlu0 %v3294
      %v3296 = vpop.xlane.xlu0 %3295
      %v3297 = vsel %vm1826, %v3278, 0.0
      %3298 = vadd.xlane.f32.xlu0 %v3297
      %v3299 = vpop.xlane.xlu0 %3298
      %v3300 = vsel %vm1826, %v3280, 0.0
      %3301 = vadd.xlane.f32.xlu0 %v3300
      %v3302 = vpop.xlane.xlu0 %3301
      %v3303 = vsel %vm1826, %v3282, 0.0
      %3304 = vadd.xlane.f32.xlu0 %v3303
      %v3305 = vpop.xlane.xlu0 %3304
      %v3306 = vsel %vm1826, %v3284, 0.0
      %3307 = vadd.xlane.f32.xlu0 %v3306
      %v3308 = vpop.xlane.xlu0 %3307
      %v3309 = vrcp.pop %v3287
      %v3310 = vrcp.pop %v3290
      %v3311 = vrcp.pop %v3293
      %v3312 = vrcp.pop %v3296
      %v3313 = vrcp.pop %v3299
      %v3314 = vrcp.pop %v3302
      %v3315 = vrcp.pop %v3305
      %v3316 = vrcp.pop %v3308
      %v3317 = vmul.f32 %v3270, %v3309
      %v3318 = vmul.f32 %v3272, %v3310
      %v3319 = vmul.f32 %v3274, %v3311
      %v3320 = vmul.f32 %v3276, %v3312
      %v3321 = vmul.f32 %v3278, %v3313
      %v3322 = vmul.f32 %v3280, %v3314
      %v3323 = vmul.f32 %v3282, %v3315
      %v3324 = vmul.f32 %v3284, %v3316
      %v3325 = vpack.c.bf16 %v3318, %v3317
      %v3326 = vpack.c.bf16 %v3320, %v3319
      %v3327 = vpack.c.bf16 %v3322, %v3321
      %v3328 = vpack.c.bf16 %v3324, %v3323
      %3333 = vrot.lane.b32.xlu0 %v1729, 96
      %v3334 = vpop.permute.xlu0 %3333
      %3335 = vrot.lane.b32.xlu0 %v1731, 96
      %v3336 = vpop.permute.xlu0 %3335
      %3337 = vrot.lane.b32.xlu0 %v1733, 96
      %v3338 = vpop.permute.xlu0 %3337
      %3339 = vrot.lane.b32.xlu0 %v1735, 96
      %v3340 = vpop.permute.xlu0 %3339
      %v3346 = vsel %vm1826, %v3325, 0
      %v3349 = vsel %vm1826, %v3326, 0
      %v3352 = vsel %vm1826, %v3327, 0
      %v3355 = vsel %vm1826, %v3328, 0
      %3357 = vmatprep.subr.bf16.mxu0 0
      %3358 = vmatpush1.bf16.msra.mxu0 %v3334
      %3359 = vmatprep.subr.bf16.mxu0 0
      %3360 = vmatpush1.bf16.msra.mxu0 %v3336
      %3361 = vmatprep.subr.bf16.mxu0 0
      %3362 = vmatpush1.bf16.msra.mxu0 %v3338
      %3363 = vmatprep.subr.bf16.mxu0 0
      %3364 = vmatpush1.bf16.msra.mxu0 %v3340
      %3365 = vmatprep.subr.bf16.mxu0 0
      %3366 = vmatpush1.bf16.msra.mxu0 0
      %3367 = vmatprep.subr.bf16.mxu0 0
      %3368 = vmatpush1.bf16.msra.mxu0 0
      %3369 = vmatprep.subr.bf16.mxu0 0
      %3370 = vmatpush1.bf16.msra.mxu0 0
      %3371 = vmatprep.subr.bf16.mxu0 0
      %3372 = vmatpush1.bf16.msra.mxu0 0
      %3373 = vmatprep.subr.bf16.mxu0 0
      %3374 = vmatpush1.bf16.msra.mxu0 0
      %3375 = vmatprep.subr.bf16.mxu0 0
      %3376 = vmatpush1.bf16.msra.mxu0 0
      %3377 = vmatprep.subr.bf16.mxu0 0
      %3378 = vmatpush1.bf16.msra.mxu0 0
      %3379 = vmatprep.subr.bf16.mxu0 0
      %3380 = vmatpush1.bf16.msra.mxu0 0
      %3381 = vmatprep.subr.bf16.mxu0 0
      %3382 = vmatpush1.bf16.msra.mxu0 0
      %3383 = vmatprep.subr.bf16.mxu0 0
      %3384 = vmatpush1.bf16.msra.mxu0 0
      %3385 = vmatprep.subr.bf16.mxu0 0
      %3386 = vmatpush1.bf16.msra.mxu0 0
      %3387 = vmatprep.subr.bf16.mxu0 0
      %3388 = vmatpush1.bf16.msra.mxu0 0
      %3389 = vmatprep.mubr.bf16.mxu0 0
      %3390 = vmatmul.mubr.bf16.gmra.mrb[0].mxu0 %v3346
      %v3391 = vpop.f32.mrb[0].mxu0
      %v3392 = vadd.f32 0.0, %v3391
      %v3393 = vpop.f32.mrb[0].mxu0
      %v3394 = vpop.f32.mrb[0].mxu0
      %v3395 = vadd.f32 0.0, %v3394
      %v3396 = vpop.f32.mrb[0].mxu0
      %3397 = vmatprep.mubr.bf16.mxu0 0
      %3398 = vmatmul.mubr.bf16.gmra.mrb[0].mxu0 %v3349
      %v3399 = vpop.f32.mrb[0].mxu0
      %v3400 = vadd.f32 0.0, %v3399
      %v3401 = vpop.f32.mrb[0].mxu0
      %v3402 = vpop.f32.mrb[0].mxu0
      %v3403 = vadd.f32 0.0, %v3402
      %v3404 = vpop.f32.mrb[0].mxu0
      %3405 = vmatprep.mubr.bf16.mxu0 0
      %3406 = vmatmul.mubr.bf16.gmra.mrb[0].mxu0 %v3352
      %v3407 = vpop.f32.mrb[0].mxu0
      %v3408 = vadd.f32 0.0, %v3407
      %v3409 = vpop.f32.mrb[0].mxu0
      %v3410 = vpop.f32.mrb[0].mxu0
      %v3411 = vadd.f32 0.0, %v3410
      %v3412 = vpop.f32.mrb[0].mxu0
      %3413 = vmatprep.mubr.bf16.mxu0 0
      %3414 = vmatmul.mubr.bf16.gmra.mrb[0].mxu0 %v3355
      %v3415 = vpop.f32.mrb[0].mxu0
      %v3416 = vadd.f32 0.0, %v3415
      %v3417 = vpop.f32.mrb[0].mxu0
      %v3418 = vpop.f32.mrb[0].mxu0
      %v3419 = vadd.f32 0.0, %v3418
      %v3420 = vpop.f32.mrb[0].mxu0
      %3421 = vdwg.mxu0
      %3422 = vrot.lane.b32.xlu0 %v1713, 64
      %v3423 = vpop.permute.xlu0 %3422
      %3424 = vrot.lane.b32.xlu0 %v1715, 64
      %v3425 = vpop.permute.xlu0 %3424
      %3426 = vrot.lane.b32.xlu0 %v1717, 64
      %v3427 = vpop.permute.xlu0 %3426
      %3428 = vrot.lane.b32.xlu0 %v1719, 64
      %v3429 = vpop.permute.xlu0 %3428
      %3430 = vrot.lane.b32.xlu0 %v1721, 64
      %v3431 = vpop.permute.xlu0 %3430
      %3432 = vrot.lane.b32.xlu0 %v1723, 64
      %v3433 = vpop.permute.xlu0 %3432
      %3434 = vrot.lane.b32.xlu0 %v1725, 64
      %v3435 = vpop.permute.xlu0 %3434
      %3436 = vrot.lane.b32.xlu0 %v1727, 64
      %v3437 = vpop.permute.xlu0 %3436
      %v3439 = vsel %vm1736, %v3423, 0
      %v3442 = vsel %vm1736, %v3425, 0
      %v3445 = vsel %vm1736, %v3427, 0
      %v3448 = vsel %vm1736, %v3429, 0
      %v3451 = vsel %vm1736, %v3431, 0
      %v3454 = vsel %vm1736, %v3433, 0
      %v3457 = vsel %vm1736, %v3435, 0
      %v3460 = vsel %vm1736, %v3437, 0
      %3462 = vmatprep.subr.bf16.mxu0 0
      %3463 = vmatpush1.bf16.xpose.msra.mxu0 %v3451
      %3464 = vmatprep.subr.bf16.mxu0 0
      %3465 = vmatpush1.bf16.xpose.msra.mxu0 %v3454
      %3466 = vmatprep.subr.bf16.mxu0 0
      %3467 = vmatpush1.bf16.xpose.msra.mxu0 %v3457
      %3468 = vmatprep.subr.bf16.mxu0 0
      %3469 = vmatpush1.bf16.xpose.msra.mxu0 %v3460
      %3470 = vmatprep.subr.bf16.mxu0 0
      %3471 = vmatpush1.bf16.xpose.msra.mxu0 0
      %3472 = vmatprep.subr.bf16.mxu0 0
      %3473 = vmatpush1.bf16.xpose.msra.mxu0 0
      %3474 = vmatprep.subr.bf16.mxu0 0
      %3475 = vmatpush1.bf16.xpose.msra.mxu0 0
      %3476 = vmatprep.subr.bf16.mxu0 0
      %3477 = vmatpush1.bf16.xpose.msra.mxu0 0
      %3478 = vmatprep.subr.bf16.mxu0 0
      %3479 = vmatpush1.bf16.xpose.msra.mxu0 0
      %3480 = vmatprep.subr.bf16.mxu0 0
      %3481 = vmatpush1.bf16.xpose.msra.mxu0 0
      %3482 = vmatprep.subr.bf16.mxu0 0
      %3483 = vmatpush1.bf16.xpose.msra.mxu0 0
      %3484 = vmatprep.subr.bf16.mxu0 0
      %3485 = vmatpush1.bf16.xpose.msra.mxu0 0
      %3486 = vmatprep.subr.bf16.mxu0 0
      %3487 = vmatpush1.bf16.xpose.msra.mxu0 0
      %3488 = vmatprep.subr.bf16.mxu0 0
      %3489 = vmatpush1.bf16.xpose.msra.mxu0 0
      %3490 = vmatprep.subr.bf16.mxu0 0
      %3491 = vmatpush1.bf16.xpose.msra.mxu0 0
      %3492 = vmatprep.subr.bf16.mxu0 0
      %3493 = vmatpush1.bf16.xpose.msra.mxu0 0
      %3494 = vmatprep.mubr.bf16.mxu0 0
      %3495 = vmatmul.mubr.bf16.gmra.mrb[0].mxu0 %v3439
      %v3496 = vpop.f32.mrb[0].mxu0
      %v3497 = vadd.f32 0.0, %v3496
      %v3498 = vpop.f32.mrb[0].mxu0
      %v3499 = vpop.f32.mrb[0].mxu0
      %v3500 = vadd.f32 0.0, %v3499
      %v3501 = vpop.f32.mrb[0].mxu0
      %3502 = vmatprep.mubr.bf16.mxu0 0
      %3503 = vmatmul.mubr.bf16.gmra.mrb[0].mxu0 %v3442
      %v3504 = vpop.f32.mrb[0].mxu0
      %v3505 = vadd.f32 0.0, %v3504
      %v3506 = vpop.f32.mrb[0].mxu0
      %v3507 = vpop.f32.mrb[0].mxu0
      %v3508 = vadd.f32 0.0, %v3507
      %v3509 = vpop.f32.mrb[0].mxu0
      %3510 = vmatprep.mubr.bf16.mxu0 0
      %3511 = vmatmul.mubr.bf16.gmra.mrb[0].mxu0 %v3445
      %v3512 = vpop.f32.mrb[0].mxu0
      %v3513 = vadd.f32 0.0, %v3512
      %v3514 = vpop.f32.mrb[0].mxu0
      %v3515 = vpop.f32.mrb[0].mxu0
      %v3516 = vadd.f32 0.0, %v3515
      %v3517 = vpop.f32.mrb[0].mxu0
      %3518 = vmatprep.mubr.bf16.mxu0 0
      %3519 = vmatmul.mubr.bf16.gmra.mrb[0].mxu0 %v3448
      %v3520 = vpop.f32.mrb[0].mxu0
      %v3521 = vadd.f32 0.0, %v3520
      %v3522 = vpop.f32.mrb[0].mxu0
      %v3523 = vpop.f32.mrb[0].mxu0
      %v3524 = vadd.f32 0.0, %v3523
      %v3525 = vpop.f32.mrb[0].mxu0
      %3526 = vdwg.mxu0
      %v3527 = vsel %vm1826, %v3497, -inf
      %3528 = vmax.xlane.f32.xlu0 %v3527
      %v3529 = vpop.xlane.xlu0 %3528
      %v3530 = vsel %vm1826, %v3500, -inf
      %3531 = vmax.xlane.f32.xlu0 %v3530
      %v3532 = vpop.xlane.xlu0 %3531
      %v3533 = vsel %vm1826, %v3505, -inf
      %3534 = vmax.xlane.f32.xlu0 %v3533
      %v3535 = vpop.xlane.xlu0 %3534
      %v3536 = vsel %vm1826, %v3508, -inf
      %3537 = vmax.xlane.f32.xlu0 %v3536
      %v3538 = vpop.xlane.xlu0 %3537
      %v3539 = vsel %vm1826, %v3513, -inf
      %3540 = vmax.xlane.f32.xlu0 %v3539
      %v3541 = vpop.xlane.xlu0 %3540
      %v3542 = vsel %vm1826, %v3516, -inf
      %3543 = vmax.xlane.f32.xlu0 %v3542
      %v3544 = vpop.xlane.xlu0 %3543
      %v3545 = vsel %vm1826, %v3521, -inf
      %3546 = vmax.xlane.f32.xlu0 %v3545
      %v3547 = vpop.xlane.xlu0 %3546
      %v3548 = vsel %vm1826, %v3524, -inf
      %3549 = vmax.xlane.f32.xlu0 %v3548
      %v3550 = vpop.xlane.xlu0 %3549
      %v3551 = vsub.f32 %v3497, %v3529
      %v3552 = vsub.f32 %v3500, %v3532
      %v3553 = vsub.f32 %v3505, %v3535
      %v3554 = vsub.f32 %v3508, %v3538
      %v3555 = vsub.f32 %v3513, %v3541
      %v3556 = vsub.f32 %v3516, %v3544
      %v3557 = vsub.f32 %v3521, %v3547
      %v3558 = vsub.f32 %v3524, %v3550
      %v3559 = vmul.f32 %v3551, 1.442695
      %v3560 = vpow.pop %v3559
      %v3561 = vmul.f32 %v3552, 1.442695
      %v3562 = vpow.pop %v3561
      %v3563 = vmul.f32 %v3553, 1.442695
      %v3564 = vpow.pop %v3563
      %v3565 = vmul.f32 %v3554, 1.442695
      %v3566 = vpow.pop %v3565
      %v3567 = vmul.f32 %v3555, 1.442695
      %v3568 = vpow.pop %v3567
      %v3569 = vmul.f32 %v3556, 1.442695
      %v3570 = vpow.pop %v3569
      %v3571 = vmul.f32 %v3557, 1.442695
      %v3572 = vpow.pop %v3571
      %v3573 = vmul.f32 %v3558, 1.442695
      %v3574 = vpow.pop %v3573
      %v3575 = vsel %vm1826, %v3560, 0.0
      %3576 = vadd.xlane.f32.xlu0 %v3575
      %v3577 = vpop.xlane.xlu0 %3576
      %v3578 = vsel %vm1826, %v3562, 0.0
      %3579 = vadd.xlane.f32.xlu0 %v3578
      %v3580 = vpop.xlane.xlu0 %3579
      %v3581 = vsel %vm1826, %v3564, 0.0
      %3582 = vadd.xlane.f32.xlu0 %v3581
      %v3583 = vpop.xlane.xlu0 %3582
      %v3584 = vsel %vm1826, %v3566, 0.0
      %3585 = vadd.xlane.f32.xlu0 %v3584
      %v3586 = vpop.xlane.xlu0 %3585
      %v3587 = vsel %vm1826, %v3568, 0.0
      %3588 = vadd.xlane.f32.xlu0 %v3587
      %v3589 = vpop.xlane.xlu0 %3588
      %v3590 = vsel %vm1826, %v3570, 0.0
      %3591 = vadd.xlane.f32.xlu0 %v3590
      %v3592 = vpop.xlane.xlu0 %3591
      %v3593 = vsel %vm1826, %v3572, 0.0
      %3594 = vadd.xlane.f32.xlu0 %v3593
      %v3595 = vpop.xlane.xlu0 %3594
      %v3596 = vsel %vm1826, %v3574, 0.0
      %3597 = vadd.xlane.f32.xlu0 %v3596
      %v3598 = vpop.xlane.xlu0 %3597
      %v3599 = vrcp.pop %v3577
      %v3600 = vrcp.pop %v3580
      %v3601 = vrcp.pop %v3583
      %v3602 = vrcp.pop %v3586
      %v3603 = vrcp.pop %v3589
      %v3604 = vrcp.pop %v3592
      %v3605 = vrcp.pop %v3595
      %v3606 = vrcp.pop %v3598
      %v3607 = vmul.f32 %v3560, %v3599
      %v3608 = vmul.f32 %v3562, %v3600
      %v3609 = vmul.f32 %v3564, %v3601
      %v3610 = vmul.f32 %v3566, %v3602
      %v3611 = vmul.f32 %v3568, %v3603
      %v3612 = vmul.f32 %v3570, %v3604
      %v3613 = vmul.f32 %v3572, %v3605
      %v3614 = vmul.f32 %v3574, %v3606
      %v3615 = vpack.c.bf16 %v3608, %v3607
      %v3616 = vpack.c.bf16 %v3610, %v3609
      %v3617 = vpack.c.bf16 %v3612, %v3611
      %v3618 = vpack.c.bf16 %v3614, %v3613
      %3619 = vrot.lane.b32.xlu0 %v1729, 64
      %v3620 = vpop.permute.xlu0 %3619
      %3621 = vrot.lane.b32.xlu0 %v1731, 64
      %v3622 = vpop.permute.xlu0 %3621
      %3623 = vrot.lane.b32.xlu0 %v1733, 64
      %v3624 = vpop.permute.xlu0 %3623
      %3625 = vrot.lane.b32.xlu0 %v1735, 64
      %v3626 = vpop.permute.xlu0 %3625
      %v3632 = vsel %vm1826, %v3615, 0
      %v3635 = vsel %vm1826, %v3616, 0
      %v3638 = vsel %vm1826, %v3617, 0
      %v3641 = vsel %vm1826, %v3618, 0
      %3643 = vmatprep.subr.bf16.mxu0 0
      %3644 = vmatpush1.bf16.msra.mxu0 %v3620
      %3645 = vmatprep.subr.bf16.mxu0 0
      %3646 = vmatpush1.bf16.msra.mxu0 %v3622
      %3647 = vmatprep.subr.bf16.mxu0 0
      %3648 = vmatpush1.bf16.msra.mxu0 %v3624
      %3649 = vmatprep.subr.bf16.mxu0 0
      %3650 = vmatpush1.bf16.msra.mxu0 %v3626
      %3651 = vmatprep.subr.bf16.mxu0 0
      %3652 = vmatpush1.bf16.msra.mxu0 0
      %3653 = vmatprep.subr.bf16.mxu0 0
      %3654 = vmatpush1.bf16.msra.mxu0 0
      %3655 = vmatprep.subr.bf16.mxu0 0
      %3656 = vmatpush1.bf16.msra.mxu0 0
      %3657 = vmatprep.subr.bf16.mxu0 0
      %3658 = vmatpush1.bf16.msra.mxu0 0
      %3659 = vmatprep.subr.bf16.mxu0 0
      %3660 = vmatpush1.bf16.msra.mxu0 0
      %3661 = vmatprep.subr.bf16.mxu0 0
      %3662 = vmatpush1.bf16.msra.mxu0 0
      %3663 = vmatprep.subr.bf16.mxu0 0
      %3664 = vmatpush1.bf16.msra.mxu0 0
      %3665 = vmatprep.subr.bf16.mxu0 0
      %3666 = vmatpush1.bf16.msra.mxu0 0
      %3667 = vmatprep.subr.bf16.mxu0 0
      %3668 = vmatpush1.bf16.msra.mxu0 0
      %3669 = vmatprep.subr.bf16.mxu0 0
      %3670 = vmatpush1.bf16.msra.mxu0 0
      %3671 = vmatprep.subr.bf16.mxu0 0
      %3672 = vmatpush1.bf16.msra.mxu0 0
      %3673 = vmatprep.subr.bf16.mxu0 0
      %3674 = vmatpush1.bf16.msra.mxu0 0
      %3675 = vmatprep.mubr.bf16.mxu0 0
      %3676 = vmatmul.mubr.bf16.gmra.mrb[0].mxu0 %v3632
      %v3677 = vpop.f32.mrb[0].mxu0
      %v3678 = vadd.f32 0.0, %v3677
      %v3679 = vpop.f32.mrb[0].mxu0
      %v3680 = vpop.f32.mrb[0].mxu0
      %v3681 = vadd.f32 0.0, %v3680
      %v3682 = vpop.f32.mrb[0].mxu0
      %3683 = vmatprep.mubr.bf16.mxu0 0
      %3684 = vmatmul.mubr.bf16.gmra.mrb[0].mxu0 %v3635
      %v3685 = vpop.f32.mrb[0].mxu0
      %v3686 = vadd.f32 0.0, %v3685
      %v3687 = vpop.f32.mrb[0].mxu0
      %v3688 = vpop.f32.mrb[0].mxu0
      %v3689 = vadd.f32 0.0, %v3688
      %v3690 = vpop.f32.mrb[0].mxu0
      %3691 = vmatprep.mubr.bf16.mxu0 0
      %3692 = vmatmul.mubr.bf16.gmra.mrb[0].mxu0 %v3638
      %v3693 = vpop.f32.mrb[0].mxu0
      %v3694 = vadd.f32 0.0, %v3693
      %v3695 = vpop.f32.mrb[0].mxu0
      %v3696 = vpop.f32.mrb[0].mxu0
      %v3697 = vadd.f32 0.0, %v3696
      %v3698 = vpop.f32.mrb[0].mxu0
      %3699 = vmatprep.mubr.bf16.mxu0 0
      %3700 = vmatmul.mubr.bf16.gmra.mrb[0].mxu0 %v3641
      %v3701 = vpop.f32.mrb[0].mxu0
      %v3702 = vadd.f32 0.0, %v3701
      %v3703 = vpop.f32.mrb[0].mxu0
      %v3704 = vpop.f32.mrb[0].mxu0
      %v3705 = vadd.f32 0.0, %v3704
      %v3706 = vpop.f32.mrb[0].mxu0
      %3707 = vdwg.mxu0
      %3708 = vrot.lane.b32.xlu0 %v1713, 32
      %v3709 = vpop.permute.xlu0 %3708
      %3710 = vrot.lane.b32.xlu0 %v1715, 32
      %v3711 = vpop.permute.xlu0 %3710
      %3712 = vrot.lane.b32.xlu0 %v1717, 32
      %v3713 = vpop.permute.xlu0 %3712
      %3714 = vrot.lane.b32.xlu0 %v1719, 32
      %v3715 = vpop.permute.xlu0 %3714
      %3716 = vrot.lane.b32.xlu0 %v1721, 32
      %v3717 = vpop.permute.xlu0 %3716
      %3718 = vrot.lane.b32.xlu0 %v1723, 32
      %v3719 = vpop.permute.xlu0 %3718
      %3720 = vrot.lane.b32.xlu0 %v1725, 32
      %v3721 = vpop.permute.xlu0 %3720
      %3722 = vrot.lane.b32.xlu0 %v1727, 32
      %v3723 = vpop.permute.xlu0 %3722
      %v3725 = vsel %vm1736, %v3709, 0
      %v3728 = vsel %vm1736, %v3711, 0
      %v3731 = vsel %vm1736, %v3713, 0
      %v3734 = vsel %vm1736, %v3715, 0
      %v3737 = vsel %vm1736, %v3717, 0
      %v3740 = vsel %vm1736, %v3719, 0
      %v3743 = vsel %vm1736, %v3721, 0
      %v3746 = vsel %vm1736, %v3723, 0
      %3748 = vmatprep.subr.bf16.mxu0 0
      %3749 = vmatpush1.bf16.xpose.msra.mxu0 %v3737
      %3750 = vmatprep.subr.bf16.mxu0 0
      %3751 = vmatpush1.bf16.xpose.msra.mxu0 %v3740
      %3752 = vmatprep.subr.bf16.mxu0 0
      %3753 = vmatpush1.bf16.xpose.msra.mxu0 %v3743
      %3754 = vmatprep.subr.bf16.mxu0 0
      %3755 = vmatpush1.bf16.xpose.msra.mxu0 %v3746
      %3756 = vmatprep.subr.bf16.mxu0 0
      %3757 = vmatpush1.bf16.xpose.msra.mxu0 0
      %3758 = vmatprep.subr.bf16.mxu0 0
      %3759 = vmatpush1.bf16.xpose.msra.mxu0 0
      %3760 = vmatprep.subr.bf16.mxu0 0
      %3761 = vmatpush1.bf16.xpose.msra.mxu0 0
      %3762 = vmatprep.subr.bf16.mxu0 0
      %3763 = vmatpush1.bf16.xpose.msra.mxu0 0
      %3764 = vmatprep.subr.bf16.mxu0 0
      %3765 = vmatpush1.bf16.xpose.msra.mxu0 0
      %3766 = vmatprep.subr.bf16.mxu0 0
      %3767 = vmatpush1.bf16.xpose.msra.mxu0 0
      %3768 = vmatprep.subr.bf16.mxu0 0
      %3769 = vmatpush1.bf16.xpose.msra.mxu0 0
      %3770 = vmatprep.subr.bf16.mxu0 0
      %3771 = vmatpush1.bf16.xpose.msra.mxu0 0
      %3772 = vmatprep.subr.bf16.mxu0 0
      %3773 = vmatpush1.bf16.xpose.msra.mxu0 0
      %3774 = vmatprep.subr.bf16.mxu0 0
      %3775 = vmatpush1.bf16.xpose.msra.mxu0 0
      %3776 = vmatprep.subr.bf16.mxu0 0
      %3777 = vmatpush1.bf16.xpose.msra.mxu0 0
      %3778 = vmatprep.subr.bf16.mxu0 0
      %3779 = vmatpush1.bf16.xpose.msra.mxu0 0
      %3780 = vmatprep.mubr.bf16.mxu0 0
      %3781 = vmatmul.mubr.bf16.gmra.mrb[0].mxu0 %v3725
      %v3782 = vpop.f32.mrb[0].mxu0
      %v3783 = vadd.f32 0.0, %v3782
      %v3784 = vpop.f32.mrb[0].mxu0
      %v3785 = vpop.f32.mrb[0].mxu0
      %v3786 = vadd.f32 0.0, %v3785
      %v3787 = vpop.f32.mrb[0].mxu0
      %3788 = vmatprep.mubr.bf16.mxu0 0
      %3789 = vmatmul.mubr.bf16.gmra.mrb[0].mxu0 %v3728
      %v3790 = vpop.f32.mrb[0].mxu0
      %v3791 = vadd.f32 0.0, %v3790
      %v3792 = vpop.f32.mrb[0].mxu0
      %v3793 = vpop.f32.mrb[0].mxu0
      %v3794 = vadd.f32 0.0, %v3793
      %v3795 = vpop.f32.mrb[0].mxu0
      %3796 = vmatprep.mubr.bf16.mxu0 0
      %3797 = vmatmul.mubr.bf16.gmra.mrb[0].mxu0 %v3731
      %v3798 = vpop.f32.mrb[0].mxu0
      %v3799 = vadd.f32 0.0, %v3798
      %v3800 = vpop.f32.mrb[0].mxu0
      %v3801 = vpop.f32.mrb[0].mxu0
      %v3802 = vadd.f32 0.0, %v3801
      %v3803 = vpop.f32.mrb[0].mxu0
      %3804 = vmatprep.mubr.bf16.mxu0 0
      %3805 = vmatmul.mubr.bf16.gmra.mrb[0].mxu0 %v3734
      %v3806 = vpop.f32.mrb[0].mxu0
      %v3807 = vadd.f32 0.0, %v3806
      %v3808 = vpop.f32.mrb[0].mxu0
      %v3809 = vpop.f32.mrb[0].mxu0
      %v3810 = vadd.f32 0.0, %v3809
      %v3811 = vpop.f32.mrb[0].mxu0
      %3812 = vdwg.mxu0
      %v3813 = vsel %vm1826, %v3783, -inf
      %3814 = vmax.xlane.f32.xlu0 %v3813
      %v3815 = vpop.xlane.xlu0 %3814
      %v3816 = vsel %vm1826, %v3786, -inf
      %3817 = vmax.xlane.f32.xlu0 %v3816
      %v3818 = vpop.xlane.xlu0 %3817
      %v3819 = vsel %vm1826, %v3791, -inf
      %3820 = vmax.xlane.f32.xlu0 %v3819
      %v3821 = vpop.xlane.xlu0 %3820
      %v3822 = vsel %vm1826, %v3794, -inf
      %3823 = vmax.xlane.f32.xlu0 %v3822
      %v3824 = vpop.xlane.xlu0 %3823
      %v3825 = vsel %vm1826, %v3799, -inf
      %3826 = vmax.xlane.f32.xlu0 %v3825
      %v3827 = vpop.xlane.xlu0 %3826
      %v3828 = vsel %vm1826, %v3802, -inf
      %3829 = vmax.xlane.f32.xlu0 %v3828
      %v3830 = vpop.xlane.xlu0 %3829
      %v3831 = vsel %vm1826, %v3807, -inf
      %3832 = vmax.xlane.f32.xlu0 %v3831
      %v3833 = vpop.xlane.xlu0 %3832
      %v3834 = vsel %vm1826, %v3810, -inf
      %3835 = vmax.xlane.f32.xlu0 %v3834
      %v3836 = vpop.xlane.xlu0 %3835
      %v3837 = vsub.f32 %v3783, %v3815
      %v3838 = vsub.f32 %v3786, %v3818
      %v3839 = vsub.f32 %v3791, %v3821
      %v3840 = vsub.f32 %v3794, %v3824
      %v3841 = vsub.f32 %v3799, %v3827
      %v3842 = vsub.f32 %v3802, %v3830
      %v3843 = vsub.f32 %v3807, %v3833
      %v3844 = vsub.f32 %v3810, %v3836
      %v3845 = vmul.f32 %v3837, 1.442695
      %v3846 = vpow.pop %v3845
      %v3847 = vmul.f32 %v3838, 1.442695
      %v3848 = vpow.pop %v3847
      %v3849 = vmul.f32 %v3839, 1.442695
      %v3850 = vpow.pop %v3849
      %v3851 = vmul.f32 %v3840, 1.442695
      %v3852 = vpow.pop %v3851
      %v3853 = vmul.f32 %v3841, 1.442695
      %v3854 = vpow.pop %v3853
      %v3855 = vmul.f32 %v3842, 1.442695
      %v3856 = vpow.pop %v3855
      %v3857 = vmul.f32 %v3843, 1.442695
      %v3858 = vpow.pop %v3857
      %v3859 = vmul.f32 %v3844, 1.442695
      %v3860 = vpow.pop %v3859
      %v3861 = vsel %vm1826, %v3846, 0.0
      %3862 = vadd.xlane.f32.xlu0 %v3861
      %v3863 = vpop.xlane.xlu0 %3862
      %v3864 = vsel %vm1826, %v3848, 0.0
      %3865 = vadd.xlane.f32.xlu0 %v3864
      %v3866 = vpop.xlane.xlu0 %3865
      %v3867 = vsel %vm1826, %v3850, 0.0
      %3868 = vadd.xlane.f32.xlu0 %v3867
      %v3869 = vpop.xlane.xlu0 %3868
      %v3870 = vsel %vm1826, %v3852, 0.0
      %3871 = vadd.xlane.f32.xlu0 %v3870
      %v3872 = vpop.xlane.xlu0 %3871
      %v3873 = vsel %vm1826, %v3854, 0.0
      %3874 = vadd.xlane.f32.xlu0 %v3873
      %v3875 = vpop.xlane.xlu0 %3874
      %v3876 = vsel %vm1826, %v3856, 0.0
      %3877 = vadd.xlane.f32.xlu0 %v3876
      %v3878 = vpop.xlane.xlu0 %3877
      %v3879 = vsel %vm1826, %v3858, 0.0
      %3880 = vadd.xlane.f32.xlu0 %v3879
      %v3881 = vpop.xlane.xlu0 %3880
      %v3882 = vsel %vm1826, %v3860, 0.0
      %3883 = vadd.xlane.f32.xlu0 %v3882
      %v3884 = vpop.xlane.xlu0 %3883
      %v3885 = vrcp.pop %v3863
      %v3886 = vrcp.pop %v3866
      %v3887 = vrcp.pop %v3869
      %v3888 = vrcp.pop %v3872
      %v3889 = vrcp.pop %v3875
      %v3890 = vrcp.pop %v3878
      %v3891 = vrcp.pop %v3881
      %v3892 = vrcp.pop %v3884
      %v3893 = vmul.f32 %v3846, %v3885
      %v3894 = vmul.f32 %v3848, %v3886
      %v3895 = vmul.f32 %v3850, %v3887
      %v3896 = vmul.f32 %v3852, %v3888
      %v3897 = vmul.f32 %v3854, %v3889
      %v3898 = vmul.f32 %v3856, %v3890
      %v3899 = vmul.f32 %v3858, %v3891
      %v3900 = vmul.f32 %v3860, %v3892
      %v3901 = vpack.c.bf16 %v3894, %v3893
      %v3902 = vpack.c.bf16 %v3896, %v3895
      %v3903 = vpack.c.bf16 %v3898, %v3897
      %v3904 = vpack.c.bf16 %v3900, %v3899
      %3905 = vrot.lane.b32.xlu0 %v1729, 32
      %v3906 = vpop.permute.xlu0 %3905
      %3907 = vrot.lane.b32.xlu0 %v1731, 32
      %v3908 = vpop.permute.xlu0 %3907
      %3909 = vrot.lane.b32.xlu0 %v1733, 32
      %v3910 = vpop.permute.xlu0 %3909
      %3911 = vrot.lane.b32.xlu0 %v1735, 32
      %v3912 = vpop.permute.xlu0 %3911
      %v3918 = vsel %vm1826, %v3901, 0
      %v3921 = vsel %vm1826, %v3902, 0
      %v3924 = vsel %vm1826, %v3903, 0
      %v3927 = vsel %vm1826, %v3904, 0
      %3929 = vmatprep.subr.bf16.mxu0 0
      %3930 = vmatpush1.bf16.msra.mxu0 %v3906
      %3931 = vmatprep.subr.bf16.mxu0 0
      %3932 = vmatpush1.bf16.msra.mxu0 %v3908
      %3933 = vmatprep.subr.bf16.mxu0 0
      %3934 = vmatpush1.bf16.msra.mxu0 %v3910
      %3935 = vmatprep.subr.bf16.mxu0 0
      %3936 = vmatpush1.bf16.msra.mxu0 %v3912
      %3937 = vmatprep.subr.bf16.mxu0 0
      %3938 = vmatpush1.bf16.msra.mxu0 0
      %3939 = vmatprep.subr.bf16.mxu0 0
      %3940 = vmatpush1.bf16.msra.mxu0 0
      %3941 = vmatprep.subr.bf16.mxu0 0
      %3942 = vmatpush1.bf16.msra.mxu0 0
      %3943 = vmatprep.subr.bf16.mxu0 0
      %3944 = vmatpush1.bf16.msra.mxu0 0
      %3945 = vmatprep.subr.bf16.mxu0 0
      %3946 = vmatpush1.bf16.msra.mxu0 0
      %3947 = vmatprep.subr.bf16.mxu0 0
      %3948 = vmatpush1.bf16.msra.mxu0 0
      %3949 = vmatprep.subr.bf16.mxu0 0
      %3950 = vmatpush1.bf16.msra.mxu0 0
      %3951 = vmatprep.subr.bf16.mxu0 0
      %3952 = vmatpush1.bf16.msra.mxu0 0
      %3953 = vmatprep.subr.bf16.mxu0 0
      %3954 = vmatpush1.bf16.msra.mxu0 0
      %3955 = vmatprep.subr.bf16.mxu0 0
      %3956 = vmatpush1.bf16.msra.mxu0 0
      %3957 = vmatprep.subr.bf16.mxu0 0
      %3958 = vmatpush1.bf16.msra.mxu0 0
      %3959 = vmatprep.subr.bf16.mxu0 0
      %3960 = vmatpush1.bf16.msra.mxu0 0
      %3961 = vmatprep.mubr.bf16.mxu0 0
      %3962 = vmatmul.mubr.bf16.gmra.mrb[0].mxu0 %v3918
      %v3963 = vpop.f32.mrb[0].mxu0
      %v3964 = vadd.f32 0.0, %v3963
      %v3965 = vpop.f32.mrb[0].mxu0
      %v3966 = vpop.f32.mrb[0].mxu0
      %v3967 = vadd.f32 0.0, %v3966
      %v3968 = vpop.f32.mrb[0].mxu0
      %3969 = vmatprep.mubr.bf16.mxu0 0
      %3970 = vmatmul.mubr.bf16.gmra.mrb[0].mxu0 %v3921
      %v3971 = vpop.f32.mrb[0].mxu0
      %v3972 = vadd.f32 0.0, %v3971
      %v3973 = vpop.f32.mrb[0].mxu0
      %v3974 = vpop.f32.mrb[0].mxu0
      %v3975 = vadd.f32 0.0, %v3974
      %v3976 = vpop.f32.mrb[0].mxu0
      %3977 = vmatprep.mubr.bf16.mxu0 0
      %3978 = vmatmul.mubr.bf16.gmra.mrb[0].mxu0 %v3924
      %v3979 = vpop.f32.mrb[0].mxu0
      %v3980 = vadd.f32 0.0, %v3979
      %v3981 = vpop.f32.mrb[0].mxu0
      %v3982 = vpop.f32.mrb[0].mxu0
      %v3983 = vadd.f32 0.0, %v3982
      %v3984 = vpop.f32.mrb[0].mxu0
      %3985 = vmatprep.mubr.bf16.mxu0 0
      %3986 = vmatmul.mubr.bf16.gmra.mrb[0].mxu0 %v3927
      %v3987 = vpop.f32.mrb[0].mxu0
      %v3988 = vadd.f32 0.0, %v3987
      %v3989 = vpop.f32.mrb[0].mxu0
      %v3990 = vpop.f32.mrb[0].mxu0
      %v3991 = vadd.f32 0.0, %v3990
      %v3992 = vpop.f32.mrb[0].mxu0
      %3993 = vdwg.mxu0
      %4002 = vrot.lane.b32.xlu0 %v2264, 32
      %v4003 = vpop.permute.xlu0 %4002
      %4004 = vrot.lane.b32.xlu0 %v2267, 32
      %v4005 = vpop.permute.xlu0 %4004
      %4006 = vrot.lane.b32.xlu0 %v2272, 32
      %v4007 = vpop.permute.xlu0 %4006
      %4008 = vrot.lane.b32.xlu0 %v2275, 32
      %v4009 = vpop.permute.xlu0 %4008
      %4010 = vrot.lane.b32.xlu0 %v2280, 32
      %v4011 = vpop.permute.xlu0 %4010
      %4012 = vrot.lane.b32.xlu0 %v2283, 32
      %v4013 = vpop.permute.xlu0 %4012
      %4014 = vrot.lane.b32.xlu0 %v2288, 32
      %v4015 = vpop.permute.xlu0 %4014
      %4016 = vrot.lane.b32.xlu0 %v2291, 32
      %v4017 = vpop.permute.xlu0 %4016
      %4034 = vrot.lane.b32.xlu0 %v2550, 64
      %v4035 = vpop.permute.xlu0 %4034
      %4036 = vrot.lane.b32.xlu0 %v2553, 64
      %v4037 = vpop.permute.xlu0 %4036
      %4038 = vrot.lane.b32.xlu0 %v2558, 64
      %v4039 = vpop.permute.xlu0 %4038
      %4040 = vrot.lane.b32.xlu0 %v2561, 64
      %v4041 = vpop.permute.xlu0 %4040
      %4042 = vrot.lane.b32.xlu0 %v2566, 64
      %v4043 = vpop.permute.xlu0 %4042
      %4044 = vrot.lane.b32.xlu0 %v2569, 64
      %v4045 = vpop.permute.xlu0 %4044
      %4046 = vrot.lane.b32.xlu0 %v2574, 64
      %v4047 = vpop.permute.xlu0 %4046
      %4048 = vrot.lane.b32.xlu0 %v2577, 64
      %v4049 = vpop.permute.xlu0 %4048
      %4066 = vrot.lane.b32.xlu0 %v2836, 96
      %v4067 = vpop.permute.xlu0 %4066
      %4068 = vrot.lane.b32.xlu0 %v2839, 96
      %v4069 = vpop.permute.xlu0 %4068
      %4070 = vrot.lane.b32.xlu0 %v2844, 96
      %v4071 = vpop.permute.xlu0 %4070
      %4072 = vrot.lane.b32.xlu0 %v2847, 96
      %v4073 = vpop.permute.xlu0 %4072
      %4074 = vrot.lane.b32.xlu0 %v2852, 96
      %v4075 = vpop.permute.xlu0 %4074
      %4076 = vrot.lane.b32.xlu0 %v2855, 96
      %v4077 = vpop.permute.xlu0 %4076
      %4078 = vrot.lane.b32.xlu0 %v2860, 96
      %v4079 = vpop.permute.xlu0 %4078
      %4080 = vrot.lane.b32.xlu0 %v2863, 96
      %v4081 = vpop.permute.xlu0 %4080
      %4098 = vrot.lane.b32.xlu0 %v3392, 32
      %v4099 = vpop.permute.xlu0 %4098
      %4100 = vrot.lane.b32.xlu0 %v3395, 32
      %v4101 = vpop.permute.xlu0 %4100
      %4102 = vrot.lane.b32.xlu0 %v3400, 32
      %v4103 = vpop.permute.xlu0 %4102
      %4104 = vrot.lane.b32.xlu0 %v3403, 32
      %v4105 = vpop.permute.xlu0 %4104
      %4106 = vrot.lane.b32.xlu0 %v3408, 32
      %v4107 = vpop.permute.xlu0 %4106
      %4108 = vrot.lane.b32.xlu0 %v3411, 32
      %v4109 = vpop.permute.xlu0 %4108
      %4110 = vrot.lane.b32.xlu0 %v3416, 32
      %v4111 = vpop.permute.xlu0 %4110
      %4112 = vrot.lane.b32.xlu0 %v3419, 32
      %v4113 = vpop.permute.xlu0 %4112
      %4130 = vrot.lane.b32.xlu0 %v3678, 64
      %v4131 = vpop.permute.xlu0 %4130
      %4132 = vrot.lane.b32.xlu0 %v3681, 64
      %v4133 = vpop.permute.xlu0 %4132
      %4134 = vrot.lane.b32.xlu0 %v3686, 64
      %v4135 = vpop.permute.xlu0 %4134
      %4136 = vrot.lane.b32.xlu0 %v3689, 64
      %v4137 = vpop.permute.xlu0 %4136
      %4138 = vrot.lane.b32.xlu0 %v3694, 64
      %v4139 = vpop.permute.xlu0 %4138
      %4140 = vrot.lane.b32.xlu0 %v3697, 64
      %v4141 = vpop.permute.xlu0 %4140
      %4142 = vrot.lane.b32.xlu0 %v3702, 64
      %v4143 = vpop.permute.xlu0 %4142
      %4144 = vrot.lane.b32.xlu0 %v3705, 64
      %v4145 = vpop.permute.xlu0 %4144
      %4162 = vrot.lane.b32.xlu0 %v3964, 96
      %v4163 = vpop.permute.xlu0 %4162
      %4164 = vrot.lane.b32.xlu0 %v3967, 96
      %v4165 = vpop.permute.xlu0 %4164
      %4166 = vrot.lane.b32.xlu0 %v3972, 96
      %v4167 = vpop.permute.xlu0 %4166
      %4168 = vrot.lane.b32.xlu0 %v3975, 96
      %v4169 = vpop.permute.xlu0 %4168
      %4170 = vrot.lane.b32.xlu0 %v3980, 96
      %v4171 = vpop.permute.xlu0 %4170
      %4172 = vrot.lane.b32.xlu0 %v3983, 96
      %v4173 = vpop.permute.xlu0 %4172
      %4174 = vrot.lane.b32.xlu0 %v3988, 96
      %v4175 = vpop.permute.xlu0 %4174
      %4176 = vrot.lane.b32.xlu0 %v3991, 96
      %v4177 = vpop.permute.xlu0 %4176
      %v4186 = vsel %vm1736, %v1966, %v4003
      %v4187 = vsel %vm1736, %v1969, %v4005
      %v4188 = vsel %vm1736, %v1974, %v4007
      %v4189 = vsel %vm1736, %v1977, %v4009
      %v4190 = vsel %vm1736, %v1982, %v4011
      %v4191 = vsel %vm1736, %v1985, %v4013
      %v4192 = vsel %vm1736, %v1990, %v4015
      %v4193 = vsel %vm1736, %v1993, %v4017
      %v4194 = vsel %vm1826, %v4186, %v4035
      %v4195 = vsel %vm1826, %v4187, %v4037
      %v4196 = vsel %vm1826, %v4188, %v4039
      %v4197 = vsel %vm1826, %v4189, %v4041
      %v4198 = vsel %vm1826, %v4190, %v4043
      %v4199 = vsel %vm1826, %v4191, %v4045
      %v4200 = vsel %vm1826, %v4192, %v4047
      %v4201 = vsel %vm1826, %v4193, %v4049
      %vm4202 = vcmask 785408
      %v4203 = vsel %vm4202, %v4194, %v4067
      %v4204 = vsel %vm4202, %v4195, %v4069
      %v4205 = vsel %vm4202, %v4196, %v4071
      %v4206 = vsel %vm4202, %v4197, %v4073
      %v4207 = vsel %vm4202, %v4198, %v4075
      %v4208 = vsel %vm4202, %v4199, %v4077
      %v4209 = vsel %vm4202, %v4200, %v4079
      %v4210 = vsel %vm4202, %v4201, %v4081
      %v4211 = vsel %vm1736, %v3094, %v4099
      %v4212 = vsel %vm1736, %v3097, %v4101
      %v4213 = vsel %vm1736, %v3102, %v4103
      %v4214 = vsel %vm1736, %v3105, %v4105
      %v4215 = vsel %vm1736, %v3110, %v4107
      %v4216 = vsel %vm1736, %v3113, %v4109
      %v4217 = vsel %vm1736, %v3118, %v4111
      %v4218 = vsel %vm1736, %v3121, %v4113
      %v4219 = vsel %vm1826, %v4211, %v4131
      %v4220 = vsel %vm1826, %v4212, %v4133
      %v4221 = vsel %vm1826, %v4213, %v4135
      %v4222 = vsel %vm1826, %v4214, %v4137
      %v4223 = vsel %vm1826, %v4215, %v4139
      %v4224 = vsel %vm1826, %v4216, %v4141
      %v4225 = vsel %vm1826, %v4217, %v4143
      %v4226 = vsel %vm1826, %v4218, %v4145
      %v4227 = vsel %vm4202, %v4219, %v4163
      %v4228 = vsel %vm4202, %v4220, %v4165
      %v4229 = vsel %vm4202, %v4221, %v4167
      %v4230 = vsel %vm4202, %v4222, %v4169
      %v4231 = vsel %vm4202, %v4223, %v4171
      %v4232 = vsel %vm4202, %v4224, %v4173
      %v4233 = vsel %vm4202, %v4225, %v4175
      %v4234 = vsel %vm4202, %v4226, %v4177
      %v4235 = vpack.c.bf16 %v4204, %v4203
      %v4236 = vpack.c.bf16 %v4228, %v4227
      %v4237 = vpack.c.bf16 %v4206, %v4205
      %v4238 = vpack.c.bf16 %v4230, %v4229
      %v4239 = vpack.c.bf16 %v4208, %v4207
      %v4240 = vpack.c.bf16 %v4232, %v4231
      %v4241 = vpack.c.bf16 %v4210, %v4209
      %v4242 = vpack.c.bf16 %v4234, %v4233
      %s4243 = smul.addr %s830, 4
      %s4244 = scalar_lea.vmem %s10, %s4243
      %v4245 = vld [vmem:[%s4244] sm:$0xff]
      %v4246 = vld [vmem:[%s4244 + $0x8] sm:$0xff]
      %v4247 = vld [vmem:[%s4244 + $0x10] sm:$0xff]
      %v4248 = vld [vmem:[%s4244 + $0x18] sm:$0xff]
      %v4249 = vld [vmem:[%s4244 + $0x20] sm:$0xff]
      %v4250 = vld [vmem:[%s4244 + $0x28] sm:$0xff]
      %v4251 = vld [vmem:[%s4244 + $0x30] sm:$0xff]
      %v4252 = vld [vmem:[%s4244 + $0x38] sm:$0xff]
      %v4253 = vld [vmem:[%s4244 + $0x40] sm:$0xff]
      %v4254 = vld [vmem:[%s4244 + $0x48] sm:$0xff]
      %v4255 = vld [vmem:[%s4244 + $0x50] sm:$0xff]
      %v4256 = vld [vmem:[%s4244 + $0x58] sm:$0xff]
      %v4257 = vld [vmem:[%s4244 + $0x60] sm:$0xff]
      %v4258 = vld [vmem:[%s4244 + $0x68] sm:$0xff]
      %v4259 = vld [vmem:[%s4244 + $0x70] sm:$0xff]
      %v4260 = vld [vmem:[%s4244 + $0x78] sm:$0xff]
      %v4261 = vld [vmem:[%s4244 + $0x80] sm:$0xff]
      %v4262 = vld [vmem:[%s4244 + $0x88] sm:$0xff]
      %v4263 = vld [vmem:[%s4244 + $0x90] sm:$0xff]
      %v4264 = vld [vmem:[%s4244 + $0x98] sm:$0xff]
      %v4265 = vld [vmem:[%s4244 + $0xa0] sm:$0xff]
      %v4266 = vld [vmem:[%s4244 + $0xa8] sm:$0xff]
      %v4267 = vld [vmem:[%s4244 + $0xb0] sm:$0xff]
      %v4268 = vld [vmem:[%s4244 + $0xb8] sm:$0xff]
      %v4269 = vld [vmem:[%s4244 + $0xc0] sm:$0xff]
      %v4270 = vld [vmem:[%s4244 + $0xc8] sm:$0xff]
      %v4271 = vld [vmem:[%s4244 + $0xd0] sm:$0xff]
      %v4272 = vld [vmem:[%s4244 + $0xd8] sm:$0xff]
      %v4273 = vld [vmem:[%s4244 + $0xe0] sm:$0xff]
      %v4274 = vld [vmem:[%s4244 + $0xe8] sm:$0xff]
      %v4275 = vld [vmem:[%s4244 + $0xf0] sm:$0xff]
      %v4276 = vld [vmem:[%s4244 + $0xf8] sm:$0xff]
      %s4277 = scalar_lea.vmem %s11, %s865
      %v4278 = vld [vmem:[%s4277] sm:$0x3]
      %v4280 = vlaneseq
      %v4281 = vshrl.u32 %v4280, 7
      %v4282 = vsub.s32 0, %v4281
      %v4283 = vrot.slane %v4278, %v4282
      %v4284 = vlaneseq
      %v4285 = vshrl.u32 %v4284, 7
      %v4286 = vsub.s32 1, %v4285
      %v4287 = vrot.slane %v4278, %v4286
      %v4322 = vunpack.c.l.b16 %v4245
      %v4323 = vunpack.c.h.b16 %v4245
      %v4324 = vunpack.c.l.b16 %v4246
      %v4325 = vunpack.c.h.b16 %v4246
      %v4326 = vunpack.c.l.b16 %v4247
      %v4327 = vunpack.c.h.b16 %v4247
      %v4328 = vunpack.c.l.b16 %v4248
      %v4329 = vunpack.c.h.b16 %v4248
      %v4330 = vunpack.c.l.b16 %v4249
      %v4331 = vunpack.c.h.b16 %v4249
      %v4332 = vunpack.c.l.b16 %v4250
      %v4333 = vunpack.c.h.b16 %v4250
      %v4334 = vunpack.c.l.b16 %v4251
      %v4335 = vunpack.c.h.b16 %v4251
      %v4336 = vunpack.c.l.b16 %v4252
      %v4337 = vunpack.c.h.b16 %v4252
      %v4338 = vunpack.c.l.b16 %v4253
      %v4339 = vunpack.c.h.b16 %v4253
      %v4340 = vunpack.c.l.b16 %v4254
      %v4341 = vunpack.c.h.b16 %v4254
      %v4342 = vunpack.c.l.b16 %v4255
      %v4343 = vunpack.c.h.b16 %v4255
      %v4344 = vunpack.c.l.b16 %v4256
      %v4345 = vunpack.c.h.b16 %v4256
      %v4346 = vunpack.c.l.b16 %v4257
      %v4347 = vunpack.c.h.b16 %v4257
      %v4348 = vunpack.c.l.b16 %v4258
      %v4349 = vunpack.c.h.b16 %v4258
      %v4350 = vunpack.c.l.b16 %v4259
      %v4351 = vunpack.c.h.b16 %v4259
      %v4352 = vunpack.c.l.b16 %v4260
      %v4353 = vunpack.c.h.b16 %v4260
      %v4354 = vunpack.c.l.b16 %v4261
      %v4355 = vunpack.c.h.b16 %v4261
      %v4356 = vunpack.c.l.b16 %v4262
      %v4357 = vunpack.c.h.b16 %v4262
      %v4358 = vunpack.c.l.b16 %v4263
      %v4359 = vunpack.c.h.b16 %v4263
      %v4360 = vunpack.c.l.b16 %v4264
      %v4361 = vunpack.c.h.b16 %v4264
      %v4362 = vunpack.c.l.b16 %v4265
      %v4363 = vunpack.c.h.b16 %v4265
      %v4364 = vunpack.c.l.b16 %v4266
      %v4365 = vunpack.c.h.b16 %v4266
      %v4366 = vunpack.c.l.b16 %v4267
      %v4367 = vunpack.c.h.b16 %v4267
      %v4368 = vunpack.c.l.b16 %v4268
      %v4369 = vunpack.c.h.b16 %v4268
      %v4370 = vunpack.c.l.b16 %v4269
      %v4371 = vunpack.c.h.b16 %v4269
      %v4372 = vunpack.c.l.b16 %v4270
      %v4373 = vunpack.c.h.b16 %v4270
      %v4374 = vunpack.c.l.b16 %v4271
      %v4375 = vunpack.c.h.b16 %v4271
      %v4376 = vunpack.c.l.b16 %v4272
      %v4377 = vunpack.c.h.b16 %v4272
      %v4378 = vunpack.c.l.b16 %v4273
      %v4379 = vunpack.c.h.b16 %v4273
      %v4380 = vunpack.c.l.b16 %v4274
      %v4381 = vunpack.c.h.b16 %v4274
      %v4382 = vunpack.c.l.b16 %v4275
      %v4383 = vunpack.c.h.b16 %v4275
      %v4384 = vunpack.c.l.b16 %v4276
      %v4385 = vunpack.c.h.b16 %v4276
      %v4386 = vpack.c.b16 %v4324, %v4322
      %v4387 = vpack.c.b16 %v4325, %v4323
      %v4388 = vpack.c.b16 %v4328, %v4326
      %v4389 = vpack.c.b16 %v4329, %v4327
      %v4390 = vpack.c.b16 %v4332, %v4330
      %v4391 = vpack.c.b16 %v4333, %v4331
      %v4392 = vpack.c.b16 %v4336, %v4334
      %v4393 = vpack.c.b16 %v4337, %v4335
      %v4394 = vpack.c.b16 %v4340, %v4338
      %v4395 = vpack.c.b16 %v4341, %v4339
      %v4396 = vpack.c.b16 %v4344, %v4342
      %v4397 = vpack.c.b16 %v4345, %v4343
      %v4398 = vpack.c.b16 %v4348, %v4346
      %v4399 = vpack.c.b16 %v4349, %v4347
      %v4400 = vpack.c.b16 %v4352, %v4350
      %v4401 = vpack.c.b16 %v4353, %v4351
      %v4402 = vpack.c.b16 %v4356, %v4354
      %v4403 = vpack.c.b16 %v4357, %v4355
      %v4404 = vpack.c.b16 %v4360, %v4358
      %v4405 = vpack.c.b16 %v4361, %v4359
      %v4406 = vpack.c.b16 %v4364, %v4362
      %v4407 = vpack.c.b16 %v4365, %v4363
      %v4408 = vpack.c.b16 %v4368, %v4366
      %v4409 = vpack.c.b16 %v4369, %v4367
      %v4410 = vpack.c.b16 %v4372, %v4370
      %v4411 = vpack.c.b16 %v4373, %v4371
      %v4412 = vpack.c.b16 %v4376, %v4374
      %v4413 = vpack.c.b16 %v4377, %v4375
      %v4414 = vpack.c.b16 %v4380, %v4378
      %v4415 = vpack.c.b16 %v4381, %v4379
      %v4416 = vpack.c.b16 %v4384, %v4382
      %v4417 = vpack.c.b16 %v4385, %v4383
      %4450 = vmatprep.subr.bf16.mxu0 %v4387
      %4451 = vmatpush1.bf16.msra.mxu0 %v4386
      %4452 = vmatprep.subr.bf16.mxu0 %v4389
      %4453 = vmatpush1.bf16.msra.mxu0 %v4388
      %4454 = vmatprep.subr.bf16.mxu0 %v4391
      %4455 = vmatpush1.bf16.msra.mxu0 %v4390
      %4456 = vmatprep.subr.bf16.mxu0 %v4393
      %4457 = vmatpush1.bf16.msra.mxu0 %v4392
      %4458 = vmatprep.subr.bf16.mxu0 %v4395
      %4459 = vmatpush1.bf16.msra.mxu0 %v4394
      %4460 = vmatprep.subr.bf16.mxu0 %v4397
      %4461 = vmatpush1.bf16.msra.mxu0 %v4396
      %4462 = vmatprep.subr.bf16.mxu0 %v4399
      %4463 = vmatpush1.bf16.msra.mxu0 %v4398
      %4464 = vmatprep.subr.bf16.mxu0 %v4401
      %4465 = vmatpush1.bf16.msra.mxu0 %v4400
      %4466 = vmatprep.subr.bf16.mxu0 %v4403
      %4467 = vmatpush1.bf16.msra.mxu0 %v4402
      %4468 = vmatprep.subr.bf16.mxu0 %v4405
      %4469 = vmatpush1.bf16.msra.mxu0 %v4404
      %4470 = vmatprep.subr.bf16.mxu0 %v4407
      %4471 = vmatpush1.bf16.msra.mxu0 %v4406
      %4472 = vmatprep.subr.bf16.mxu0 %v4409
      %4473 = vmatpush1.bf16.msra.mxu0 %v4408
      %4474 = vmatprep.subr.bf16.mxu0 %v4411
      %4475 = vmatpush1.bf16.msra.mxu0 %v4410
      %4476 = vmatprep.subr.bf16.mxu0 %v4413
      %4477 = vmatpush1.bf16.msra.mxu0 %v4412
      %4478 = vmatprep.subr.bf16.mxu0 %v4415
      %4479 = vmatpush1.bf16.msra.mxu0 %v4414
      %4480 = vmatprep.subr.bf16.mxu0 %v4417
      %4481 = vmatpush1.bf16.msra.mxu0 %v4416
      %4482 = vmatprep.mubr.bf16.mxu0 %v4236
      %4483 = vmatmul.mubr.bf16.gmra.mrb[0].mxu0 %v4235
      %v4484 = vpop.f32.mrb[0].mxu0
      %v4485 = vadd.f32 %v4283, %v4484
      %v4486 = vpop.f32.mrb[0].mxu0
      %v4487 = vadd.f32 %v4287, %v4486
      %v4488 = vpop.f32.mrb[0].mxu0
      %v4489 = vadd.f32 %v4283, %v4488
      %v4490 = vpop.f32.mrb[0].mxu0
      %v4491 = vadd.f32 %v4287, %v4490
      %4492 = vmatprep.mubr.bf16.mxu0 %v4238
      %4493 = vmatmul.mubr.bf16.gmra.mrb[0].mxu0 %v4237
      %v4494 = vpop.f32.mrb[0].mxu0
      %v4495 = vadd.f32 %v4283, %v4494
      %v4496 = vpop.f32.mrb[0].mxu0
      %v4497 = vadd.f32 %v4287, %v4496
      %v4498 = vpop.f32.mrb[0].mxu0
      %v4499 = vadd.f32 %v4283, %v4498
      %v4500 = vpop.f32.mrb[0].mxu0
      %v4501 = vadd.f32 %v4287, %v4500
      %4502 = vmatprep.mubr.bf16.mxu0 %v4240
      %4503 = vmatmul.mubr.bf16.gmra.mrb[0].mxu0 %v4239
      %v4504 = vpop.f32.mrb[0].mxu0
      %v4505 = vadd.f32 %v4283, %v4504
      %v4506 = vpop.f32.mrb[0].mxu0
      %v4507 = vadd.f32 %v4287, %v4506
      %v4508 = vpop.f32.mrb[0].mxu0
      %v4509 = vadd.f32 %v4283, %v4508
      %v4510 = vpop.f32.mrb[0].mxu0
      %v4511 = vadd.f32 %v4287, %v4510
      %4512 = vmatprep.mubr.bf16.mxu0 %v4242
      %4513 = vmatmul.mubr.bf16.gmra.mrb[0].mxu0 %v4241
      %v4514 = vpop.f32.mrb[0].mxu0
      %v4515 = vadd.f32 %v4283, %v4514
      %v4516 = vpop.f32.mrb[0].mxu0
      %v4517 = vadd.f32 %v4287, %v4516
      %v4518 = vpop.f32.mrb[0].mxu0
      %v4519 = vadd.f32 %v4283, %v4518
      %v4520 = vpop.f32.mrb[0].mxu0
      %v4521 = vadd.f32 %v4287, %v4520
      %4522 = vdwg.mxu0
      %v4523 = vadd.f32 %v4485, %v798
      %v4524 = vadd.f32 %v4487, %v799
      %v4525 = vadd.f32 %v4489, %v800
      %v4526 = vadd.f32 %v4491, %v801
      %v4527 = vadd.f32 %v4495, %v802
      %v4528 = vadd.f32 %v4497, %v803
      %v4529 = vadd.f32 %v4499, %v804
      %v4530 = vadd.f32 %v4501, %v805
      %v4531 = vadd.f32 %v4505, %v806
      %v4532 = vadd.f32 %v4507, %v807
      %v4533 = vadd.f32 %v4509, %v808
      %v4534 = vadd.f32 %v4511, %v809
      %v4535 = vadd.f32 %v4515, %v810
      %v4536 = vadd.f32 %v4517, %v811
      %v4537 = vadd.f32 %v4519, %v812
      %v4538 = vadd.f32 %v4521, %v813
      %v4539 = vpack.c.bf16 %v4525, %v4523
      %v4540 = vpack.c.bf16 %v4526, %v4524
      %v4541 = vpack.c.bf16 %v4529, %v4527
      %v4542 = vpack.c.bf16 %v4530, %v4528
      %v4543 = vpack.c.bf16 %v4533, %v4531
      %v4544 = vpack.c.bf16 %v4534, %v4532
      %v4545 = vpack.c.bf16 %v4537, %v4535
      %v4546 = vpack.c.bf16 %v4538, %v4536
      %s4547 = smul.addr %s830, 4
      %s4548 = scalar_lea.vmem %s12, %s4547
      %v4549 = vld [vmem:[%s4548] sm:$0xff]
      %v4550 = vld [vmem:[%s4548 + $0x8] sm:$0xff]
      %v4551 = vld [vmem:[%s4548 + $0x10] sm:$0xff]
      %v4552 = vld [vmem:[%s4548 + $0x18] sm:$0xff]
      %v4553 = vld [vmem:[%s4548 + $0x20] sm:$0xff]
      %v4554 = vld [vmem:[%s4548 + $0x28] sm:$0xff]
      %v4555 = vld [vmem:[%s4548 + $0x30] sm:$0xff]
      %v4556 = vld [vmem:[%s4548 + $0x38] sm:$0xff]
      %v4557 = vld [vmem:[%s4548 + $0x40] sm:$0xff]
      %v4558 = vld [vmem:[%s4548 + $0x48] sm:$0xff]
      %v4559 = vld [vmem:[%s4548 + $0x50] sm:$0xff]
      %v4560 = vld [vmem:[%s4548 + $0x58] sm:$0xff]
      %v4561 = vld [vmem:[%s4548 + $0x60] sm:$0xff]
      %v4562 = vld [vmem:[%s4548 + $0x68] sm:$0xff]
      %v4563 = vld [vmem:[%s4548 + $0x70] sm:$0xff]
      %v4564 = vld [vmem:[%s4548 + $0x78] sm:$0xff]
      %v4565 = vld [vmem:[%s4548 + $0x80] sm:$0xff]
      %v4566 = vld [vmem:[%s4548 + $0x88] sm:$0xff]
      %v4567 = vld [vmem:[%s4548 + $0x90] sm:$0xff]
      %v4568 = vld [vmem:[%s4548 + $0x98] sm:$0xff]
      %v4569 = vld [vmem:[%s4548 + $0xa0] sm:$0xff]
      %v4570 = vld [vmem:[%s4548 + $0xa8] sm:$0xff]
      %v4571 = vld [vmem:[%s4548 + $0xb0] sm:$0xff]
      %v4572 = vld [vmem:[%s4548 + $0xb8] sm:$0xff]
      %v4573 = vld [vmem:[%s4548 + $0xc0] sm:$0xff]
      %v4574 = vld [vmem:[%s4548 + $0xc8] sm:$0xff]
      %v4575 = vld [vmem:[%s4548 + $0xd0] sm:$0xff]
      %v4576 = vld [vmem:[%s4548 + $0xd8] sm:$0xff]
      %v4577 = vld [vmem:[%s4548 + $0xe0] sm:$0xff]
      %v4578 = vld [vmem:[%s4548 + $0xe8] sm:$0xff]
      %v4579 = vld [vmem:[%s4548 + $0xf0] sm:$0xff]
      %v4580 = vld [vmem:[%s4548 + $0xf8] sm:$0xff]
      %s4581 = scalar_lea.vmem %s13, %s865
      %v4582 = vld [vmem:[%s4581] sm:$0x3]
      %v4584 = vlaneseq
      %v4585 = vshrl.u32 %v4584, 7
      %v4586 = vsub.s32 0, %v4585
      %v4587 = vrot.slane %v4582, %v4586
      %v4588 = vlaneseq
      %v4589 = vshrl.u32 %v4588, 7
      %v4590 = vsub.s32 1, %v4589
      %v4591 = vrot.slane %v4582, %v4590
      %v4626 = vunpack.c.l.b16 %v4549
      %v4627 = vunpack.c.h.b16 %v4549
      %v4628 = vunpack.c.l.b16 %v4550
      %v4629 = vunpack.c.h.b16 %v4550
      %v4630 = vunpack.c.l.b16 %v4551
      %v4631 = vunpack.c.h.b16 %v4551
      %v4632 = vunpack.c.l.b16 %v4552
      %v4633 = vunpack.c.h.b16 %v4552
      %v4634 = vunpack.c.l.b16 %v4553
      %v4635 = vunpack.c.h.b16 %v4553
      %v4636 = vunpack.c.l.b16 %v4554
      %v4637 = vunpack.c.h.b16 %v4554
      %v4638 = vunpack.c.l.b16 %v4555
      %v4639 = vunpack.c.h.b16 %v4555
      %v4640 = vunpack.c.l.b16 %v4556
      %v4641 = vunpack.c.h.b16 %v4556
      %v4642 = vunpack.c.l.b16 %v4557
      %v4643 = vunpack.c.h.b16 %v4557
      %v4644 = vunpack.c.l.b16 %v4558
      %v4645 = vunpack.c.h.b16 %v4558
      %v4646 = vunpack.c.l.b16 %v4559
      %v4647 = vunpack.c.h.b16 %v4559
      %v4648 = vunpack.c.l.b16 %v4560
      %v4649 = vunpack.c.h.b16 %v4560
      %v4650 = vunpack.c.l.b16 %v4561
      %v4651 = vunpack.c.h.b16 %v4561
      %v4652 = vunpack.c.l.b16 %v4562
      %v4653 = vunpack.c.h.b16 %v4562
      %v4654 = vunpack.c.l.b16 %v4563
      %v4655 = vunpack.c.h.b16 %v4563
      %v4656 = vunpack.c.l.b16 %v4564
      %v4657 = vunpack.c.h.b16 %v4564
      %v4658 = vunpack.c.l.b16 %v4565
      %v4659 = vunpack.c.h.b16 %v4565
      %v4660 = vunpack.c.l.b16 %v4566
      %v4661 = vunpack.c.h.b16 %v4566
      %v4662 = vunpack.c.l.b16 %v4567
      %v4663 = vunpack.c.h.b16 %v4567
      %v4664 = vunpack.c.l.b16 %v4568
      %v4665 = vunpack.c.h.b16 %v4568
      %v4666 = vunpack.c.l.b16 %v4569
      %v4667 = vunpack.c.h.b16 %v4569
      %v4668 = vunpack.c.l.b16 %v4570
      %v4669 = vunpack.c.h.b16 %v4570
      %v4670 = vunpack.c.l.b16 %v4571
      %v4671 = vunpack.c.h.b16 %v4571
      %v4672 = vunpack.c.l.b16 %v4572
      %v4673 = vunpack.c.h.b16 %v4572
      %v4674 = vunpack.c.l.b16 %v4573
      %v4675 = vunpack.c.h.b16 %v4573
      %v4676 = vunpack.c.l.b16 %v4574
      %v4677 = vunpack.c.h.b16 %v4574
      %v4678 = vunpack.c.l.b16 %v4575
      %v4679 = vunpack.c.h.b16 %v4575
      %v4680 = vunpack.c.l.b16 %v4576
      %v4681 = vunpack.c.h.b16 %v4576
      %v4682 = vunpack.c.l.b16 %v4577
      %v4683 = vunpack.c.h.b16 %v4577
      %v4684 = vunpack.c.l.b16 %v4578
      %v4685 = vunpack.c.h.b16 %v4578
      %v4686 = vunpack.c.l.b16 %v4579
      %v4687 = vunpack.c.h.b16 %v4579
      %v4688 = vunpack.c.l.b16 %v4580
      %v4689 = vunpack.c.h.b16 %v4580
      %v4690 = vpack.c.b16 %v4628, %v4626
      %v4691 = vpack.c.b16 %v4629, %v4627
      %v4692 = vpack.c.b16 %v4632, %v4630
      %v4693 = vpack.c.b16 %v4633, %v4631
      %v4694 = vpack.c.b16 %v4636, %v4634
      %v4695 = vpack.c.b16 %v4637, %v4635
      %v4696 = vpack.c.b16 %v4640, %v4638
      %v4697 = vpack.c.b16 %v4641, %v4639
      %v4698 = vpack.c.b16 %v4644, %v4642
      %v4699 = vpack.c.b16 %v4645, %v4643
      %v4700 = vpack.c.b16 %v4648, %v4646
      %v4701 = vpack.c.b16 %v4649, %v4647
      %v4702 = vpack.c.b16 %v4652, %v4650
      %v4703 = vpack.c.b16 %v4653, %v4651
      %v4704 = vpack.c.b16 %v4656, %v4654
      %v4705 = vpack.c.b16 %v4657, %v4655
      %v4706 = vpack.c.b16 %v4660, %v4658
      %v4707 = vpack.c.b16 %v4661, %v4659
      %v4708 = vpack.c.b16 %v4664, %v4662
      %v4709 = vpack.c.b16 %v4665, %v4663
      %v4710 = vpack.c.b16 %v4668, %v4666
      %v4711 = vpack.c.b16 %v4669, %v4667
      %v4712 = vpack.c.b16 %v4672, %v4670
      %v4713 = vpack.c.b16 %v4673, %v4671
      %v4714 = vpack.c.b16 %v4676, %v4674
      %v4715 = vpack.c.b16 %v4677, %v4675
      %v4716 = vpack.c.b16 %v4680, %v4678
      %v4717 = vpack.c.b16 %v4681, %v4679
      %v4718 = vpack.c.b16 %v4684, %v4682
      %v4719 = vpack.c.b16 %v4685, %v4683
      %v4720 = vpack.c.b16 %v4688, %v4686
      %v4721 = vpack.c.b16 %v4689, %v4687
      %4754 = vmatprep.subr.bf16.mxu0 %v4691
      %4755 = vmatpush1.bf16.msra.mxu0 %v4690
      %4756 = vmatprep.subr.bf16.mxu0 %v4693
      %4757 = vmatpush1.bf16.msra.mxu0 %v4692
      %4758 = vmatprep.subr.bf16.mxu0 %v4695
      %4759 = vmatpush1.bf16.msra.mxu0 %v4694
      %4760 = vmatprep.subr.bf16.mxu0 %v4697
      %4761 = vmatpush1.bf16.msra.mxu0 %v4696
      %4762 = vmatprep.subr.bf16.mxu0 %v4699
      %4763 = vmatpush1.bf16.msra.mxu0 %v4698
      %4764 = vmatprep.subr.bf16.mxu0 %v4701
      %4765 = vmatpush1.bf16.msra.mxu0 %v4700
      %4766 = vmatprep.subr.bf16.mxu0 %v4703
      %4767 = vmatpush1.bf16.msra.mxu0 %v4702
      %4768 = vmatprep.subr.bf16.mxu0 %v4705
      %4769 = vmatpush1.bf16.msra.mxu0 %v4704
      %4770 = vmatprep.subr.bf16.mxu0 %v4707
      %4771 = vmatpush1.bf16.msra.mxu0 %v4706
      %4772 = vmatprep.subr.bf16.mxu0 %v4709
      %4773 = vmatpush1.bf16.msra.mxu0 %v4708
      %4774 = vmatprep.subr.bf16.mxu0 %v4711
      %4775 = vmatpush1.bf16.msra.mxu0 %v4710
      %4776 = vmatprep.subr.bf16.mxu0 %v4713
      %4777 = vmatpush1.bf16.msra.mxu0 %v4712
      %4778 = vmatprep.subr.bf16.mxu0 %v4715
      %4779 = vmatpush1.bf16.msra.mxu0 %v4714
      %4780 = vmatprep.subr.bf16.mxu0 %v4717
      %4781 = vmatpush1.bf16.msra.mxu0 %v4716
      %4782 = vmatprep.subr.bf16.mxu0 %v4719
      %4783 = vmatpush1.bf16.msra.mxu0 %v4718
      %4784 = vmatprep.subr.bf16.mxu0 %v4721
      %4785 = vmatpush1.bf16.msra.mxu0 %v4720
      %4786 = vmatprep.mubr.bf16.mxu0 %v4540
      %4787 = vmatmul.mubr.bf16.gmra.mrb[0].mxu0 %v4539
      %v4788 = vpop.f32.mrb[0].mxu0
      %v4789 = vadd.f32 %v4587, %v4788
      %v4790 = vpop.f32.mrb[0].mxu0
      %v4791 = vadd.f32 %v4591, %v4790
      %v4792 = vpop.f32.mrb[0].mxu0
      %v4793 = vadd.f32 %v4587, %v4792
      %v4794 = vpop.f32.mrb[0].mxu0
      %v4795 = vadd.f32 %v4591, %v4794
      %4796 = vmatprep.mubr.bf16.mxu0 %v4542
      %4797 = vmatmul.mubr.bf16.gmra.mrb[0].mxu0 %v4541
      %v4798 = vpop.f32.mrb[0].mxu0
      %v4799 = vadd.f32 %v4587, %v4798
      %v4800 = vpop.f32.mrb[0].mxu0
      %v4801 = vadd.f32 %v4591, %v4800
      %v4802 = vpop.f32.mrb[0].mxu0
      %v4803 = vadd.f32 %v4587, %v4802
      %v4804 = vpop.f32.mrb[0].mxu0
      %v4805 = vadd.f32 %v4591, %v4804
      %4806 = vmatprep.mubr.bf16.mxu0 %v4544
      %4807 = vmatmul.mubr.bf16.gmra.mrb[0].mxu0 %v4543
      %v4808 = vpop.f32.mrb[0].mxu0
      %v4809 = vadd.f32 %v4587, %v4808
      %v4810 = vpop.f32.mrb[0].mxu0
      %v4811 = vadd.f32 %v4591, %v4810
      %v4812 = vpop.f32.mrb[0].mxu0
      %v4813 = vadd.f32 %v4587, %v4812
      %v4814 = vpop.f32.mrb[0].mxu0
      %v4815 = vadd.f32 %v4591, %v4814
      %4816 = vmatprep.mubr.bf16.mxu0 %v4546
      %4817 = vmatmul.mubr.bf16.gmra.mrb[0].mxu0 %v4545
      %v4818 = vpop.f32.mrb[0].mxu0
      %v4819 = vadd.f32 %v4587, %v4818
      %v4820 = vpop.f32.mrb[0].mxu0
      %v4821 = vadd.f32 %v4591, %v4820
      %v4822 = vpop.f32.mrb[0].mxu0
      %v4823 = vadd.f32 %v4587, %v4822
      %v4824 = vpop.f32.mrb[0].mxu0
      %v4825 = vadd.f32 %v4591, %v4824
      %4826 = vdwg.mxu0
      %v4827 = vmax.f32 %v4789, 0.0
      %v4828 = vmax.f32 %v4791, 0.0
      %v4829 = vmax.f32 %v4793, 0.0
      %v4830 = vmax.f32 %v4795, 0.0
      %v4831 = vmax.f32 %v4799, 0.0
      %v4832 = vmax.f32 %v4801, 0.0
      %v4833 = vmax.f32 %v4803, 0.0
      %v4834 = vmax.f32 %v4805, 0.0
      %v4835 = vmax.f32 %v4809, 0.0
      %v4836 = vmax.f32 %v4811, 0.0
      %v4837 = vmax.f32 %v4813, 0.0
      %v4838 = vmax.f32 %v4815, 0.0
      %v4839 = vmax.f32 %v4819, 0.0
      %v4840 = vmax.f32 %v4821, 0.0
      %v4841 = vmax.f32 %v4823, 0.0
      %v4842 = vmax.f32 %v4825, 0.0
      %v4843 = vpack.c.bf16 %v4829, %v4827
      %v4844 = vpack.c.bf16 %v4830, %v4828
      %v4845 = vpack.c.bf16 %v4833, %v4831
      %v4846 = vpack.c.bf16 %v4834, %v4832
      %v4847 = vpack.c.bf16 %v4837, %v4835
      %v4848 = vpack.c.bf16 %v4838, %v4836
      %v4849 = vpack.c.bf16 %v4841, %v4839
      %v4850 = vpack.c.bf16 %v4842, %v4840
      %s4851 = smul.addr %s830, 4
      %s4852 = scalar_lea.vmem %s14, %s4851
      %v4853 = vld [vmem:[%s4852] sm:$0xff]
      %v4854 = vld [vmem:[%s4852 + $0x8] sm:$0xff]
      %v4855 = vld [vmem:[%s4852 + $0x10] sm:$0xff]
      %v4856 = vld [vmem:[%s4852 + $0x18] sm:$0xff]
      %v4857 = vld [vmem:[%s4852 + $0x20] sm:$0xff]
      %v4858 = vld [vmem:[%s4852 + $0x28] sm:$0xff]
      %v4859 = vld [vmem:[%s4852 + $0x30] sm:$0xff]
      %v4860 = vld [vmem:[%s4852 + $0x38] sm:$0xff]
      %v4861 = vld [vmem:[%s4852 + $0x40] sm:$0xff]
      %v4862 = vld [vmem:[%s4852 + $0x48] sm:$0xff]
      %v4863 = vld [vmem:[%s4852 + $0x50] sm:$0xff]
      %v4864 = vld [vmem:[%s4852 + $0x58] sm:$0xff]
      %v4865 = vld [vmem:[%s4852 + $0x60] sm:$0xff]
      %v4866 = vld [vmem:[%s4852 + $0x68] sm:$0xff]
      %v4867 = vld [vmem:[%s4852 + $0x70] sm:$0xff]
      %v4868 = vld [vmem:[%s4852 + $0x78] sm:$0xff]
      %v4869 = vld [vmem:[%s4852 + $0x80] sm:$0xff]
      %v4870 = vld [vmem:[%s4852 + $0x88] sm:$0xff]
      %v4871 = vld [vmem:[%s4852 + $0x90] sm:$0xff]
      %v4872 = vld [vmem:[%s4852 + $0x98] sm:$0xff]
      %v4873 = vld [vmem:[%s4852 + $0xa0] sm:$0xff]
      %v4874 = vld [vmem:[%s4852 + $0xa8] sm:$0xff]
      %v4875 = vld [vmem:[%s4852 + $0xb0] sm:$0xff]
      %v4876 = vld [vmem:[%s4852 + $0xb8] sm:$0xff]
      %v4877 = vld [vmem:[%s4852 + $0xc0] sm:$0xff]
      %v4878 = vld [vmem:[%s4852 + $0xc8] sm:$0xff]
      %v4879 = vld [vmem:[%s4852 + $0xd0] sm:$0xff]
      %v4880 = vld [vmem:[%s4852 + $0xd8] sm:$0xff]
      %v4881 = vld [vmem:[%s4852 + $0xe0] sm:$0xff]
      %v4882 = vld [vmem:[%s4852 + $0xe8] sm:$0xff]
      %v4883 = vld [vmem:[%s4852 + $0xf0] sm:$0xff]
      %v4884 = vld [vmem:[%s4852 + $0xf8] sm:$0xff]
      %s4885 = scalar_lea.vmem %s15, %s865
      %v4886 = vld [vmem:[%s4885] sm:$0x3]
      %v4888 = vlaneseq
      %v4889 = vshrl.u32 %v4888, 7
      %v4890 = vsub.s32 0, %v4889
      %v4891 = vrot.slane %v4886, %v4890
      %v4892 = vlaneseq
      %v4893 = vshrl.u32 %v4892, 7
      %v4894 = vsub.s32 1, %v4893
      %v4895 = vrot.slane %v4886, %v4894
      %v4930 = vunpack.c.l.b16 %v4853
      %v4931 = vunpack.c.h.b16 %v4853
      %v4932 = vunpack.c.l.b16 %v4854
      %v4933 = vunpack.c.h.b16 %v4854
      %v4934 = vunpack.c.l.b16 %v4855
      %v4935 = vunpack.c.h.b16 %v4855
      %v4936 = vunpack.c.l.b16 %v4856
      %v4937 = vunpack.c.h.b16 %v4856
      %v4938 = vunpack.c.l.b16 %v4857
      %v4939 = vunpack.c.h.b16 %v4857
      %v4940 = vunpack.c.l.b16 %v4858
      %v4941 = vunpack.c.h.b16 %v4858
      %v4942 = vunpack.c.l.b16 %v4859
      %v4943 = vunpack.c.h.b16 %v4859
      %v4944 = vunpack.c.l.b16 %v4860
      %v4945 = vunpack.c.h.b16 %v4860
      %v4946 = vunpack.c.l.b16 %v4861
      %v4947 = vunpack.c.h.b16 %v4861
      %v4948 = vunpack.c.l.b16 %v4862
      %v4949 = vunpack.c.h.b16 %v4862
      %v4950 = vunpack.c.l.b16 %v4863
      %v4951 = vunpack.c.h.b16 %v4863
      %v4952 = vunpack.c.l.b16 %v4864
      %v4953 = vunpack.c.h.b16 %v4864
      %v4954 = vunpack.c.l.b16 %v4865
      %v4955 = vunpack.c.h.b16 %v4865
      %v4956 = vunpack.c.l.b16 %v4866
      %v4957 = vunpack.c.h.b16 %v4866
      %v4958 = vunpack.c.l.b16 %v4867
      %v4959 = vunpack.c.h.b16 %v4867
      %v4960 = vunpack.c.l.b16 %v4868
      %v4961 = vunpack.c.h.b16 %v4868
      %v4962 = vunpack.c.l.b16 %v4869
      %v4963 = vunpack.c.h.b16 %v4869
      %v4964 = vunpack.c.l.b16 %v4870
      %v4965 = vunpack.c.h.b16 %v4870
      %v4966 = vunpack.c.l.b16 %v4871
      %v4967 = vunpack.c.h.b16 %v4871
      %v4968 = vunpack.c.l.b16 %v4872
      %v4969 = vunpack.c.h.b16 %v4872
      %v4970 = vunpack.c.l.b16 %v4873
      %v4971 = vunpack.c.h.b16 %v4873
      %v4972 = vunpack.c.l.b16 %v4874
      %v4973 = vunpack.c.h.b16 %v4874
      %v4974 = vunpack.c.l.b16 %v4875
      %v4975 = vunpack.c.h.b16 %v4875
      %v4976 = vunpack.c.l.b16 %v4876
      %v4977 = vunpack.c.h.b16 %v4876
      %v4978 = vunpack.c.l.b16 %v4877
      %v4979 = vunpack.c.h.b16 %v4877
      %v4980 = vunpack.c.l.b16 %v4878
      %v4981 = vunpack.c.h.b16 %v4878
      %v4982 = vunpack.c.l.b16 %v4879
      %v4983 = vunpack.c.h.b16 %v4879
      %v4984 = vunpack.c.l.b16 %v4880
      %v4985 = vunpack.c.h.b16 %v4880
      %v4986 = vunpack.c.l.b16 %v4881
      %v4987 = vunpack.c.h.b16 %v4881
      %v4988 = vunpack.c.l.b16 %v4882
      %v4989 = vunpack.c.h.b16 %v4882
      %v4990 = vunpack.c.l.b16 %v4883
      %v4991 = vunpack.c.h.b16 %v4883
      %v4992 = vunpack.c.l.b16 %v4884
      %v4993 = vunpack.c.h.b16 %v4884
      %v4994 = vpack.c.b16 %v4932, %v4930
      %v4995 = vpack.c.b16 %v4933, %v4931
      %v4996 = vpack.c.b16 %v4936, %v4934
      %v4997 = vpack.c.b16 %v4937, %v4935
      %v4998 = vpack.c.b16 %v4940, %v4938
      %v4999 = vpack.c.b16 %v4941, %v4939
      %v5000 = vpack.c.b16 %v4944, %v4942
      %v5001 = vpack.c.b16 %v4945, %v4943
      %v5002 = vpack.c.b16 %v4948, %v4946
      %v5003 = vpack.c.b16 %v4949, %v4947
      %v5004 = vpack.c.b16 %v4952, %v4950
      %v5005 = vpack.c.b16 %v4953, %v4951
      %v5006 = vpack.c.b16 %v4956, %v4954
      %v5007 = vpack.c.b16 %v4957, %v4955
      %v5008 = vpack.c.b16 %v4960, %v4958
      %v5009 = vpack.c.b16 %v4961, %v4959
      %v5010 = vpack.c.b16 %v4964, %v4962
      %v5011 = vpack.c.b16 %v4965, %v4963
      %v5012 = vpack.c.b16 %v4968, %v4966
      %v5013 = vpack.c.b16 %v4969, %v4967
      %v5014 = vpack.c.b16 %v4972, %v4970
      %v5015 = vpack.c.b16 %v4973, %v4971
      %v5016 = vpack.c.b16 %v4976, %v4974
      %v5017 = vpack.c.b16 %v4977, %v4975
      %v5018 = vpack.c.b16 %v4980, %v4978
      %v5019 = vpack.c.b16 %v4981, %v4979
      %v5020 = vpack.c.b16 %v4984, %v4982
      %v5021 = vpack.c.b16 %v4985, %v4983
      %v5022 = vpack.c.b16 %v4988, %v4986
      %v5023 = vpack.c.b16 %v4989, %v4987
      %v5024 = vpack.c.b16 %v4992, %v4990
      %v5025 = vpack.c.b16 %v4993, %v4991
      %5058 = vmatprep.subr.bf16.mxu0 %v4995
      %5059 = vmatpush1.bf16.msra.mxu0 %v4994
      %5060 = vmatprep.subr.bf16.mxu0 %v4997
      %5061 = vmatpush1.bf16.msra.mxu0 %v4996
      %5062 = vmatprep.subr.bf16.mxu0 %v4999
      %5063 = vmatpush1.bf16.msra.mxu0 %v4998
      %5064 = vmatprep.subr.bf16.mxu0 %v5001
      %5065 = vmatpush1.bf16.msra.mxu0 %v5000
      %5066 = vmatprep.subr.bf16.mxu0 %v5003
      %5067 = vmatpush1.bf16.msra.mxu0 %v5002
      %5068 = vmatprep.subr.bf16.mxu0 %v5005
      %5069 = vmatpush1.bf16.msra.mxu0 %v5004
      %5070 = vmatprep.subr.bf16.mxu0 %v5007
      %5071 = vmatpush1.bf16.msra.mxu0 %v5006
      %5072 = vmatprep.subr.bf16.mxu0 %v5009
      %5073 = vmatpush1.bf16.msra.mxu0 %v5008
      %5074 = vmatprep.subr.bf16.mxu0 %v5011
      %5075 = vmatpush1.bf16.msra.mxu0 %v5010
      %5076 = vmatprep.subr.bf16.mxu0 %v5013
      %5077 = vmatpush1.bf16.msra.mxu0 %v5012
      %5078 = vmatprep.subr.bf16.mxu0 %v5015
      %5079 = vmatpush1.bf16.msra.mxu0 %v5014
      %5080 = vmatprep.subr.bf16.mxu0 %v5017
      %5081 = vmatpush1.bf16.msra.mxu0 %v5016
      %5082 = vmatprep.subr.bf16.mxu0 %v5019
      %5083 = vmatpush1.bf16.msra.mxu0 %v5018
      %5084 = vmatprep.subr.bf16.mxu0 %v5021
      %5085 = vmatpush1.bf16.msra.mxu0 %v5020
      %5086 = vmatprep.subr.bf16.mxu0 %v5023
      %5087 = vmatpush1.bf16.msra.mxu0 %v5022
      %5088 = vmatprep.subr.bf16.mxu0 %v5025
      %5089 = vmatpush1.bf16.msra.mxu0 %v5024
      %5090 = vmatprep.mubr.bf16.mxu0 %v4844
      %5091 = vmatmul.mubr.bf16.gmra.mrb[0].mxu0 %v4843
      %v5092 = vpop.f32.mrb[0].mxu0
      %v5093 = vadd.f32 %v4891, %v5092
      %v5094 = vpop.f32.mrb[0].mxu0
      %v5095 = vadd.f32 %v4895, %v5094
      %v5096 = vpop.f32.mrb[0].mxu0
      %v5097 = vadd.f32 %v4891, %v5096
      %v5098 = vpop.f32.mrb[0].mxu0
      %v5099 = vadd.f32 %v4895, %v5098
      %5100 = vmatprep.mubr.bf16.mxu0 %v4846
      %5101 = vmatmul.mubr.bf16.gmra.mrb[0].mxu0 %v4845
      %v5102 = vpop.f32.mrb[0].mxu0
      %v5103 = vadd.f32 %v4891, %v5102
      %v5104 = vpop.f32.mrb[0].mxu0
      %v5105 = vadd.f32 %v4895, %v5104
      %v5106 = vpop.f32.mrb[0].mxu0
      %v5107 = vadd.f32 %v4891, %v5106
      %v5108 = vpop.f32.mrb[0].mxu0
      %v5109 = vadd.f32 %v4895, %v5108
      %5110 = vmatprep.mubr.bf16.mxu0 %v4848
      %5111 = vmatmul.mubr.bf16.gmra.mrb[0].mxu0 %v4847
      %v5112 = vpop.f32.mrb[0].mxu0
      %v5113 = vadd.f32 %v4891, %v5112
      %v5114 = vpop.f32.mrb[0].mxu0
      %v5115 = vadd.f32 %v4895, %v5114
      %v5116 = vpop.f32.mrb[0].mxu0
      %v5117 = vadd.f32 %v4891, %v5116
      %v5118 = vpop.f32.mrb[0].mxu0
      %v5119 = vadd.f32 %v4895, %v5118
      %5120 = vmatprep.mubr.bf16.mxu0 %v4850
      %5121 = vmatmul.mubr.bf16.gmra.mrb[0].mxu0 %v4849
      %v5122 = vpop.f32.mrb[0].mxu0
      %v5123 = vadd.f32 %v4891, %v5122
      %v5124 = vpop.f32.mrb[0].mxu0
      %v5125 = vadd.f32 %v4895, %v5124
      %v5126 = vpop.f32.mrb[0].mxu0
      %v5127 = vadd.f32 %v4891, %v5126
      %v5128 = vpop.f32.mrb[0].mxu0
      %v5129 = vadd.f32 %v4895, %v5128
      %5130 = vdwg.mxu0
      %v5131 = vmax.f32 %v5093, 0.0
      %v5132 = vmax.f32 %v5095, 0.0
      %v5133 = vmax.f32 %v5097, 0.0
      %v5134 = vmax.f32 %v5099, 0.0
      %v5135 = vmax.f32 %v5103, 0.0
      %v5136 = vmax.f32 %v5105, 0.0
      %v5137 = vmax.f32 %v5107, 0.0
      %v5138 = vmax.f32 %v5109, 0.0
      %v5139 = vmax.f32 %v5113, 0.0
      %v5140 = vmax.f32 %v5115, 0.0
      %v5141 = vmax.f32 %v5117, 0.0
      %v5142 = vmax.f32 %v5119, 0.0
      %v5143 = vmax.f32 %v5123, 0.0
      %v5144 = vmax.f32 %v5125, 0.0
      %v5145 = vmax.f32 %v5127, 0.0
      %v5146 = vmax.f32 %v5129, 0.0
      %v5147 = vadd.f32 %v4523, %v5131
      %v5148 = vadd.f32 %v4524, %v5132
      %v5149 = vadd.f32 %v4525, %v5133
      %v5150 = vadd.f32 %v4526, %v5134
      %v5151 = vadd.f32 %v4527, %v5135
      %v5152 = vadd.f32 %v4528, %v5136
      %v5153 = vadd.f32 %v4529, %v5137
      %v5154 = vadd.f32 %v4530, %v5138
      %v5155 = vadd.f32 %v4531, %v5139
      %v5156 = vadd.f32 %v4532, %v5140
      %v5157 = vadd.f32 %v4533, %v5141
      %v5158 = vadd.f32 %v4534, %v5142
      %v5159 = vadd.f32 %v4535, %v5143
      %v5160 = vadd.f32 %v4536, %v5144
      %v5161 = vadd.f32 %v4537, %v5145
      %v5162 = vadd.f32 %v4538, %v5146
      %5163 = vst [vmem:[#allocation2] sm:$0xff] %v5147
      %5164 = vst [vmem:[#allocation2 + $0x8] sm:$0xff] %v5148
      %5165 = vst [vmem:[#allocation2 + $0x10] sm:$0xff] %v5149
      %5166 = vst [vmem:[#allocation2 + $0x18] sm:$0xff] %v5150
      %5167 = vst [vmem:[#allocation2 + $0x20] sm:$0xff] %v5151
      %5168 = vst [vmem:[#allocation2 + $0x28] sm:$0xff] %v5152
      %5169 = vst [vmem:[#allocation2 + $0x30] sm:$0xff] %v5153
      %5170 = vst [vmem:[#allocation2 + $0x38] sm:$0xff] %v5154
      %5171 = vst [vmem:[#allocation2 + $0x40] sm:$0xff] %v5155
      %5172 = vst [vmem:[#allocation2 + $0x48] sm:$0xff] %v5156
      %5173 = vst [vmem:[#allocation2 + $0x50] sm:$0xff] %v5157
      %5174 = vst [vmem:[#allocation2 + $0x58] sm:$0xff] %v5158
      %5175 = vst [vmem:[#allocation2 + $0x60] sm:$0xff] %v5159
      %5176 = vst [vmem:[#allocation2 + $0x68] sm:$0xff] %v5160
      %5177 = vst [vmem:[#allocation2 + $0x70] sm:$0xff] %v5161
      %5178 = vst [vmem:[#allocation2 + $0x78] sm:$0xff] %v5162
      %p5179 = scmp.eq.s32.totalorder %s34, 5
      // Predicated region
      $region97: #{_lambda_.3} parent=91 // pred_check
        %p5180 = pneg %p5179
      $region98: #{_lambda_.3} parent=91 // pred_check_branch
        %5182 = sbr.rel (%p5180) target = $region100
      $region99: #{_lambda_.3} parent=91 // pred_region
        %v5183 = vadd.f32 %v5147, %v5149
        %v5184 = vadd.f32 %v5183, %v5151
        %v5185 = vadd.f32 %v5184, %v5153
        %v5186 = vadd.f32 %v5185, %v5155
        %v5187 = vadd.f32 %v5186, %v5157
        %v5188 = vadd.f32 %v5187, %v5159
        %v5189 = vadd.f32 %v5188, %v5161
        %v5190 = vrot.slane %v5189, 4
        %v5191 = vadd.f32 %v5189, %v5190
        %v5192 = vrot.slane %v5191, 2
        %v5193 = vadd.f32 %v5191, %v5192
        %v5194 = vrot.slane %v5193, 1
        %v5195 = vadd.f32 %v5193, %v5194
        %v5196 = vadd.f32 %v5148, %v5150
        %v5197 = vadd.f32 %v5196, %v5152
        %v5198 = vadd.f32 %v5197, %v5154
        %v5199 = vadd.f32 %v5198, %v5156
        %v5200 = vadd.f32 %v5199, %v5158
        %v5201 = vadd.f32 %v5200, %v5160
        %v5202 = vadd.f32 %v5201, %v5162
        %v5203 = vrot.slane %v5202, 4
        %v5204 = vadd.f32 %v5202, %v5203
        %v5205 = vrot.slane %v5204, 2
        %v5206 = vadd.f32 %v5204, %v5205
        %v5207 = vrot.slane %v5206, 1
        %v5208 = vadd.f32 %v5206, %v5207
        %v5209 = vrcp.pop 64.0
        %v5210 = vmul.f32 %v5195, %v5209
        %v5211 = vmul.f32 %v5208, %v5209
        %v5212 = vld [vmem:[%s16] sm:$0xff]
        %v5213 = vld [vmem:[%s16 + $0x8] sm:$0xff]
        %v5214 = vld [vmem:[%s16 + $0x10] sm:$0xff]
        %v5215 = vld [vmem:[%s16 + $0x18] sm:$0xff]
        %v5216 = vld [vmem:[%s16 + $0x20] sm:$0xff]
        %v5217 = vld [vmem:[%s16 + $0x28] sm:$0xff]
        %v5218 = vld [vmem:[%s16 + $0x30] sm:$0xff]
        %v5219 = vld [vmem:[%s16 + $0x38] sm:$0xff]
        %v5220 = vld [vmem:[%s16 + $0x40] sm:$0xff]
        %v5221 = vld [vmem:[%s16 + $0x48] sm:$0xff]
        %v5222 = vld [vmem:[%s16 + $0x50] sm:$0xff]
        %v5223 = vld [vmem:[%s16 + $0x58] sm:$0xff]
        %v5224 = vld [vmem:[%s16 + $0x60] sm:$0xff]
        %v5225 = vld [vmem:[%s16 + $0x68] sm:$0xff]
        %v5226 = vld [vmem:[%s16 + $0x70] sm:$0xff]
        %v5227 = vld [vmem:[%s16 + $0x78] sm:$0xff]
        %v5228 = vld [vmem:[%s16 + $0x80] sm:$0xff]
        %v5229 = vld [vmem:[%s16 + $0x88] sm:$0xff]
        %v5230 = vld [vmem:[%s16 + $0x90] sm:$0xff]
        %v5231 = vld [vmem:[%s16 + $0x98] sm:$0xff]
        %v5232 = vld [vmem:[%s16 + $0xa0] sm:$0xff]
        %v5233 = vld [vmem:[%s16 + $0xa8] sm:$0xff]
        %v5234 = vld [vmem:[%s16 + $0xb0] sm:$0xff]
        %v5235 = vld [vmem:[%s16 + $0xb8] sm:$0xff]
        %v5236 = vld [vmem:[%s16 + $0xc0] sm:$0xff]
        %v5237 = vld [vmem:[%s16 + $0xc8] sm:$0xff]
        %v5238 = vld [vmem:[%s16 + $0xd0] sm:$0xff]
        %v5239 = vld [vmem:[%s16 + $0xd8] sm:$0xff]
        %v5240 = vld [vmem:[%s16 + $0xe0] sm:$0xff]
        %v5241 = vld [vmem:[%s16 + $0xe8] sm:$0xff]
        %v5242 = vld [vmem:[%s16 + $0xf0] sm:$0xff]
        %v5243 = vld [vmem:[%s16 + $0xf8] sm:$0xff]
        %v5244 = vld [vmem:[%s17] sm:$0x1]
        %5245 = vmatprep.subr.mxu0 0.0
        %5246 = vmatpush1.msra.mxu0 %v5212
        %5247 = vmatprep.subr.mxu0 0.0
        %5248 = vmatpush1.msra.mxu0 %v5213
        %5249 = vmatprep.subr.mxu0 0.0
        %5250 = vmatpush1.msra.mxu0 %v5214
        %5251 = vmatprep.subr.mxu0 0.0
        %5252 = vmatpush1.msra.mxu0 %v5215
        %5253 = vmatprep.subr.mxu0 0.0
        %5254 = vmatpush1.msra.mxu0 %v5216
        %5255 = vmatprep.subr.mxu0 0.0
        %5256 = vmatpush1.msra.mxu0 %v5217
        %5257 = vmatprep.subr.mxu0 0.0
        %5258 = vmatpush1.msra.mxu0 %v5218
        %5259 = vmatprep.subr.mxu0 0.0
        %5260 = vmatpush1.msra.mxu0 %v5219
        %5261 = vmatprep.subr.mxu0 0.0
        %5262 = vmatpush1.msra.mxu0 %v5220
        %5263 = vmatprep.subr.mxu0 0.0
        %5264 = vmatpush1.msra.mxu0 %v5221
        %5265 = vmatprep.subr.mxu0 0.0
        %5266 = vmatpush1.msra.mxu0 %v5222
        %5267 = vmatprep.subr.mxu0 0.0
        %5268 = vmatpush1.msra.mxu0 %v5223
        %5269 = vmatprep.subr.mxu0 0.0
        %5270 = vmatpush1.msra.mxu0 %v5224
        %5271 = vmatprep.subr.mxu0 0.0
        %5272 = vmatpush1.msra.mxu0 %v5225
        %5273 = vmatprep.subr.mxu0 0.0
        %5274 = vmatpush1.msra.mxu0 %v5226
        %5275 = vmatprep.subr.mxu0 0.0
        %5276 = vmatpush1.msra.mxu0 %v5227
        %5277 = vmatprep.subr.mxu0 0.0
        %5278 = vmatpush1.msra.mxu0 %v5228
        %5279 = vmatprep.subr.mxu0 0.0
        %5280 = vmatpush1.msra.mxu0 %v5229
        %5281 = vmatprep.subr.mxu0 0.0
        %5282 = vmatpush1.msra.mxu0 %v5230
        %5283 = vmatprep.subr.mxu0 0.0
        %5284 = vmatpush1.msra.mxu0 %v5231
        %5285 = vmatprep.subr.mxu0 0.0
        %5286 = vmatpush1.msra.mxu0 %v5232
        %5287 = vmatprep.subr.mxu0 0.0
        %5288 = vmatpush1.msra.mxu0 %v5233
        %5289 = vmatprep.subr.mxu0 0.0
        %5290 = vmatpush1.msra.mxu0 %v5234
        %5291 = vmatprep.subr.mxu0 0.0
        %5292 = vmatpush1.msra.mxu0 %v5235
        %5293 = vmatprep.subr.mxu0 0.0
        %5294 = vmatpush1.msra.mxu0 %v5236
        %5295 = vmatprep.subr.mxu0 0.0
        %5296 = vmatpush1.msra.mxu0 %v5237
        %5297 = vmatprep.subr.mxu0 0.0
        %5298 = vmatpush1.msra.mxu0 %v5238
        %5299 = vmatprep.subr.mxu0 0.0
        %5300 = vmatpush1.msra.mxu0 %v5239
        %5301 = vmatprep.subr.mxu0 0.0
        %5302 = vmatpush1.msra.mxu0 %v5240
        %5303 = vmatprep.subr.mxu0 0.0
        %5304 = vmatpush1.msra.mxu0 %v5241
        %5305 = vmatprep.subr.mxu0 0.0
        %5306 = vmatpush1.msra.mxu0 %v5242
        %5307 = vmatprep.subr.mxu0 0.0
        %5308 = vmatpush1.msra.mxu0 %v5243
        %5309 = vmatprep.mubr.f32.mxu0 %v5211
        %5310 = vmatmul.mubr.f32.gmra.mrb[0].mxu0 %v5210
        %v5311 = vpop.f32.mrb[0].mxu0
        %v5312 = vadd.f32 %v5244, %v5311
        %v5313 = vpop.f32.mrb[0].mxu0
        %5314 = vdwg.mxu0
        %vm5315 = vcmask 8192
        %5316 = vst.msk [vmem:[%s603] sm:$0x1] %vm5315, %v5312
      $region100: #{_lambda_.3} parent=91 // pred_fallthru
        _
      %p5317 = scmp.lt.s32.totalorder %s33, 3
      %s5318 = scalar_select %p5317, %s33, 3
      %s5319 = scalar_lea.vmem %s18, %s5318
      // Predicated region
      $region101: #{_lambda_.3} parent=91 // pred_check
        %p5320 = pneg %p447
      $region102: #{_lambda_.3} parent=91 // pred_check_branch
        %5322 = sbr.rel (%p5320) target = $region104
      $region103: #{_lambda_.3} parent=91 // pred_region
        _
      $region104: #{_lambda_.3} parent=91 // pred_fallthru
        _
    $region92: #{_lambda_.3} parent=5 // pred_fallthru
      _
    %p5323 = scmp.le.s32.totalorder 2, %s24
    // Predicated region
    $region105: #{_lambda_.3} parent=5 // pred_check
      %p5324 = pneg %p5323
    $region106: #{_lambda_.3} parent=5 // pred_check_branch
      %5326 = sbr.rel (%p5324) target = $region108
    $region107: #{_lambda_.3} parent=5 // pred_region
      %s5327 = ssub.s32 %s24, 2
      // Predicated region
      $region109: #{_lambda_.3} parent=107 // pred_check
        %p5328 = pneg %p453
      $region110: #{_lambda_.3} parent=107 // pred_check_branch
        %5330 = sbr.rel (%p5328) target = $region112
      $region111: #{_lambda_.3} parent=107 // pred_region
        %p5331 = scmp.lt.s32.totalorder %s35, 3
        %s5332 = scalar_select %p5331, %s35, 3
        %s5333 = scalar_lea.vmem %s18, %s5332
      $region112: #{_lambda_.3} parent=107 // pred_fallthru
        _
    $region108: #{_lambda_.3} parent=5 // pred_fallthru
      _
  $region6: #{_lambda_.3} parent=0 // loop_footer
    %s28 = sadd.s32 1, %s24
  $region7: #{_lambda_.3} parent=0 // loop_footer_branch
    %23 = sbr.rel target = $region3
  $region8: #{_lambda_.3} parent=0 // loop_exit
    _

</llo_original>
